<compile_context>
chip_gen: v7x
topology: tpu7x:2x2x1
jax: 0.10.0
libtpu: 0.0.40
codegen_flags: <defaults>
</compile_context>

<pallas_src>
import functools
import math

import jax
import jax.numpy as jnp
import numpy as np
from jax import lax
from jax.experimental import pallas as pl
from jax.experimental.pallas import tpu as pltpu

LANE = 128
_VMEM_LIMIT_BYTES = 64 * 1024 * 1024
_TILE_VMEM_BUDGET = 12 * 1024 * 1024     # target per-step live set (fits all gens, incl. v7x)
_MAX_STEP_ROWS = 8192


def _round_up(x, m):
    return (x + m - 1) // m * m


def _pick_tiling(N, HO, W, cin_pad, cout_pad, cout, KH, KW):
    """Pick row-band height, slabs-per-step grouping and pass-1 core split."""
    per_row = (KH * KW * cin_pad * 2     # concatenated bf16 lhs
               + 2 * cout_pad * 4        # f32 conv tile + one temp
               + 2 * cout * 4            # double-buffered output tile
               + 4 * cin_pad * 2)        # double-buffered bf16 slab (with halo slack)
    max_rows = min(_MAX_STEP_ROWS, max(_TILE_VMEM_BUDGET // per_row, 1))
    max_rows = max(max_rows, W)          # never less than one output row

    band_h = 1
    for d in range(1, HO + 1):           # largest divisor of HO that fits
        if HO % d == 0 and d * W <= max_rows:
            band_h = d
    n_bands = HO // band_h
    B = N * n_bands

    G = 1                                # group slabs (bands / whole images) per grid step
    for d in range(1, B + 1):
        if B % d == 0 and d * band_h * W <= max_rows:
            G = d
    n_steps = B // G
    n_par = 2 if (n_steps >= 2 and n_steps % 2 == 0) else 1
    return band_h, n_bands, G, n_steps, n_par


def _conv_tile(xs_ref, g, w, *, rows, W, KH, KW):
    """3x3 valid conv of one flattened halo'd slab as ONE MXU matmul.

    lhs = concat of the KH*KW shifted (rows, Cin_pad) bf16 slices along the contraction
    axis, contracted against the (KH*KW*Cin_pad, Cout_pad) bf16 weight with f32 accum.
    """
    taps = []
    for kh in range(KH):
        for kw in range(KW):
            off = kh * W + kw
            taps.append(xs_ref[g, off:off + rows, :])
    lhs = jnp.concatenate(taps, axis=-1)                       # (rows, KH*KW*Cin_pad) bf16
    return jnp.dot(lhs, w, preferred_element_type=jnp.float32)  # (rows, Cout_pad) f32


# --------------------------- pass 1: BN batch statistics (no conv output) ---------------------------
def _stats_kernel(xs_ref, w_ref, mask_ref, sum_ref, sumsq_ref, *, G, W, KH, KW, rows):
    @pl.when(pl.program_id(1) == 0)
    def _init():
        sum_ref[...] = jnp.zeros_like(sum_ref)
        sumsq_ref[...] = jnp.zeros_like(sumsq_ref)

    w = w_ref[...]
    mask = mask_ref[...]                                       # (rows, 1), hoisted to wrapper
    cout_pad = w.shape[-1]
    s = jnp.zeros((1, cout_pad), jnp.float32)
    ss = jnp.zeros((1, cout_pad), jnp.float32)
    for g in range(G):
        conv = _conv_tile(xs_ref, g, w, rows=rows, W=W, KH=KH, KW=KW)
        cm = conv * mask                                       # zero the wrap-around columns
        s = s + jnp.sum(cm, axis=0, keepdims=True)
        ss = ss + jnp.sum(cm * conv, axis=0, keepdims=True)
    sum_ref[...] += s                                          # broadcast over the 8 pad rows
    sumsq_ref[...] += ss


# --------------------------- pass 2: recompute conv + BN affine + LeakyReLU ---------------------------
def _apply_kernel(xs_ref, w_ref, a_ref, b_ref, o_ref, *, G, W, KH, KW, rows, Cout,
                  negative_slope):
    w = w_ref[...]
    a = a_ref[...]
    b = b_ref[...]
    for g in range(G):
        conv = _conv_tile(xs_ref, g, w, rows=rows, W=W, KH=KH, KW=KW)
        y = conv * a + b
        y = jnp.where(y > 0, y, negative_slope * y)
        o_ref[g, :, :] = y[:, :Cout].astype(o_ref.dtype)       # un-padded channel store


def downblock_forward(x_nchw, w_oihw, bias, gamma, beta, negative_slope=0.01, eps=1e-5):
    """DownBlock forward. x_nchw: (N, Cin, H, W) -> (N, Cout, HO, WO).

    `bias` is accepted for API fidelity but unused: BatchNorm's mean subtraction cancels
    the conv bias exactly, so the output is bias-independent.
    """
    del bias
    N, Cin, H, W = x_nchw.shape
    Cout, _, KH, KW = w_oihw.shape
    HO, WO = H - KH + 1, W - KW + 1                      # padding=0, stride=1
    cin_pad = _round_up(Cin, 8)
    cout_pad = _round_up(Cout, LANE)                     # lane-dense compute channels
    K = KH * KW * cin_pad

    band_h, n_bands, G, n_steps, n_par = _pick_tiling(N, HO, W, cin_pad, cout_pad, Cout, KH, KW)
    rows = band_h * W
    B = N * n_bands
    slab_h = band_h + KH - 1
    slab_len = _round_up(slab_h * W + (KW - 1), 16)      # room for the largest shifted slice
    steps_per_par = n_steps // n_par

    # ---- wrapper glue (pure layout): NCHW -> NHWC bf16, halo'd row-band slabs ----
    x_nhwc = jnp.transpose(x_nchw, (0, 2, 3, 1)).astype(jnp.bfloat16)
    x_nhwc = jnp.pad(x_nhwc, ((0, 0), (0, 0), (0, 0), (0, cin_pad - Cin)))
    bands = [x_nhwc[:, b * band_h:b * band_h + slab_h] for b in range(n_bands)]
    slabs = jnp.stack(bands, axis=1).reshape(B, slab_h * W, cin_pad)
    slabs = jnp.pad(slabs, ((0, 0), (0, slab_len - slab_h * W), (0, 0)))
    slabs = slabs.reshape(n_steps, G, slab_len, cin_pad)

    # weights: OIHW -> (KH*KW*Cin_pad, Cout_pad) bf16, matching the in-kernel tap-concat order
    w_k = jnp.transpose(w_oihw, (2, 3, 1, 0))
    w_k = jnp.pad(w_k, ((0, 0), (0, 0), (0, cin_pad - Cin), (0, cout_pad - Cout)))
    w_k = w_k.reshape(K, cout_pad).astype(jnp.bfloat16)

    # column-validity mask for the flattened rows (hoisted out of the per-step path)
    vmask = ((jnp.arange(rows, dtype=jnp.int32) % W) < WO).astype(jnp.float32).reshape(rows, 1)

    # ---------------------------- pass 1 ----------------------------
    kern1 = functools.partial(_stats_kernel, G=G, W=W, KH=KH, KW=KW, rows=rows)
    sums, sumsqs = pl.pallas_call(
        kern1,
        grid=(n_par, steps_per_par),
        in_specs=[
            pl.BlockSpec((None, G, slab_len, cin_pad),
                         lambda p, i: (p * steps_per_par + i, 0, 0, 0)),
            pl.BlockSpec((K, cout_pad), lambda p, i: (0, 0)),
            pl.BlockSpec((rows, 1), lambda p, i: (0, 0)),
        ],
        out_specs=[
            pl.BlockSpec((None, 8, cout_pad), lambda p, i: (p, 0, 0)),
            pl.BlockSpec((None, 8, cout_pad), lambda p, i: (p, 0, 0)),
        ],
        out_shape=[
            jax.ShapeDtypeStruct((n_par, 8, cout_pad), jnp.float32),
            jax.ShapeDtypeStruct((n_par, 8, cout_pad), jnp.float32),
        ],
        compiler_params=pltpu.CompilerParams(
            dimension_semantics=("parallel", "arbitrary"),
            vmem_limit_bytes=_VMEM_LIMIT_BYTES),
    )(slabs, w_k, vmask)

    # ---- tiny wrapper glue: fold BN stats + gamma/beta into per-channel scale a / shift b ----
    count = jnp.float32(N * HO * WO)
    csum = jnp.sum(sums[:, 0, :], axis=0, keepdims=True)        # reduce per-core partials
    csumsq = jnp.sum(sumsqs[:, 0, :], axis=0, keepdims=True)
    mean = csum / count
    var = jnp.maximum(csumsq / count - mean * mean, 0.0)        # biased (training-mode) var
    gamma_p = jnp.pad(gamma.astype(jnp.float32), (0, cout_pad - Cout)).reshape(1, cout_pad)
    beta_p = jnp.pad(beta.astype(jnp.float32), (0, cout_pad - Cout)).reshape(1, cout_pad)
    a = gamma_p * lax.rsqrt(var + eps)
    b = beta_p - mean * a

    # ---------------------------- pass 2 ----------------------------
    kern2 = functools.partial(_apply_kernel, G=G, W=W, KH=KH, KW=KW, rows=rows,
                              Cout=Cout, negative_slope=negative_slope)
    y_wide = pl.pallas_call(
        kern2,
        grid=(n_steps,),
        in_specs=[
            pl.BlockSpec((None, G, slab_len, cin_pad), lambda i: (i, 0, 0, 0)),
            pl.BlockSpec((K, cout_pad), lambda i: (0, 0)),
            pl.BlockSpec((1, cout_pad), lambda i: (0, 0)),
            pl.BlockSpec((1, cout_pad), lambda i: (0, 0)),
        ],
        out_specs=pl.BlockSpec((None, G, rows, Cout), lambda i: (i, 0, 0, 0)),
        out_shape=jax.ShapeDtypeStruct((n_steps, G, rows, Cout), x_nchw.dtype),
        compiler_params=pltpu.CompilerParams(
            dimension_semantics=("parallel",),
            vmem_limit_bytes=_VMEM_LIMIT_BYTES),
    )(slabs, w_k, a, b)

    # ---- wrapper glue: drop garbage columns, back to NCHW ----
    y = y_wide.reshape(N, n_bands, band_h, W, Cout)[:, :, :, :WO, :]
    y = y.reshape(N, HO, WO, Cout)
    return jnp.transpose(y, (0, 3, 1, 2))


def _reference(x_nchw, w_oihw, bias, gamma, beta, negative_slope=0.01, eps=1e-5):
    """Pure-JAX f32 reference matching PyTorch DownBlock.forward in training mode."""
    conv = lax.conv_general_dilated(
        x_nchw, w_oihw, window_strides=(1, 1), padding="VALID",
        dimension_numbers=("NCHW", "OIHW", "NCHW"))
    conv = conv + bias[None, :, None, None]
    mean = jnp.mean(conv, axis=(0, 2, 3), keepdims=True)
    var = jnp.mean((conv - mean) ** 2, axis=(0, 2, 3), keepdims=True)
    y = (conv - mean) * lax.rsqrt(var + eps)
    y = y * gamma[None, :, None, None] + beta[None, :, None, None]
    return jnp.where(y > 0, y, negative_slope * y)


if __name__ == "__main__":
    N, Cin, Cout, H, W = 2, 4, 8, 16, 16
    KH, KW = 3, 3

    key = jax.random.PRNGKey(0)
    kx, kw_, kb = jax.random.split(key, 3)

    # PyTorch Conv2d default init: U(-1/sqrt(fan_in), +1/sqrt(fan_in))
    fan_in = Cin * KH * KW
    bound = 1.0 / math.sqrt(fan_in)
    w = jax.random.uniform(kw_, (Cout, Cin, KH, KW), jnp.float32, -bound, bound)
    b = jax.random.uniform(kb, (Cout,), jnp.float32, -bound, bound)
    gamma = jnp.ones((Cout,), jnp.float32)   # BatchNorm2d default weight
    beta = jnp.zeros((Cout,), jnp.float32)   # BatchNorm2d default bias
    x = jax.random.normal(kx, (N, Cin, H, W), jnp.float32)

    # Round conv operands to bf16-representable values so the kernel's bf16-MXU path
    # (with f32 accumulation) can be compared tightly against the f32 reference.
    x = x.astype(jnp.bfloat16).astype(jnp.float32)
    w = w.astype(jnp.bfloat16).astype(jnp.float32)

    fwd = jax.jit(downblock_forward)
    out = jax.block_until_ready(fwd(x, w, b, gamma, beta))
    ref = jax.block_until_ready(_reference(x, w, b, gamma, beta))

    assert out.shape == (N, Cout, H - KH + 1, W - KW + 1), out.shape
    max_err = np.max(np.abs(np.asarray(out) - np.asarray(ref)))
    assert np.allclose(np.asarray(out), np.asarray(ref), rtol=2e-3, atol=2e-3), max_err

    print("KERNEL_OK")
</pallas_src>

<mosaic_0001>
module attributes {stable_mosaic.version = 11 : i64} {
  func.func @_stats_kernel(%arg0: i32, %arg1: i32, %arg2: memref<1x2x272x8xbf16, #tpu.memory_space<vmem>>, %arg3: memref<72x128xbf16, #tpu.memory_space<vmem>>, %arg4: memref<224x1xf32, #tpu.memory_space<vmem>>, %arg5: memref<1x8x128xf32, #tpu.memory_space<vmem>>, %arg6: memref<1x8x128xf32, #tpu.memory_space<vmem>>) attributes {dimension_semantics = [#tpu.dimension_semantics<parallel>, #tpu.dimension_semantics<arbitrary>], iteration_bounds = array<i64: 1, 1>, scalar_prefetch = 0 : i64, scratch_operands = 0 : i64, tpu.core_type = #tpu.core_type<tc>, window_params = [{transform_indices = @transform_0, window_bounds = array<i64: 1, 2, 272, 8>}, {pipeline_mode = #tpu.pipeline_mode<synchronous>, transform_indices = @transform_1, window_bounds = array<i64: 72, 128>}, {pipeline_mode = #tpu.pipeline_mode<synchronous>, transform_indices = @transform_2, window_bounds = array<i64: 224, 1>}, {transform_indices = @transform_3, window_bounds = array<i64: 1, 8, 128>}, {transform_indices = @transform_4, window_bounds = array<i64: 1, 8, 128>}]} {
    %c0_i32 = arith.constant 0 : i32
    %0 = arith.cmpi eq, %arg1, %c0_i32 : i32
    %1 = arith.extui %0 : i1 to i32
    %c0_i32_0 = arith.constant 0 : i32
    %2 = arith.cmpi ne, %1, %c0_i32_0 : i32
    scf.if %2 {
      %cst_87 = arith.constant 0.000000e+00 : f32
      %79 = vector.broadcast %cst_87 : f32 to vector<8x128xf32>
      %c0_88 = arith.constant 0 : index
      %c0_89 = arith.constant 0 : index
      %c0_90 = arith.constant 0 : index
      %80 = vector.load %arg5[%c0_88, %c0_89, %c0_90] : memref<1x8x128xf32, #tpu.memory_space<vmem>>, vector<1x8x128xf32>
      %81 = vector.shape_cast %80 : vector<1x8x128xf32> to vector<8x128xf32>
      %82 = vector.shape_cast %79 : vector<8x128xf32> to vector<1x8x128xf32>
      tpu.vector_store %arg5[%c0_88, %c0_89, %c0_90], %82 {strides = array<i32>} : memref<1x8x128xf32, #tpu.memory_space<vmem>>, vector<1x8x128xf32>,
      %cst_91 = arith.constant 0.000000e+00 : f32
      %83 = vector.broadcast %cst_91 : f32 to vector<8x128xf32>
      %c0_92 = arith.constant 0 : index
      %c0_93 = arith.constant 0 : index
      %c0_94 = arith.constant 0 : index
      %84 = vector.load %arg6[%c0_92, %c0_93, %c0_94] : memref<1x8x128xf32, #tpu.memory_space<vmem>>, vector<1x8x128xf32>
      %85 = vector.shape_cast %84 : vector<1x8x128xf32> to vector<8x128xf32>
      %86 = vector.shape_cast %83 : vector<8x128xf32> to vector<1x8x128xf32>
      tpu.vector_store %arg6[%c0_92, %c0_93, %c0_94], %86 {strides = array<i32>} : memref<1x8x128xf32, #tpu.memory_space<vmem>>, vector<1x8x128xf32>,
    } else {
    }
    %c0 = arith.constant 0 : index
    %c0_1 = arith.constant 0 : index
    %3 = vector.load %arg3[%c0, %c0_1] : memref<72x128xbf16, #tpu.memory_space<vmem>>, vector<72x128xbf16>
    %c0_2 = arith.constant 0 : index
    %c0_3 = arith.constant 0 : index
    %4 = vector.load %arg4[%c0_2, %c0_3] : memref<224x1xf32, #tpu.memory_space<vmem>>, vector<224x1xf32>
    %cst = arith.constant 0.000000e+00 : f32
    %5 = vector.broadcast %cst : f32 to vector<1x128xf32>
    %cst_4 = arith.constant 0.000000e+00 : f32
    %6 = vector.broadcast %cst_4 : f32 to vector<1x128xf32>
    %c0_5 = arith.constant 0 : index
    %c0_6 = arith.constant 0 : index
    %c0_7 = arith.constant 0 : index
    %c0_8 = arith.constant 0 : index
    %7 = vector.load %arg2[%c0_5, %c0_6, %c0_7, %c0_8] : memref<1x2x272x8xbf16, #tpu.memory_space<vmem>>, vector<1x1x224x8xbf16>
    %8 = vector.shape_cast %7 : vector<1x1x224x8xbf16> to vector<224x8xbf16>
    %c0_9 = arith.constant 0 : index
    %c0_10 = arith.constant 0 : index
    %c1 = arith.constant 1 : index
    %c0_11 = arith.constant 0 : index
    %9 = vector.load %arg2[%c0_9, %c0_10, %c1, %c0_11] : memref<1x2x272x8xbf16, #tpu.memory_space<vmem>>, vector<1x1x224x8xbf16>
    %10 = vector.shape_cast %9 : vector<1x1x224x8xbf16> to vector<224x8xbf16>
    %c0_12 = arith.constant 0 : index
    %c0_13 = arith.constant 0 : index
    %c2 = arith.constant 2 : index
    %c0_14 = arith.constant 0 : index
    %11 = vector.load %arg2[%c0_12, %c0_13, %c2, %c0_14] : memref<1x2x272x8xbf16, #tpu.memory_space<vmem>>, vector<1x1x224x8xbf16>
    %12 = vector.shape_cast %11 : vector<1x1x224x8xbf16> to vector<224x8xbf16>
    %c0_15 = arith.constant 0 : index
    %c0_16 = arith.constant 0 : index
    %c16 = arith.constant 16 : index
    %c0_17 = arith.constant 0 : index
    %13 = vector.load %arg2[%c0_15, %c0_16, %c16, %c0_17] : memref<1x2x272x8xbf16, #tpu.memory_space<vmem>>, vector<1x1x224x8xbf16>
    %14 = vector.shape_cast %13 : vector<1x1x224x8xbf16> to vector<224x8xbf16>
    %c0_18 = arith.constant 0 : index
    %c0_19 = arith.constant 0 : index
    %c17 = arith.constant 17 : index
    %c0_20 = arith.constant 0 : index
    %15 = vector.load %arg2[%c0_18, %c0_19, %c17, %c0_20] : memref<1x2x272x8xbf16, #tpu.memory_space<vmem>>, vector<1x1x224x8xbf16>
    %16 = vector.shape_cast %15 : vector<1x1x224x8xbf16> to vector<224x8xbf16>
    %c0_21 = arith.constant 0 : index
    %c0_22 = arith.constant 0 : index
    %c18 = arith.constant 18 : index
    %c0_23 = arith.constant 0 : index
    %17 = vector.load %arg2[%c0_21, %c0_22, %c18, %c0_23] : memref<1x2x272x8xbf16, #tpu.memory_space<vmem>>, vector<1x1x224x8xbf16>
    %18 = vector.shape_cast %17 : vector<1x1x224x8xbf16> to vector<224x8xbf16>
    %c0_24 = arith.constant 0 : index
    %c0_25 = arith.constant 0 : index
    %c32 = arith.constant 32 : index
    %c0_26 = arith.constant 0 : index
    %19 = vector.load %arg2[%c0_24, %c0_25, %c32, %c0_26] : memref<1x2x272x8xbf16, #tpu.memory_space<vmem>>, vector<1x1x224x8xbf16>
    %20 = vector.shape_cast %19 : vector<1x1x224x8xbf16> to vector<224x8xbf16>
    %c0_27 = arith.constant 0 : index
    %c0_28 = arith.constant 0 : index
    %c33 = arith.constant 33 : index
    %c0_29 = arith.constant 0 : index
    %21 = vector.load %arg2[%c0_27, %c0_28, %c33, %c0_29] : memref<1x2x272x8xbf16, #tpu.memory_space<vmem>>, vector<1x1x224x8xbf16>
    %22 = vector.shape_cast %21 : vector<1x1x224x8xbf16> to vector<224x8xbf16>
    %c0_30 = arith.constant 0 : index
    %c0_31 = arith.constant 0 : index
    %c34 = arith.constant 34 : index
    %c0_32 = arith.constant 0 : index
    %23 = vector.load %arg2[%c0_30, %c0_31, %c34, %c0_32] : memref<1x2x272x8xbf16, #tpu.memory_space<vmem>>, vector<1x1x224x8xbf16>
    %24 = vector.shape_cast %23 : vector<1x1x224x8xbf16> to vector<224x8xbf16>
    %25 = tpu.concatenate %8, %10, %12, %14, %16, %18, %20, %22, %24 in 1 : vector<224x8xbf16>, vector<224x8xbf16>, vector<224x8xbf16>, vector<224x8xbf16>, vector<224x8xbf16>, vector<224x8xbf16>, vector<224x8xbf16>, vector<224x8xbf16>, vector<224x8xbf16> -> vector<224x72xbf16>
    %cst_33 = arith.constant dense<0.000000e+00> : vector<224x128xf32>
    %26 = tpu.matmul %25, %3, %cst_33 {dimension_numbers = #tpu.dot_dimension_numbers<[1], [0], [0], [1], [0, 0, 1, 1], [], []>} : vector<224x72xbf16>, vector<72x128xbf16>, vector<224x128xf32> -> vector<224x128xf32>
    %27 = vector.broadcast %4 : vector<224x1xf32> to vector<224x128xf32>
    %28 = arith.mulf %26, %27 : vector<224x128xf32>
    %cst_34 = arith.constant dense<0.000000e+00> : vector<128xf32>
    %29 = vector.multi_reduction <add>, %28, %cst_34 [0] : vector<224x128xf32> to vector<128xf32>
    %30 = vector.shape_cast %29 : vector<128xf32> to vector<1x128xf32>
    %31 = arith.addf %5, %30 : vector<1x128xf32>
    %32 = arith.mulf %28, %26 : vector<224x128xf32>
    %cst_35 = arith.constant dense<0.000000e+00> : vector<128xf32>
    %33 = vector.multi_reduction <add>, %32, %cst_35 [0] : vector<224x128xf32> to vector<128xf32>
    %34 = vector.shape_cast %33 : vector<128xf32> to vector<1x128xf32>
    %35 = arith.addf %6, %34 : vector<1x128xf32>
    %c0_36 = arith.constant 0 : index
    %c1_37 = arith.constant 1 : index
    %c0_38 = arith.constant 0 : index
    %c0_39 = arith.constant 0 : index
    %36 = vector.load %arg2[%c0_36, %c1_37, %c0_38, %c0_39] : memref<1x2x272x8xbf16, #tpu.memory_space<vmem>>, vector<1x1x224x8xbf16>
    %37 = vector.shape_cast %36 : vector<1x1x224x8xbf16> to vector<224x8xbf16>
    %c0_40 = arith.constant 0 : index
    %c1_41 = arith.constant 1 : index
    %c1_42 = arith.constant 1 : index
    %c0_43 = arith.constant 0 : index
    %38 = vector.load %arg2[%c0_40, %c1_41, %c1_42, %c0_43] : memref<1x2x272x8xbf16, #tpu.memory_space<vmem>>, vector<1x1x224x8xbf16>
    %39 = vector.shape_cast %38 : vector<1x1x224x8xbf16> to vector<224x8xbf16>
    %c0_44 = arith.constant 0 : index
    %c1_45 = arith.constant 1 : index
    %c2_46 = arith.constant 2 : index
    %c0_47 = arith.constant 0 : index
    %40 = vector.load %arg2[%c0_44, %c1_45, %c2_46, %c0_47] : memref<1x2x272x8xbf16, #tpu.memory_space<vmem>>, vector<1x1x224x8xbf16>
    %41 = vector.shape_cast %40 : vector<1x1x224x8xbf16> to vector<224x8xbf16>
    %c0_48 = arith.constant 0 : index
    %c1_49 = arith.constant 1 : index
    %c16_50 = arith.constant 16 : index
    %c0_51 = arith.constant 0 : index
    %42 = vector.load %arg2[%c0_48, %c1_49, %c16_50, %c0_51] : memref<1x2x272x8xbf16, #tpu.memory_space<vmem>>, vector<1x1x224x8xbf16>
    %43 = vector.shape_cast %42 : vector<1x1x224x8xbf16> to vector<224x8xbf16>
    %c0_52 = arith.constant 0 : index
    %c1_53 = arith.constant 1 : index
    %c17_54 = arith.constant 17 : index
    %c0_55 = arith.constant 0 : index
    %44 = vector.load %arg2[%c0_52, %c1_53, %c17_54, %c0_55] : memref<1x2x272x8xbf16, #tpu.memory_space<vmem>>, vector<1x1x224x8xbf16>
    %45 = vector.shape_cast %44 : vector<1x1x224x8xbf16> to vector<224x8xbf16>
    %c0_56 = arith.constant 0 : index
    %c1_57 = arith.constant 1 : index
    %c18_58 = arith.constant 18 : index
    %c0_59 = arith.constant 0 : index
    %46 = vector.load %arg2[%c0_56, %c1_57, %c18_58, %c0_59] : memref<1x2x272x8xbf16, #tpu.memory_space<vmem>>, vector<1x1x224x8xbf16>
    %47 = vector.shape_cast %46 : vector<1x1x224x8xbf16> to vector<224x8xbf16>
    %c0_60 = arith.constant 0 : index
    %c1_61 = arith.constant 1 : index
    %c32_62 = arith.constant 32 : index
    %c0_63 = arith.constant 0 : index
    %48 = vector.load %arg2[%c0_60, %c1_61, %c32_62, %c0_63] : memref<1x2x272x8xbf16, #tpu.memory_space<vmem>>, vector<1x1x224x8xbf16>
    %49 = vector.shape_cast %48 : vector<1x1x224x8xbf16> to vector<224x8xbf16>
    %c0_64 = arith.constant 0 : index
    %c1_65 = arith.constant 1 : index
    %c33_66 = arith.constant 33 : index
    %c0_67 = arith.constant 0 : index
    %50 = vector.load %arg2[%c0_64, %c1_65, %c33_66, %c0_67] : memref<1x2x272x8xbf16, #tpu.memory_space<vmem>>, vector<1x1x224x8xbf16>
    %51 = vector.shape_cast %50 : vector<1x1x224x8xbf16> to vector<224x8xbf16>
    %c0_68 = arith.constant 0 : index
    %c1_69 = arith.constant 1 : index
    %c34_70 = arith.constant 34 : index
    %c0_71 = arith.constant 0 : index
    %52 = vector.load %arg2[%c0_68, %c1_69, %c34_70, %c0_71] : memref<1x2x272x8xbf16, #tpu.memory_space<vmem>>, vector<1x1x224x8xbf16>
    %53 = vector.shape_cast %52 : vector<1x1x224x8xbf16> to vector<224x8xbf16>
    %54 = tpu.concatenate %37, %39, %41, %43, %45, %47, %49, %51, %53 in 1 : vector<224x8xbf16>, vector<224x8xbf16>, vector<224x8xbf16>, vector<224x8xbf16>, vector<224x8xbf16>, vector<224x8xbf16>, vector<224x8xbf16>, vector<224x8xbf16>, vector<224x8xbf16> -> vector<224x72xbf16>
    %cst_72 = arith.constant dense<0.000000e+00> : vector<224x128xf32>
    %55 = tpu.matmul %54, %3, %cst_72 {dimension_numbers = #tpu.dot_dimension_numbers<[1], [0], [0], [1], [0, 0, 1, 1], [], []>} : vector<224x72xbf16>, vector<72x128xbf16>, vector<224x128xf32> -> vector<224x128xf32>
    %56 = vector.broadcast %4 : vector<224x1xf32> to vector<224x128xf32>
    %57 = arith.mulf %55, %56 : vector<224x128xf32>
    %cst_73 = arith.constant dense<0.000000e+00> : vector<128xf32>
    %58 = vector.multi_reduction <add>, %57, %cst_73 [0] : vector<224x128xf32> to vector<128xf32>
    %59 = vector.shape_cast %58 : vector<128xf32> to vector<1x128xf32>
    %60 = arith.addf %31, %59 : vector<1x128xf32>
    %61 = arith.mulf %57, %55 : vector<224x128xf32>
    %cst_74 = arith.constant dense<0.000000e+00> : vector<128xf32>
    %62 = vector.multi_reduction <add>, %61, %cst_74 [0] : vector<224x128xf32> to vector<128xf32>
    %63 = vector.shape_cast %62 : vector<128xf32> to vector<1x128xf32>
    %64 = arith.addf %35, %63 : vector<1x128xf32>
    %c0_75 = arith.constant 0 : index
    %c0_76 = arith.constant 0 : index
    %c0_77 = arith.constant 0 : index
    %65 = vector.load %arg5[%c0_75, %c0_76, %c0_77] : memref<1x8x128xf32, #tpu.memory_space<vmem>>, vector<1x8x128xf32>
    %66 = vector.shape_cast %65 : vector<1x8x128xf32> to vector<8x128xf32>
    %67 = vector.broadcast %60 : vector<1x128xf32> to vector<8x128xf32>
    %68 = arith.addf %66, %67 : vector<8x128xf32>
    %c0_78 = arith.constant 0 : index
    %c0_79 = arith.constant 0 : index
    %c0_80 = arith.constant 0 : index
    %69 = vector.load %arg5[%c0_78, %c0_79, %c0_80] : memref<1x8x128xf32, #tpu.memory_space<vmem>>, vector<1x8x128xf32>
    %70 = vector.shape_cast %69 : vector<1x8x128xf32> to vector<8x128xf32>
    %71 = vector.shape_cast %68 : vector<8x128xf32> to vector<1x8x128xf32>
    tpu.vector_store %arg5[%c0_78, %c0_79, %c0_80], %71 {strides = array<i32>} : memref<1x8x128xf32, #tpu.memory_space<vmem>>, vector<1x8x128xf32>,
    %c0_81 = arith.constant 0 : index
    %c0_82 = arith.constant 0 : index
    %c0_83 = arith.constant 0 : index
    %72 = vector.load %arg6[%c0_81, %c0_82, %c0_83] : memref<1x8x128xf32, #tpu.memory_space<vmem>>, vector<1x8x128xf32>
    %73 = vector.shape_cast %72 : vector<1x8x128xf32> to vector<8x128xf32>
    %74 = vector.broadcast %64 : vector<1x128xf32> to vector<8x128xf32>
    %75 = arith.addf %73, %74 : vector<8x128xf32>
    %c0_84 = arith.constant 0 : index
    %c0_85 = arith.constant 0 : index
    %c0_86 = arith.constant 0 : index
    %76 = vector.load %arg6[%c0_84, %c0_85, %c0_86] : memref<1x8x128xf32, #tpu.memory_space<vmem>>, vector<1x8x128xf32>
    %77 = vector.shape_cast %76 : vector<1x8x128xf32> to vector<8x128xf32>
    %78 = vector.shape_cast %75 : vector<8x128xf32> to vector<1x8x128xf32>
    tpu.vector_store %arg6[%c0_84, %c0_85, %c0_86], %78 {strides = array<i32>} : memref<1x8x128xf32, #tpu.memory_space<vmem>>, vector<1x8x128xf32>,
    return
  }
  func.func @transform_0(%arg0: i32, %arg1: i32) -> (i32, i32, i32, i32) {
    %c1_i32 = arith.constant 1 : i32
    %0 = arith.muli %arg0, %c1_i32 : i32
    %1 = arith.addi %0, %arg1 : i32
    %c0_i32 = arith.constant 0 : i32
    %c0_i32_0 = arith.constant 0 : i32
    %c0_i32_1 = arith.constant 0 : i32
    %c0_i32_2 = arith.constant 0 : i32
    return %1, %c0_i32, %c0_i32_0, %c0_i32_1 : i32, i32, i32, i32
  }
  func.func @transform_1(%arg0: i32, %arg1: i32) -> (i32, i32) {
    %c0_i32 = arith.constant 0 : i32
    %c0_i32_0 = arith.constant 0 : i32
    %c0_i32_1 = arith.constant 0 : i32
    return %c0_i32, %c0_i32_0 : i32, i32
  }
  func.func @transform_2(%arg0: i32, %arg1: i32) -> (i32, i32) {
    %c0_i32 = arith.constant 0 : i32
    %c0_i32_0 = arith.constant 0 : i32
    %c0_i32_1 = arith.constant 0 : i32
    return %c0_i32, %c0_i32_0 : i32, i32
  }
  func.func @transform_3(%arg0: i32, %arg1: i32) -> (i32, i32, i32) {
    %c0_i32 = arith.constant 0 : i32
    %c0_i32_0 = arith.constant 0 : i32
    %c0_i32_1 = arith.constant 0 : i32
    return %arg0, %c0_i32, %c0_i32_0 : i32, i32, i32
  }
  func.func @transform_4(%arg0: i32, %arg1: i32) -> (i32, i32, i32) {
    %c0_i32 = arith.constant 0 : i32
    %c0_i32_0 = arith.constant 0 : i32
    %c0_i32_1 = arith.constant 0 : i32
    return %arg0, %c0_i32, %c0_i32_0 : i32, i32, i32
  }
}

module attributes {stable_mosaic.version = 11 : i64} {
  func.func @_apply_kernel(%arg0: i32, %arg1: memref<1x2x272x8xbf16, #tpu.memory_space<vmem>>, %arg2: memref<72x128xbf16, #tpu.memory_space<vmem>>, %arg3: memref<1x128xf32, #tpu.memory_space<vmem>>, %arg4: memref<1x128xf32, #tpu.memory_space<vmem>>, %arg5: memref<1x2x224x8xf32, #tpu.memory_space<vmem>>) attributes {dimension_semantics = [#tpu.dimension_semantics<parallel>], iteration_bounds = array<i64: 1>, scalar_prefetch = 0 : i64, scratch_operands = 0 : i64, tpu.core_type = #tpu.core_type<tc>, window_params = [{transform_indices = @transform_0, window_bounds = array<i64: 1, 2, 272, 8>}, {pipeline_mode = #tpu.pipeline_mode<synchronous>, transform_indices = @transform_1, window_bounds = array<i64: 72, 128>}, {pipeline_mode = #tpu.pipeline_mode<synchronous>, transform_indices = @transform_2, window_bounds = array<i64: 1, 128>}, {pipeline_mode = #tpu.pipeline_mode<synchronous>, transform_indices = @transform_3, window_bounds = array<i64: 1, 128>}, {transform_indices = @transform_4, window_bounds = array<i64: 1, 2, 224, 8>}]} {
    %c0 = arith.constant 0 : index
    %c0_0 = arith.constant 0 : index
    %0 = vector.load %arg2[%c0, %c0_0] : memref<72x128xbf16, #tpu.memory_space<vmem>>, vector<72x128xbf16>
    %c0_1 = arith.constant 0 : index
    %c0_2 = arith.constant 0 : index
    %1 = vector.load %arg3[%c0_1, %c0_2] : memref<1x128xf32, #tpu.memory_space<vmem>>, vector<1x128xf32>
    %c0_3 = arith.constant 0 : index
    %c0_4 = arith.constant 0 : index
    %2 = vector.load %arg4[%c0_3, %c0_4] : memref<1x128xf32, #tpu.memory_space<vmem>>, vector<1x128xf32>
    %c0_5 = arith.constant 0 : index
    %c0_6 = arith.constant 0 : index
    %c0_7 = arith.constant 0 : index
    %c0_8 = arith.constant 0 : index
    %3 = vector.load %arg1[%c0_5, %c0_6, %c0_7, %c0_8] : memref<1x2x272x8xbf16, #tpu.memory_space<vmem>>, vector<1x1x224x8xbf16>
    %4 = vector.shape_cast %3 : vector<1x1x224x8xbf16> to vector<224x8xbf16>
    %c0_9 = arith.constant 0 : index
    %c0_10 = arith.constant 0 : index
    %c1 = arith.constant 1 : index
    %c0_11 = arith.constant 0 : index
    %5 = vector.load %arg1[%c0_9, %c0_10, %c1, %c0_11] : memref<1x2x272x8xbf16, #tpu.memory_space<vmem>>, vector<1x1x224x8xbf16>
    %6 = vector.shape_cast %5 : vector<1x1x224x8xbf16> to vector<224x8xbf16>
    %c0_12 = arith.constant 0 : index
    %c0_13 = arith.constant 0 : index
    %c2 = arith.constant 2 : index
    %c0_14 = arith.constant 0 : index
    %7 = vector.load %arg1[%c0_12, %c0_13, %c2, %c0_14] : memref<1x2x272x8xbf16, #tpu.memory_space<vmem>>, vector<1x1x224x8xbf16>
    %8 = vector.shape_cast %7 : vector<1x1x224x8xbf16> to vector<224x8xbf16>
    %c0_15 = arith.constant 0 : index
    %c0_16 = arith.constant 0 : index
    %c16 = arith.constant 16 : index
    %c0_17 = arith.constant 0 : index
    %9 = vector.load %arg1[%c0_15, %c0_16, %c16, %c0_17] : memref<1x2x272x8xbf16, #tpu.memory_space<vmem>>, vector<1x1x224x8xbf16>
    %10 = vector.shape_cast %9 : vector<1x1x224x8xbf16> to vector<224x8xbf16>
    %c0_18 = arith.constant 0 : index
    %c0_19 = arith.constant 0 : index
    %c17 = arith.constant 17 : index
    %c0_20 = arith.constant 0 : index
    %11 = vector.load %arg1[%c0_18, %c0_19, %c17, %c0_20] : memref<1x2x272x8xbf16, #tpu.memory_space<vmem>>, vector<1x1x224x8xbf16>
    %12 = vector.shape_cast %11 : vector<1x1x224x8xbf16> to vector<224x8xbf16>
    %c0_21 = arith.constant 0 : index
    %c0_22 = arith.constant 0 : index
    %c18 = arith.constant 18 : index
    %c0_23 = arith.constant 0 : index
    %13 = vector.load %arg1[%c0_21, %c0_22, %c18, %c0_23] : memref<1x2x272x8xbf16, #tpu.memory_space<vmem>>, vector<1x1x224x8xbf16>
    %14 = vector.shape_cast %13 : vector<1x1x224x8xbf16> to vector<224x8xbf16>
    %c0_24 = arith.constant 0 : index
    %c0_25 = arith.constant 0 : index
    %c32 = arith.constant 32 : index
    %c0_26 = arith.constant 0 : index
    %15 = vector.load %arg1[%c0_24, %c0_25, %c32, %c0_26] : memref<1x2x272x8xbf16, #tpu.memory_space<vmem>>, vector<1x1x224x8xbf16>
    %16 = vector.shape_cast %15 : vector<1x1x224x8xbf16> to vector<224x8xbf16>
    %c0_27 = arith.constant 0 : index
    %c0_28 = arith.constant 0 : index
    %c33 = arith.constant 33 : index
    %c0_29 = arith.constant 0 : index
    %17 = vector.load %arg1[%c0_27, %c0_28, %c33, %c0_29] : memref<1x2x272x8xbf16, #tpu.memory_space<vmem>>, vector<1x1x224x8xbf16>
    %18 = vector.shape_cast %17 : vector<1x1x224x8xbf16> to vector<224x8xbf16>
    %c0_30 = arith.constant 0 : index
    %c0_31 = arith.constant 0 : index
    %c34 = arith.constant 34 : index
    %c0_32 = arith.constant 0 : index
    %19 = vector.load %arg1[%c0_30, %c0_31, %c34, %c0_32] : memref<1x2x272x8xbf16, #tpu.memory_space<vmem>>, vector<1x1x224x8xbf16>
    %20 = vector.shape_cast %19 : vector<1x1x224x8xbf16> to vector<224x8xbf16>
    %21 = tpu.concatenate %4, %6, %8, %10, %12, %14, %16, %18, %20 in 1 : vector<224x8xbf16>, vector<224x8xbf16>, vector<224x8xbf16>, vector<224x8xbf16>, vector<224x8xbf16>, vector<224x8xbf16>, vector<224x8xbf16>, vector<224x8xbf16>, vector<224x8xbf16> -> vector<224x72xbf16>
    %cst = arith.constant dense<0.000000e+00> : vector<224x128xf32>
    %22 = tpu.matmul %21, %0, %cst {dimension_numbers = #tpu.dot_dimension_numbers<[1], [0], [0], [1], [0, 0, 1, 1], [], []>} : vector<224x72xbf16>, vector<72x128xbf16>, vector<224x128xf32> -> vector<224x128xf32>
    %23 = vector.broadcast %1 : vector<1x128xf32> to vector<224x128xf32>
    %24 = arith.mulf %22, %23 : vector<224x128xf32>
    %25 = vector.broadcast %2 : vector<1x128xf32> to vector<224x128xf32>
    %26 = arith.addf %24, %25 : vector<224x128xf32>
    %cst_33 = arith.constant 0.000000e+00 : f32
    %27 = vector.broadcast %cst_33 : f32 to vector<224x128xf32>
    %28 = arith.cmpf ogt, %26, %27 : vector<224x128xf32>
    %cst_34 = arith.constant 0.00999999977 : f32
    %29 = vector.broadcast %cst_34 : f32 to vector<224x128xf32>
    %30 = arith.mulf %29, %26 : vector<224x128xf32>
    %31 = arith.select %28, %26, %30 : vector<224x128xi1>, vector<224x128xf32>
    %32 = vector.extract_strided_slice %31 {offsets = [0, 0], sizes = [224, 8], strides = [1, 1]} : vector<224x128xf32> to vector<224x8xf32>
    %c0_35 = arith.constant 0 : index
    %c0_36 = arith.constant 0 : index
    %c0_37 = arith.constant 0 : index
    %c0_38 = arith.constant 0 : index
    %33 = vector.load %arg5[%c0_35, %c0_36, %c0_37, %c0_38] : memref<1x2x224x8xf32, #tpu.memory_space<vmem>>, vector<1x1x224x8xf32>
    %34 = vector.shape_cast %33 : vector<1x1x224x8xf32> to vector<224x8xf32>
    %35 = vector.shape_cast %32 : vector<224x8xf32> to vector<1x1x224x8xf32>
    tpu.vector_store %arg5[%c0_35, %c0_36, %c0_37, %c0_38], %35 {strides = array<i32>} : memref<1x2x224x8xf32, #tpu.memory_space<vmem>>, vector<1x1x224x8xf32>,
    %c0_39 = arith.constant 0 : index
    %c1_40 = arith.constant 1 : index
    %c0_41 = arith.constant 0 : index
    %c0_42 = arith.constant 0 : index
    %36 = vector.load %arg1[%c0_39, %c1_40, %c0_41, %c0_42] : memref<1x2x272x8xbf16, #tpu.memory_space<vmem>>, vector<1x1x224x8xbf16>
    %37 = vector.shape_cast %36 : vector<1x1x224x8xbf16> to vector<224x8xbf16>
    %c0_43 = arith.constant 0 : index
    %c1_44 = arith.constant 1 : index
    %c1_45 = arith.constant 1 : index
    %c0_46 = arith.constant 0 : index
    %38 = vector.load %arg1[%c0_43, %c1_44, %c1_45, %c0_46] : memref<1x2x272x8xbf16, #tpu.memory_space<vmem>>, vector<1x1x224x8xbf16>
    %39 = vector.shape_cast %38 : vector<1x1x224x8xbf16> to vector<224x8xbf16>
    %c0_47 = arith.constant 0 : index
    %c1_48 = arith.constant 1 : index
    %c2_49 = arith.constant 2 : index
    %c0_50 = arith.constant 0 : index
    %40 = vector.load %arg1[%c0_47, %c1_48, %c2_49, %c0_50] : memref<1x2x272x8xbf16, #tpu.memory_space<vmem>>, vector<1x1x224x8xbf16>
    %41 = vector.shape_cast %40 : vector<1x1x224x8xbf16> to vector<224x8xbf16>
    %c0_51 = arith.constant 0 : index
    %c1_52 = arith.constant 1 : index
    %c16_53 = arith.constant 16 : index
    %c0_54 = arith.constant 0 : index
    %42 = vector.load %arg1[%c0_51, %c1_52, %c16_53, %c0_54] : memref<1x2x272x8xbf16, #tpu.memory_space<vmem>>, vector<1x1x224x8xbf16>
    %43 = vector.shape_cast %42 : vector<1x1x224x8xbf16> to vector<224x8xbf16>
    %c0_55 = arith.constant 0 : index
    %c1_56 = arith.constant 1 : index
    %c17_57 = arith.constant 17 : index
    %c0_58 = arith.constant 0 : index
    %44 = vector.load %arg1[%c0_55, %c1_56, %c17_57, %c0_58] : memref<1x2x272x8xbf16, #tpu.memory_space<vmem>>, vector<1x1x224x8xbf16>
    %45 = vector.shape_cast %44 : vector<1x1x224x8xbf16> to vector<224x8xbf16>
    %c0_59 = arith.constant 0 : index
    %c1_60 = arith.constant 1 : index
    %c18_61 = arith.constant 18 : index
    %c0_62 = arith.constant 0 : index
    %46 = vector.load %arg1[%c0_59, %c1_60, %c18_61, %c0_62] : memref<1x2x272x8xbf16, #tpu.memory_space<vmem>>, vector<1x1x224x8xbf16>
    %47 = vector.shape_cast %46 : vector<1x1x224x8xbf16> to vector<224x8xbf16>
    %c0_63 = arith.constant 0 : index
    %c1_64 = arith.constant 1 : index
    %c32_65 = arith.constant 32 : index
    %c0_66 = arith.constant 0 : index
    %48 = vector.load %arg1[%c0_63, %c1_64, %c32_65, %c0_66] : memref<1x2x272x8xbf16, #tpu.memory_space<vmem>>, vector<1x1x224x8xbf16>
    %49 = vector.shape_cast %48 : vector<1x1x224x8xbf16> to vector<224x8xbf16>
    %c0_67 = arith.constant 0 : index
    %c1_68 = arith.constant 1 : index
    %c33_69 = arith.constant 33 : index
    %c0_70 = arith.constant 0 : index
    %50 = vector.load %arg1[%c0_67, %c1_68, %c33_69, %c0_70] : memref<1x2x272x8xbf16, #tpu.memory_space<vmem>>, vector<1x1x224x8xbf16>
    %51 = vector.shape_cast %50 : vector<1x1x224x8xbf16> to vector<224x8xbf16>
    %c0_71 = arith.constant 0 : index
    %c1_72 = arith.constant 1 : index
    %c34_73 = arith.constant 34 : index
    %c0_74 = arith.constant 0 : index
    %52 = vector.load %arg1[%c0_71, %c1_72, %c34_73, %c0_74] : memref<1x2x272x8xbf16, #tpu.memory_space<vmem>>, vector<1x1x224x8xbf16>
    %53 = vector.shape_cast %52 : vector<1x1x224x8xbf16> to vector<224x8xbf16>
    %54 = tpu.concatenate %37, %39, %41, %43, %45, %47, %49, %51, %53 in 1 : vector<224x8xbf16>, vector<224x8xbf16>, vector<224x8xbf16>, vector<224x8xbf16>, vector<224x8xbf16>, vector<224x8xbf16>, vector<224x8xbf16>, vector<224x8xbf16>, vector<224x8xbf16> -> vector<224x72xbf16>
    %cst_75 = arith.constant dense<0.000000e+00> : vector<224x128xf32>
    %55 = tpu.matmul %54, %0, %cst_75 {dimension_numbers = #tpu.dot_dimension_numbers<[1], [0], [0], [1], [0, 0, 1, 1], [], []>} : vector<224x72xbf16>, vector<72x128xbf16>, vector<224x128xf32> -> vector<224x128xf32>
    %56 = vector.broadcast %1 : vector<1x128xf32> to vector<224x128xf32>
    %57 = arith.mulf %55, %56 : vector<224x128xf32>
    %58 = vector.broadcast %2 : vector<1x128xf32> to vector<224x128xf32>
    %59 = arith.addf %57, %58 : vector<224x128xf32>
    %cst_76 = arith.constant 0.000000e+00 : f32
    %60 = vector.broadcast %cst_76 : f32 to vector<224x128xf32>
    %61 = arith.cmpf ogt, %59, %60 : vector<224x128xf32>
    %cst_77 = arith.constant 0.00999999977 : f32
    %62 = vector.broadcast %cst_77 : f32 to vector<224x128xf32>
    %63 = arith.mulf %62, %59 : vector<224x128xf32>
    %64 = arith.select %61, %59, %63 : vector<224x128xi1>, vector<224x128xf32>
    %65 = vector.extract_strided_slice %64 {offsets = [0, 0], sizes = [224, 8], strides = [1, 1]} : vector<224x128xf32> to vector<224x8xf32>
    %c0_78 = arith.constant 0 : index
    %c1_79 = arith.constant 1 : index
    %c0_80 = arith.constant 0 : index
    %c0_81 = arith.constant 0 : index
    %66 = vector.load %arg5[%c0_78, %c1_79, %c0_80, %c0_81] : memref<1x2x224x8xf32, #tpu.memory_space<vmem>>, vector<1x1x224x8xf32>
    %67 = vector.shape_cast %66 : vector<1x1x224x8xf32> to vector<224x8xf32>
    %68 = vector.shape_cast %65 : vector<224x8xf32> to vector<1x1x224x8xf32>
    tpu.vector_store %arg5[%c0_78, %c1_79, %c0_80, %c0_81], %68 {strides = array<i32>} : memref<1x2x224x8xf32, #tpu.memory_space<vmem>>, vector<1x1x224x8xf32>,
    return
  }
  func.func @transform_0(%arg0: i32) -> (i32, i32, i32, i32) {
    %c0_i32 = arith.constant 0 : i32
    %c0_i32_0 = arith.constant 0 : i32
    %c0_i32_1 = arith.constant 0 : i32
    %c0_i32_2 = arith.constant 0 : i32
    return %arg0, %c0_i32, %c0_i32_0, %c0_i32_1 : i32, i32, i32, i32
  }
  func.func @transform_1(%arg0: i32) -> (i32, i32) {
    %c0_i32 = arith.constant 0 : i32
    %c0_i32_0 = arith.constant 0 : i32
    %c0_i32_1 = arith.constant 0 : i32
    return %c0_i32, %c0_i32_0 : i32, i32
  }
  func.func @transform_2(%arg0: i32) -> (i32, i32) {
    %c0_i32 = arith.constant 0 : i32
    %c0_i32_0 = arith.constant 0 : i32
    %c0_i32_1 = arith.constant 0 : i32
    return %c0_i32, %c0_i32_0 : i32, i32
  }
  func.func @transform_3(%arg0: i32) -> (i32, i32) {
    %c0_i32 = arith.constant 0 : i32
    %c0_i32_0 = arith.constant 0 : i32
    %c0_i32_1 = arith.constant 0 : i32
    return %c0_i32, %c0_i32_0 : i32, i32
  }
  func.func @transform_4(%arg0: i32) -> (i32, i32, i32, i32) {
    %c0_i32 = arith.constant 0 : i32
    %c0_i32_0 = arith.constant 0 : i32
    %c0_i32_1 = arith.constant 0 : i32
    %c0_i32_2 = arith.constant 0 : i32
    return %arg0, %c0_i32, %c0_i32_0, %c0_i32_1 : i32, i32, i32, i32
  }
}

</mosaic_0001>

<llo_original>
// kernel: downblock_forward.2
$region0: #{downblock_forward.2}
  #allocation0 [shape = 'u32[]', space=smem, size = 0x4, offset = 0x4, fixed_abs, tag = 'smem constant byte address 0x4 - core index']
  #allocation1 [shape = 'u32[144,128]{1,0:T(1,128)}', space=vmem, size = 0x12000, scoped, tag = 'internal scratch']
  %s0 = inlined_call_operand.hbm [shape: bf16[1,2,272,8], index: 0, kind: input, shape index: {}]
  %s1 = inlined_call_operand.hbm [shape: bf16[72,128], index: 1, kind: input, shape index: {}]
  %s2 = inlined_call_operand.hbm [shape: f32[224,1], index: 2, kind: input, shape index: {}]
  %s3 = inlined_call_operand.hbm [shape: f32[1,8,128], index: 3, kind: output, shape index: {0}]
  %s4 = inlined_call_operand.hbm [shape: f32[1,8,128], index: 4, kind: output, shape index: {1}]
  %5 = xla_tuple %s3, %s4
  %s6 = sld [smem:[#allocation0]]
  $region46: #{downblock_forward.2} parent=0
    _
  %s8 = ssub.s32 1, %s6
  %s9 = scalar_select 0, %s8, %s6
  $region1: #{downblock_forward.2} parent=0
    #allocation2 [shape = 'u8[139264]{0}', space=vmem, size = 0x22000, scoped, tag = 'input window, operand 0, single buffered']
    #allocation3 [shape = 's32[1]{0}', space=sflag, size = 0x4, scoped, tag = 'scoped memory for downblock_forward.2']
    #allocation4 [shape = 's32[1]{0}', space=sflag, size = 0x4, scoped, tag = 'scoped memory for downblock_forward.2']
    #allocation5 [shape = 'u8[18432]{0}', space=vmem, size = 0x4800, scoped, tag = 'input window, operand 1, single buffered']
    #allocation6 [shape = 's32[1]{0}', space=sflag, size = 0x4, scoped, tag = 'scoped memory for downblock_forward.2']
    #allocation7 [shape = 'u8[114688]{0}', space=vmem, size = 0x1c000, scoped, tag = 'input window, operand 2, single buffered']
    #allocation8 [shape = 'u8[4096]{0}', space=vmem, size = 0x1000, scoped, tag = 'output window, operand 0, single buffered']
    #allocation9 [shape = 'u8[4096]{0}', space=vmem, size = 0x1000, scoped, tag = 'output window, operand 1, single buffered']
    #allocation10 [shape = 's32[1]{0}', space=sflag, size = 0x4, scoped, tag = 'scoped memory for downblock_forward.2']
    %10 = vsyncpa [#allocation3], 0
    %11 = vsyncpa [#allocation6], 0
    %12 = vsyncpa [#allocation4], 0
    %13 = vsyncpa [#allocation10], 0
    // Predicated region
    $region2: #{downblock_forward.2} parent=1 // pred_check
      _
    $region3: #{downblock_forward.2} parent=1 // pred_check_branch
      %15 = sbr.rel (0) target = $region5
    $region4: #{downblock_forward.2} parent=1 // pred_region
      %s16 = sadd.s32 0, 0
      %s18 = ssub.s32 4352, 4352
      %19 = vsyncadd [#allocation3], %s18
      %s20 = smul.addr %s16, 68
      %s21 = smul.addr %s20, 64
      %s22 = scalar_lea.hbm %s0, %s21
      %s23 = sshll.u32 [#allocation2], 4
      %s24 = int_to_ptr.vmem [resolvable:$true] %s23
      %29 = dma.hbm_to_vmem [thread:$0]  %s22, 4352, %s24, [#allocation3], 64, 64, 4
    $region5: #{downblock_forward.2} parent=1 // pred_fallthru
      _
    // Predicated region
    $region6: #{downblock_forward.2} parent=1 // pred_check
      _
    $region7: #{downblock_forward.2} parent=1 // pred_check_branch
      %31 = sbr.rel (0) target = $region9
    $region8: #{downblock_forward.2} parent=1 // pred_region
      %s33 = ssub.s32 576, 576
      %34 = vsyncadd [#allocation6], %s33
      %s35 = sshll.u32 [#allocation5], 4
      %s36 = int_to_ptr.vmem [resolvable:$true] %s35
      %41 = dma.hbm_to_vmem [thread:$0]  %s1, 576, %s36, [#allocation6], 64, 64, 4
    $region9: #{downblock_forward.2} parent=1 // pred_fallthru
      _
    // Predicated region
    $region10: #{downblock_forward.2} parent=1 // pred_check
      _
    $region11: #{downblock_forward.2} parent=1 // pred_check_branch
      %43 = sbr.rel (0) target = $region13
    $region12: #{downblock_forward.2} parent=1 // pred_region
      %s45 = ssub.s32 3584, 3584
      %46 = vsyncadd [#allocation6], %s45
      %s47 = sshll.u32 [#allocation7], 4
      %s48 = int_to_ptr.vmem [resolvable:$true] %s47
      %53 = dma.hbm_to_vmem [thread:$0]  %s2, 3584, %s48, [#allocation6], 128, 128, 8
    $region13: #{downblock_forward.2} parent=1 // pred_fallthru
      _
    // Predicated region
    $region14: #{downblock_forward.2} parent=1 // pred_check
      _
    $region15: #{downblock_forward.2} parent=1 // pred_check_branch
      %55 = sbr.rel (0) target = $region17
    $region16: #{downblock_forward.2} parent=1 // pred_region
      %56 = dma.done [#allocation3], 4352
    $region17: #{downblock_forward.2} parent=1 // pred_fallthru
      _
    // Predicated region
    $region18: #{downblock_forward.2} parent=1 // pred_check
      _
    $region19: #{downblock_forward.2} parent=1 // pred_check_branch
      %58 = sbr.rel (0) target = $region21
    $region20: #{downblock_forward.2} parent=1 // pred_region
      %59 = dma.done [#allocation6], 576
    $region21: #{downblock_forward.2} parent=1 // pred_fallthru
      _
    // Predicated region
    $region22: #{downblock_forward.2} parent=1 // pred_check
      _
    $region23: #{downblock_forward.2} parent=1 // pred_check_branch
      %61 = sbr.rel (0) target = $region25
    $region24: #{downblock_forward.2} parent=1 // pred_region
      %62 = dma.done [#allocation6], 3584
    $region25: #{downblock_forward.2} parent=1 // pred_fallthru
      _
    %s63 = sadd.s32 0, 0
    %p65 = scmp.eq.s32.totalorder 0, 0
    // Predicated region
    $region26: #{downblock_forward.2} parent=1 // pred_check
      %p66 = pneg %p65
    $region27: #{downblock_forward.2} parent=1 // pred_check_branch
      %68 = sbr.rel (%p66) target = $region29
    $region28: #{downblock_forward.2} parent=1 // pred_region
      %69 = vst [vmem:[#allocation8] sm:$0xff] 0.0
      %70 = vst [vmem:[#allocation9] sm:$0xff] 0.0
    $region29: #{downblock_forward.2} parent=1 // pred_fallthru
      _
    %v71 = vld [vmem:[#allocation5] sm:$0xf]
    %v72 = vld [vmem:[#allocation5 + $0x4] sm:$0xf]
    %v73 = vld [vmem:[#allocation5 + $0x8] sm:$0xf]
    %v74 = vld [vmem:[#allocation5 + $0xc] sm:$0xf]
    %v75 = vld [vmem:[#allocation5 + $0x10] sm:$0xf]
    %v76 = vld [vmem:[#allocation5 + $0x14] sm:$0xf]
    %v77 = vld [vmem:[#allocation5 + $0x18] sm:$0xf]
    %v78 = vld [vmem:[#allocation5 + $0x1c] sm:$0xf]
    %v79 = vld [vmem:[#allocation5 + $0x20] sm:$0xf]
    %v80 = vld [vmem:[#allocation7] sm:$0xff]
    %v81 = vld [vmem:[#allocation7 + $0x8] sm:$0xff]
    %v82 = vld [vmem:[#allocation7 + $0x10] sm:$0xff]
    %v83 = vld [vmem:[#allocation7 + $0x18] sm:$0xff]
    %v84 = vld [vmem:[#allocation7 + $0x20] sm:$0xff]
    %v85 = vld [vmem:[#allocation7 + $0x28] sm:$0xff]
    %v86 = vld [vmem:[#allocation7 + $0x30] sm:$0xff]
    %v87 = vld [vmem:[#allocation7 + $0x38] sm:$0xff]
    %v88 = vld [vmem:[#allocation7 + $0x40] sm:$0xff]
    %v89 = vld [vmem:[#allocation7 + $0x48] sm:$0xff]
    %v90 = vld [vmem:[#allocation7 + $0x50] sm:$0xff]
    %v91 = vld [vmem:[#allocation7 + $0x58] sm:$0xff]
    %v92 = vld [vmem:[#allocation7 + $0x60] sm:$0xff]
    %v93 = vld [vmem:[#allocation7 + $0x68] sm:$0xff]
    %v94 = vld [vmem:[#allocation7 + $0x70] sm:$0xff]
    %v95 = vld [vmem:[#allocation7 + $0x78] sm:$0xff]
    %v96 = vld [vmem:[#allocation7 + $0x80] sm:$0xff]
    %v97 = vld [vmem:[#allocation7 + $0x88] sm:$0xff]
    %v98 = vld [vmem:[#allocation7 + $0x90] sm:$0xff]
    %v99 = vld [vmem:[#allocation7 + $0x98] sm:$0xff]
    %v100 = vld [vmem:[#allocation7 + $0xa0] sm:$0xff]
    %v101 = vld [vmem:[#allocation7 + $0xa8] sm:$0xff]
    %v102 = vld [vmem:[#allocation7 + $0xb0] sm:$0xff]
    %v103 = vld [vmem:[#allocation7 + $0xb8] sm:$0xff]
    %v104 = vld [vmem:[#allocation7 + $0xc0] sm:$0xff]
    %v105 = vld [vmem:[#allocation7 + $0xc8] sm:$0xff]
    %v106 = vld [vmem:[#allocation7 + $0xd0] sm:$0xff]
    %v107 = vld [vmem:[#allocation7 + $0xd8] sm:$0xff]
    %v108 = vld [vmem:[#allocation2] sm:$0xf]
    %v109 = vld [vmem:[#allocation2 + $0x4] sm:$0xf]
    %v110 = vld [vmem:[#allocation2 + $0x8] sm:$0xf]
    %v111 = vld [vmem:[#allocation2 + $0xc] sm:$0xf]
    %v112 = vld [vmem:[#allocation2 + $0x10] sm:$0xf]
    %v113 = vld [vmem:[#allocation2 + $0x14] sm:$0xf]
    %v114 = vld [vmem:[#allocation2 + $0x18] sm:$0xf]
    %v115 = vld [vmem:[#allocation2 + $0x1c] sm:$0xf]
    %v116 = vld [vmem:[#allocation2 + $0x20] sm:$0xf]
    %v117 = vld [vmem:[#allocation2 + $0x24] sm:$0xf]
    %v118 = vld [vmem:[#allocation2 + $0x28] sm:$0xf]
    %v119 = vld [vmem:[#allocation2 + $0x2c] sm:$0xf]
    %v120 = vld [vmem:[#allocation2 + $0x30] sm:$0xf]
    %v121 = vld [vmem:[#allocation2 + $0x34] sm:$0xf]
    %v122 = vld [vmem:[#allocation2 + $0x38] sm:$0xf]
    %v123 = vld [vmem:[#allocation2 + $0x3c] sm:$0xf]
    %v124 = vld [vmem:[#allocation2 + $0x40] sm:$0xf]
    %v125 = vld [vmem:[#allocation2 + $0x44] sm:$0xf]
    %v126 = vld [vmem:[#allocation2 + $0x48] sm:$0xf]
    %v127 = vld [vmem:[#allocation2 + $0x4c] sm:$0xf]
    %v128 = vld [vmem:[#allocation2 + $0x50] sm:$0xf]
    %v129 = vld [vmem:[#allocation2 + $0x54] sm:$0xf]
    %v130 = vld [vmem:[#allocation2 + $0x58] sm:$0xf]
    %v131 = vld [vmem:[#allocation2 + $0x5c] sm:$0xf]
    %v132 = vld [vmem:[#allocation2 + $0x60] sm:$0xf]
    %v133 = vld [vmem:[#allocation2 + $0x64] sm:$0xf]
    %v134 = vld [vmem:[#allocation2 + $0x68] sm:$0xf]
    %v135 = vld [vmem:[#allocation2 + $0x6c] sm:$0xf]
    %v136 = vld [vmem:[#allocation2 + $0x70] sm:$0x1]
    %v137 = vld [vmem:[#allocation2] sm:$0xe]
    %v138 = vld [vmem:[#allocation2 + $0x70] sm:$0xf]
    %v139 = vld [vmem:[#allocation2 + $0x74] sm:$0xf]
    %v140 = vld [vmem:[#allocation2 + $0x78] sm:$0x1]
    %v141 = vld [vmem:[#allocation2 + $0x8] sm:$0xe]
    %v142 = vld [vmem:[#allocation2 + $0x78] sm:$0xf]
    %v143 = vld [vmem:[#allocation2 + $0x7c] sm:$0xf]
    %v144 = vld [vmem:[#allocation2 + $0x80] sm:$0x1]
    %v145 = vld [vmem:[#allocation2 + $0x10] sm:$0xe]
    %v174 = vunpack.c.l.b16 %v108
    %v175 = vunpack.c.l.b16 %v109
    %v176 = vunpack.c.l.b16 %v110
    %v177 = vunpack.c.l.b16 %v111
    %v178 = vunpack.c.l.b16 %v112
    %v179 = vunpack.c.l.b16 %v113
    %v180 = vunpack.c.l.b16 %v114
    %v181 = vunpack.c.l.b16 %v115
    %v182 = vunpack.c.l.b16 %v116
    %v183 = vunpack.c.l.b16 %v117
    %v184 = vunpack.c.l.b16 %v118
    %v185 = vunpack.c.l.b16 %v119
    %v186 = vunpack.c.l.b16 %v120
    %v187 = vunpack.c.l.b16 %v121
    %v188 = vunpack.c.l.b16 %v122
    %v189 = vunpack.c.l.b16 %v123
    %v190 = vunpack.c.l.b16 %v124
    %v191 = vunpack.c.l.b16 %v125
    %v192 = vunpack.c.l.b16 %v126
    %v193 = vunpack.c.l.b16 %v127
    %v194 = vunpack.c.l.b16 %v128
    %v195 = vunpack.c.l.b16 %v129
    %v196 = vunpack.c.l.b16 %v130
    %v197 = vunpack.c.l.b16 %v131
    %v198 = vunpack.c.l.b16 %v132
    %v199 = vunpack.c.l.b16 %v133
    %v200 = vunpack.c.l.b16 %v134
    %v201 = vunpack.c.l.b16 %v135
    %v202 = vpack.c.b16 %v175, %v174
    %v203 = vpack.c.b16 %v177, %v176
    %v204 = vpack.c.b16 %v179, %v178
    %v205 = vpack.c.b16 %v181, %v180
    %v206 = vpack.c.b16 %v183, %v182
    %v207 = vpack.c.b16 %v185, %v184
    %v208 = vpack.c.b16 %v187, %v186
    %v209 = vpack.c.b16 %v189, %v188
    %v210 = vpack.c.b16 %v191, %v190
    %v211 = vpack.c.b16 %v193, %v192
    %v212 = vpack.c.b16 %v195, %v194
    %v213 = vpack.c.b16 %v197, %v196
    %v214 = vpack.c.b16 %v199, %v198
    %v215 = vpack.c.b16 %v201, %v200
    %v217 = vunpack.c.l.b16 %v136
    %v218 = vpack.c.b16 %v217, %v217
    %vm219 = vsmask.f32 7424
    %v221 = vshrl.u32 %v202, 16
    %v223 = vshll.u32 %v202, 16
    %v225 = vrot.slane %v223, 1
    %v226 = vor.u32 %v221, %v225
    %v228 = vshll.u32 %v203, 16
    %v230 = vrot.slane %v228, 1
    %v231 = vsel %vm219, %v226, %v230
    %v232 = vshrl.u32 %v203, 16
    %v234 = vor.u32 %v232, %v230
    %v236 = vshll.u32 %v204, 16
    %v238 = vrot.slane %v236, 1
    %v239 = vsel %vm219, %v234, %v238
    %v240 = vshrl.u32 %v204, 16
    %v242 = vor.u32 %v240, %v238
    %v244 = vshll.u32 %v205, 16
    %v246 = vrot.slane %v244, 1
    %v247 = vsel %vm219, %v242, %v246
    %v248 = vshrl.u32 %v205, 16
    %v250 = vor.u32 %v248, %v246
    %v252 = vshll.u32 %v206, 16
    %v254 = vrot.slane %v252, 1
    %v255 = vsel %vm219, %v250, %v254
    %v256 = vshrl.u32 %v206, 16
    %v258 = vor.u32 %v256, %v254
    %v260 = vshll.u32 %v207, 16
    %v262 = vrot.slane %v260, 1
    %v263 = vsel %vm219, %v258, %v262
    %v264 = vshrl.u32 %v207, 16
    %v266 = vor.u32 %v264, %v262
    %v268 = vshll.u32 %v208, 16
    %v270 = vrot.slane %v268, 1
    %v271 = vsel %vm219, %v266, %v270
    %v272 = vshrl.u32 %v208, 16
    %v274 = vor.u32 %v272, %v270
    %v276 = vshll.u32 %v209, 16
    %v278 = vrot.slane %v276, 1
    %v279 = vsel %vm219, %v274, %v278
    %v280 = vshrl.u32 %v209, 16
    %v282 = vor.u32 %v280, %v278
    %v284 = vshll.u32 %v210, 16
    %v286 = vrot.slane %v284, 1
    %v287 = vsel %vm219, %v282, %v286
    %v288 = vshrl.u32 %v210, 16
    %v290 = vor.u32 %v288, %v286
    %v292 = vshll.u32 %v211, 16
    %v294 = vrot.slane %v292, 1
    %v295 = vsel %vm219, %v290, %v294
    %v296 = vshrl.u32 %v211, 16
    %v298 = vor.u32 %v296, %v294
    %v300 = vshll.u32 %v212, 16
    %v302 = vrot.slane %v300, 1
    %v303 = vsel %vm219, %v298, %v302
    %v304 = vshrl.u32 %v212, 16
    %v306 = vor.u32 %v304, %v302
    %v308 = vshll.u32 %v213, 16
    %v310 = vrot.slane %v308, 1
    %v311 = vsel %vm219, %v306, %v310
    %v312 = vshrl.u32 %v213, 16
    %v314 = vor.u32 %v312, %v310
    %v316 = vshll.u32 %v214, 16
    %v318 = vrot.slane %v316, 1
    %v319 = vsel %vm219, %v314, %v318
    %v320 = vshrl.u32 %v214, 16
    %v322 = vor.u32 %v320, %v318
    %v324 = vshll.u32 %v215, 16
    %v326 = vrot.slane %v324, 1
    %v327 = vsel %vm219, %v322, %v326
    %v328 = vshrl.u32 %v215, 16
    %v330 = vor.u32 %v328, %v326
    %v332 = vshll.u32 %v218, 16
    %v334 = vrot.slane %v332, 1
    %v335 = vsel %vm219, %v330, %v334
    %336 = vrot.lane.b32.xlu0 %v231, 8
    %v337 = vpop.permute.xlu0 %336
    %338 = vrot.lane.b32.xlu0 %v239, 8
    %v339 = vpop.permute.xlu0 %338
    %340 = vrot.lane.b32.xlu0 %v247, 8
    %v341 = vpop.permute.xlu0 %340
    %342 = vrot.lane.b32.xlu0 %v255, 8
    %v343 = vpop.permute.xlu0 %342
    %344 = vrot.lane.b32.xlu0 %v263, 8
    %v345 = vpop.permute.xlu0 %344
    %346 = vrot.lane.b32.xlu0 %v271, 8
    %v347 = vpop.permute.xlu0 %346
    %348 = vrot.lane.b32.xlu0 %v279, 8
    %v349 = vpop.permute.xlu0 %348
    %350 = vrot.lane.b32.xlu0 %v287, 8
    %v351 = vpop.permute.xlu0 %350
    %352 = vrot.lane.b32.xlu0 %v295, 8
    %v353 = vpop.permute.xlu0 %352
    %354 = vrot.lane.b32.xlu0 %v303, 8
    %v355 = vpop.permute.xlu0 %354
    %356 = vrot.lane.b32.xlu0 %v311, 8
    %v357 = vpop.permute.xlu0 %356
    %358 = vrot.lane.b32.xlu0 %v319, 8
    %v359 = vpop.permute.xlu0 %358
    %360 = vrot.lane.b32.xlu0 %v327, 8
    %v361 = vpop.permute.xlu0 %360
    %362 = vrot.lane.b32.xlu0 %v335, 8
    %v363 = vpop.permute.xlu0 %362
    %v365 = vunpack.c.l.b16 %v137
    %v366 = vpack.c.b16 %v175, %v365
    %vm367 = vcmask 1046528
    %v368 = vrot.slane %v366, 1
    %v369 = vrot.slane %v203, 1
    %v370 = vsel %vm367, %v368, %v369
    %v371 = vrot.slane %v204, 1
    %v372 = vsel %vm367, %v369, %v371
    %v373 = vrot.slane %v205, 1
    %v374 = vsel %vm367, %v371, %v373
    %v375 = vrot.slane %v206, 1
    %v376 = vsel %vm367, %v373, %v375
    %v377 = vrot.slane %v207, 1
    %v378 = vsel %vm367, %v375, %v377
    %v379 = vrot.slane %v208, 1
    %v380 = vsel %vm367, %v377, %v379
    %v381 = vrot.slane %v209, 1
    %v382 = vsel %vm367, %v379, %v381
    %v383 = vrot.slane %v210, 1
    %v384 = vsel %vm367, %v381, %v383
    %v385 = vrot.slane %v211, 1
    %v386 = vsel %vm367, %v383, %v385
    %v387 = vrot.slane %v212, 1
    %v388 = vsel %vm367, %v385, %v387
    %v389 = vrot.slane %v213, 1
    %v390 = vsel %vm367, %v387, %v389
    %v391 = vrot.slane %v214, 1
    %v392 = vsel %vm367, %v389, %v391
    %v393 = vrot.slane %v215, 1
    %v394 = vsel %vm367, %v391, %v393
    %v395 = vrot.slane %v218, 1
    %v396 = vsel %vm367, %v393, %v395
    %397 = vrot.lane.b32.xlu0 %v370, 16
    %v398 = vpop.permute.xlu0 %397
    %399 = vrot.lane.b32.xlu0 %v372, 16
    %v400 = vpop.permute.xlu0 %399
    %401 = vrot.lane.b32.xlu0 %v374, 16
    %v402 = vpop.permute.xlu0 %401
    %403 = vrot.lane.b32.xlu0 %v376, 16
    %v404 = vpop.permute.xlu0 %403
    %405 = vrot.lane.b32.xlu0 %v378, 16
    %v406 = vpop.permute.xlu0 %405
    %407 = vrot.lane.b32.xlu0 %v380, 16
    %v408 = vpop.permute.xlu0 %407
    %409 = vrot.lane.b32.xlu0 %v382, 16
    %v410 = vpop.permute.xlu0 %409
    %411 = vrot.lane.b32.xlu0 %v384, 16
    %v412 = vpop.permute.xlu0 %411
    %413 = vrot.lane.b32.xlu0 %v386, 16
    %v414 = vpop.permute.xlu0 %413
    %415 = vrot.lane.b32.xlu0 %v388, 16
    %v416 = vpop.permute.xlu0 %415
    %417 = vrot.lane.b32.xlu0 %v390, 16
    %v418 = vpop.permute.xlu0 %417
    %419 = vrot.lane.b32.xlu0 %v392, 16
    %v420 = vpop.permute.xlu0 %419
    %421 = vrot.lane.b32.xlu0 %v394, 16
    %v422 = vpop.permute.xlu0 %421
    %423 = vrot.lane.b32.xlu0 %v396, 16
    %v424 = vpop.permute.xlu0 %423
    %v427 = vunpack.c.l.b16 %v138
    %v428 = vunpack.c.l.b16 %v139
    %v429 = vpack.c.b16 %v428, %v427
    %430 = vrot.lane.b32.xlu0 %v203, 24
    %v431 = vpop.permute.xlu0 %430
    %432 = vrot.lane.b32.xlu0 %v204, 24
    %v433 = vpop.permute.xlu0 %432
    %434 = vrot.lane.b32.xlu0 %v205, 24
    %v435 = vpop.permute.xlu0 %434
    %436 = vrot.lane.b32.xlu0 %v206, 24
    %v437 = vpop.permute.xlu0 %436
    %438 = vrot.lane.b32.xlu0 %v207, 24
    %v439 = vpop.permute.xlu0 %438
    %440 = vrot.lane.b32.xlu0 %v208, 24
    %v441 = vpop.permute.xlu0 %440
    %442 = vrot.lane.b32.xlu0 %v209, 24
    %v443 = vpop.permute.xlu0 %442
    %444 = vrot.lane.b32.xlu0 %v210, 24
    %v445 = vpop.permute.xlu0 %444
    %446 = vrot.lane.b32.xlu0 %v211, 24
    %v447 = vpop.permute.xlu0 %446
    %448 = vrot.lane.b32.xlu0 %v212, 24
    %v449 = vpop.permute.xlu0 %448
    %450 = vrot.lane.b32.xlu0 %v213, 24
    %v451 = vpop.permute.xlu0 %450
    %452 = vrot.lane.b32.xlu0 %v214, 24
    %v453 = vpop.permute.xlu0 %452
    %454 = vrot.lane.b32.xlu0 %v215, 24
    %v455 = vpop.permute.xlu0 %454
    %456 = vrot.lane.b32.xlu0 %v429, 24
    %v457 = vpop.permute.xlu0 %456
    %v459 = vunpack.c.l.b16 %v140
    %v460 = vpack.c.b16 %v459, %v459
    %v462 = vshll.u32 %v429, 16
    %v464 = vrot.slane %v462, 1
    %v465 = vsel %vm219, %v330, %v464
    %v466 = vshrl.u32 %v429, 16
    %v468 = vor.u32 %v466, %v464
    %v470 = vshll.u32 %v460, 16
    %v472 = vrot.slane %v470, 1
    %v473 = vsel %vm219, %v468, %v472
    %474 = vrot.lane.b32.xlu0 %v239, 32
    %v475 = vpop.permute.xlu0 %474
    %476 = vrot.lane.b32.xlu0 %v247, 32
    %v477 = vpop.permute.xlu0 %476
    %478 = vrot.lane.b32.xlu0 %v255, 32
    %v479 = vpop.permute.xlu0 %478
    %480 = vrot.lane.b32.xlu0 %v263, 32
    %v481 = vpop.permute.xlu0 %480
    %482 = vrot.lane.b32.xlu0 %v271, 32
    %v483 = vpop.permute.xlu0 %482
    %484 = vrot.lane.b32.xlu0 %v279, 32
    %v485 = vpop.permute.xlu0 %484
    %486 = vrot.lane.b32.xlu0 %v287, 32
    %v487 = vpop.permute.xlu0 %486
    %488 = vrot.lane.b32.xlu0 %v295, 32
    %v489 = vpop.permute.xlu0 %488
    %490 = vrot.lane.b32.xlu0 %v303, 32
    %v491 = vpop.permute.xlu0 %490
    %492 = vrot.lane.b32.xlu0 %v311, 32
    %v493 = vpop.permute.xlu0 %492
    %494 = vrot.lane.b32.xlu0 %v319, 32
    %v495 = vpop.permute.xlu0 %494
    %496 = vrot.lane.b32.xlu0 %v327, 32
    %v497 = vpop.permute.xlu0 %496
    %498 = vrot.lane.b32.xlu0 %v465, 32
    %v499 = vpop.permute.xlu0 %498
    %500 = vrot.lane.b32.xlu0 %v473, 32
    %v501 = vpop.permute.xlu0 %500
    %v503 = vunpack.c.l.b16 %v141
    %v504 = vpack.c.b16 %v177, %v503
    %v505 = vrot.slane %v504, 1
    %v506 = vsel %vm367, %v505, %v371
    %v507 = vrot.slane %v429, 1
    %v508 = vsel %vm367, %v393, %v507
    %v509 = vrot.slane %v460, 1
    %v510 = vsel %vm367, %v507, %v509
    %511 = vrot.lane.b32.xlu0 %v506, 40
    %v512 = vpop.permute.xlu0 %511
    %513 = vrot.lane.b32.xlu0 %v374, 40
    %v514 = vpop.permute.xlu0 %513
    %515 = vrot.lane.b32.xlu0 %v376, 40
    %v516 = vpop.permute.xlu0 %515
    %517 = vrot.lane.b32.xlu0 %v378, 40
    %v518 = vpop.permute.xlu0 %517
    %519 = vrot.lane.b32.xlu0 %v380, 40
    %v520 = vpop.permute.xlu0 %519
    %521 = vrot.lane.b32.xlu0 %v382, 40
    %v522 = vpop.permute.xlu0 %521
    %523 = vrot.lane.b32.xlu0 %v384, 40
    %v524 = vpop.permute.xlu0 %523
    %525 = vrot.lane.b32.xlu0 %v386, 40
    %v526 = vpop.permute.xlu0 %525
    %527 = vrot.lane.b32.xlu0 %v388, 40
    %v528 = vpop.permute.xlu0 %527
    %529 = vrot.lane.b32.xlu0 %v390, 40
    %v530 = vpop.permute.xlu0 %529
    %531 = vrot.lane.b32.xlu0 %v392, 40
    %v532 = vpop.permute.xlu0 %531
    %533 = vrot.lane.b32.xlu0 %v394, 40
    %v534 = vpop.permute.xlu0 %533
    %535 = vrot.lane.b32.xlu0 %v508, 40
    %v536 = vpop.permute.xlu0 %535
    %537 = vrot.lane.b32.xlu0 %v510, 40
    %v538 = vpop.permute.xlu0 %537
    %v541 = vunpack.c.l.b16 %v142
    %v542 = vunpack.c.l.b16 %v143
    %v543 = vpack.c.b16 %v542, %v541
    %544 = vrot.lane.b32.xlu0 %v204, 48
    %v545 = vpop.permute.xlu0 %544
    %546 = vrot.lane.b32.xlu0 %v205, 48
    %v547 = vpop.permute.xlu0 %546
    %548 = vrot.lane.b32.xlu0 %v206, 48
    %v549 = vpop.permute.xlu0 %548
    %550 = vrot.lane.b32.xlu0 %v207, 48
    %v551 = vpop.permute.xlu0 %550
    %552 = vrot.lane.b32.xlu0 %v208, 48
    %v553 = vpop.permute.xlu0 %552
    %554 = vrot.lane.b32.xlu0 %v209, 48
    %v555 = vpop.permute.xlu0 %554
    %556 = vrot.lane.b32.xlu0 %v210, 48
    %v557 = vpop.permute.xlu0 %556
    %558 = vrot.lane.b32.xlu0 %v211, 48
    %v559 = vpop.permute.xlu0 %558
    %560 = vrot.lane.b32.xlu0 %v212, 48
    %v561 = vpop.permute.xlu0 %560
    %562 = vrot.lane.b32.xlu0 %v213, 48
    %v563 = vpop.permute.xlu0 %562
    %564 = vrot.lane.b32.xlu0 %v214, 48
    %v565 = vpop.permute.xlu0 %564
    %566 = vrot.lane.b32.xlu0 %v215, 48
    %v567 = vpop.permute.xlu0 %566
    %568 = vrot.lane.b32.xlu0 %v429, 48
    %v569 = vpop.permute.xlu0 %568
    %570 = vrot.lane.b32.xlu0 %v543, 48
    %v571 = vpop.permute.xlu0 %570
    %v573 = vunpack.c.l.b16 %v144
    %v574 = vpack.c.b16 %v573, %v573
    %v576 = vshll.u32 %v543, 16
    %v578 = vrot.slane %v576, 1
    %v579 = vsel %vm219, %v468, %v578
    %v580 = vshrl.u32 %v543, 16
    %v582 = vor.u32 %v580, %v578
    %v584 = vshll.u32 %v574, 16
    %v586 = vrot.slane %v584, 1
    %v587 = vsel %vm219, %v582, %v586
    %588 = vrot.lane.b32.xlu0 %v247, 56
    %v589 = vpop.permute.xlu0 %588
    %590 = vrot.lane.b32.xlu0 %v255, 56
    %v591 = vpop.permute.xlu0 %590
    %592 = vrot.lane.b32.xlu0 %v263, 56
    %v593 = vpop.permute.xlu0 %592
    %594 = vrot.lane.b32.xlu0 %v271, 56
    %v595 = vpop.permute.xlu0 %594
    %596 = vrot.lane.b32.xlu0 %v279, 56
    %v597 = vpop.permute.xlu0 %596
    %598 = vrot.lane.b32.xlu0 %v287, 56
    %v599 = vpop.permute.xlu0 %598
    %600 = vrot.lane.b32.xlu0 %v295, 56
    %v601 = vpop.permute.xlu0 %600
    %602 = vrot.lane.b32.xlu0 %v303, 56
    %v603 = vpop.permute.xlu0 %602
    %604 = vrot.lane.b32.xlu0 %v311, 56
    %v605 = vpop.permute.xlu0 %604
    %606 = vrot.lane.b32.xlu0 %v319, 56
    %v607 = vpop.permute.xlu0 %606
    %608 = vrot.lane.b32.xlu0 %v327, 56
    %v609 = vpop.permute.xlu0 %608
    %610 = vrot.lane.b32.xlu0 %v465, 56
    %v611 = vpop.permute.xlu0 %610
    %612 = vrot.lane.b32.xlu0 %v579, 56
    %v613 = vpop.permute.xlu0 %612
    %614 = vrot.lane.b32.xlu0 %v587, 56
    %v615 = vpop.permute.xlu0 %614
    %v617 = vunpack.c.l.b16 %v145
    %v618 = vpack.c.b16 %v179, %v617
    %v619 = vrot.slane %v618, 1
    %v620 = vsel %vm367, %v619, %v373
    %v621 = vrot.slane %v543, 1
    %v622 = vsel %vm367, %v507, %v621
    %v623 = vrot.slane %v574, 1
    %v624 = vsel %vm367, %v621, %v623
    %625 = vrot.lane.b32.xlu0 %v620, 64
    %v626 = vpop.permute.xlu0 %625
    %627 = vrot.lane.b32.xlu0 %v376, 64
    %v628 = vpop.permute.xlu0 %627
    %629 = vrot.lane.b32.xlu0 %v378, 64
    %v630 = vpop.permute.xlu0 %629
    %631 = vrot.lane.b32.xlu0 %v380, 64
    %v632 = vpop.permute.xlu0 %631
    %633 = vrot.lane.b32.xlu0 %v382, 64
    %v634 = vpop.permute.xlu0 %633
    %635 = vrot.lane.b32.xlu0 %v384, 64
    %v636 = vpop.permute.xlu0 %635
    %637 = vrot.lane.b32.xlu0 %v386, 64
    %v638 = vpop.permute.xlu0 %637
    %639 = vrot.lane.b32.xlu0 %v388, 64
    %v640 = vpop.permute.xlu0 %639
    %641 = vrot.lane.b32.xlu0 %v390, 64
    %v642 = vpop.permute.xlu0 %641
    %643 = vrot.lane.b32.xlu0 %v392, 64
    %v644 = vpop.permute.xlu0 %643
    %645 = vrot.lane.b32.xlu0 %v394, 64
    %v646 = vpop.permute.xlu0 %645
    %647 = vrot.lane.b32.xlu0 %v508, 64
    %v648 = vpop.permute.xlu0 %647
    %649 = vrot.lane.b32.xlu0 %v622, 64
    %v650 = vpop.permute.xlu0 %649
    %651 = vrot.lane.b32.xlu0 %v624, 64
    %v652 = vpop.permute.xlu0 %651
    %vm653 = vcmask 64512
    %v655 = vsel %vm653, %v202, %v337
    %v657 = vsel %vm653, %v203, %v339
    %v659 = vsel %vm653, %v204, %v341
    %v661 = vsel %vm653, %v205, %v343
    %v663 = vsel %vm653, %v206, %v345
    %v665 = vsel %vm653, %v207, %v347
    %v667 = vsel %vm653, %v208, %v349
    %v669 = vsel %vm653, %v209, %v351
    %v671 = vsel %vm653, %v210, %v353
    %v673 = vsel %vm653, %v211, %v355
    %v675 = vsel %vm653, %v212, %v357
    %v677 = vsel %vm653, %v213, %v359
    %v679 = vsel %vm653, %v214, %v361
    %v681 = vsel %vm653, %v215, %v363
    %vm682 = vcmask 130048
    %v684 = vsel %vm682, %v655, %v398
    %v686 = vsel %vm682, %v657, %v400
    %v688 = vsel %vm682, %v659, %v402
    %v690 = vsel %vm682, %v661, %v404
    %v692 = vsel %vm682, %v663, %v406
    %v694 = vsel %vm682, %v665, %v408
    %v696 = vsel %vm682, %v667, %v410
    %v698 = vsel %vm682, %v669, %v412
    %v700 = vsel %vm682, %v671, %v414
    %v702 = vsel %vm682, %v673, %v416
    %v704 = vsel %vm682, %v675, %v418
    %v706 = vsel %vm682, %v677, %v420
    %v708 = vsel %vm682, %v679, %v422
    %v710 = vsel %vm682, %v681, %v424
    %vm711 = vcmask 195584
    %v713 = vsel %vm711, %v684, %v431
    %v715 = vsel %vm711, %v686, %v433
    %v717 = vsel %vm711, %v688, %v435
    %v719 = vsel %vm711, %v690, %v437
    %v721 = vsel %vm711, %v692, %v439
    %v723 = vsel %vm711, %v694, %v441
    %v725 = vsel %vm711, %v696, %v443
    %v727 = vsel %vm711, %v698, %v445
    %v729 = vsel %vm711, %v700, %v447
    %v731 = vsel %vm711, %v702, %v449
    %v733 = vsel %vm711, %v704, %v451
    %v735 = vsel %vm711, %v706, %v453
    %v737 = vsel %vm711, %v708, %v455
    %v739 = vsel %vm711, %v710, %v457
    %vm740 = vcmask 261120
    %v742 = vsel %vm740, %v713, %v475
    %v744 = vsel %vm740, %v715, %v477
    %v746 = vsel %vm740, %v717, %v479
    %v748 = vsel %vm740, %v719, %v481
    %v750 = vsel %vm740, %v721, %v483
    %v752 = vsel %vm740, %v723, %v485
    %v754 = vsel %vm740, %v725, %v487
    %v756 = vsel %vm740, %v727, %v489
    %v758 = vsel %vm740, %v729, %v491
    %v760 = vsel %vm740, %v731, %v493
    %v762 = vsel %vm740, %v733, %v495
    %v764 = vsel %vm740, %v735, %v497
    %v766 = vsel %vm740, %v737, %v499
    %v768 = vsel %vm740, %v739, %v501
    %vm769 = vcmask 326656
    %v771 = vsel %vm769, %v742, %v512
    %v773 = vsel %vm769, %v744, %v514
    %v775 = vsel %vm769, %v746, %v516
    %v777 = vsel %vm769, %v748, %v518
    %v779 = vsel %vm769, %v750, %v520
    %v781 = vsel %vm769, %v752, %v522
    %v783 = vsel %vm769, %v754, %v524
    %v785 = vsel %vm769, %v756, %v526
    %v787 = vsel %vm769, %v758, %v528
    %v789 = vsel %vm769, %v760, %v530
    %v791 = vsel %vm769, %v762, %v532
    %v793 = vsel %vm769, %v764, %v534
    %v795 = vsel %vm769, %v766, %v536
    %v797 = vsel %vm769, %v768, %v538
    %vm798 = vcmask 392192
    %v800 = vsel %vm798, %v771, %v545
    %v802 = vsel %vm798, %v773, %v547
    %v804 = vsel %vm798, %v775, %v549
    %v806 = vsel %vm798, %v777, %v551
    %v808 = vsel %vm798, %v779, %v553
    %v810 = vsel %vm798, %v781, %v555
    %v812 = vsel %vm798, %v783, %v557
    %v814 = vsel %vm798, %v785, %v559
    %v816 = vsel %vm798, %v787, %v561
    %v818 = vsel %vm798, %v789, %v563
    %v820 = vsel %vm798, %v791, %v565
    %v822 = vsel %vm798, %v793, %v567
    %v824 = vsel %vm798, %v795, %v569
    %v826 = vsel %vm798, %v797, %v571
    %vm827 = vcmask 457728
    %v829 = vsel %vm827, %v800, %v589
    %v831 = vsel %vm827, %v802, %v591
    %v833 = vsel %vm827, %v804, %v593
    %v835 = vsel %vm827, %v806, %v595
    %v837 = vsel %vm827, %v808, %v597
    %v839 = vsel %vm827, %v810, %v599
    %v841 = vsel %vm827, %v812, %v601
    %v843 = vsel %vm827, %v814, %v603
    %v845 = vsel %vm827, %v816, %v605
    %v847 = vsel %vm827, %v818, %v607
    %v849 = vsel %vm827, %v820, %v609
    %v851 = vsel %vm827, %v822, %v611
    %v853 = vsel %vm827, %v824, %v613
    %v855 = vsel %vm827, %v826, %v615
    %vm856 = vcmask 523264
    %v858 = vsel %vm856, %v829, %v626
    %v860 = vsel %vm856, %v831, %v628
    %v862 = vsel %vm856, %v833, %v630
    %v864 = vsel %vm856, %v835, %v632
    %v866 = vsel %vm856, %v837, %v634
    %v868 = vsel %vm856, %v839, %v636
    %v870 = vsel %vm856, %v841, %v638
    %v872 = vsel %vm856, %v843, %v640
    %v874 = vsel %vm856, %v845, %v642
    %v876 = vsel %vm856, %v847, %v644
    %v878 = vsel %vm856, %v849, %v646
    %v880 = vsel %vm856, %v851, %v648
    %v882 = vsel %vm856, %v853, %v650
    %v884 = vsel %vm856, %v855, %v652
    %v894 = vunpack.c.l.b16 %v71
    %v895 = vunpack.c.l.b16 %v72
    %v896 = vunpack.c.l.b16 %v73
    %v897 = vunpack.c.l.b16 %v74
    %v898 = vunpack.c.l.b16 %v75
    %v899 = vunpack.c.l.b16 %v76
    %v900 = vunpack.c.l.b16 %v77
    %v901 = vunpack.c.l.b16 %v78
    %v902 = vunpack.c.l.b16 %v79
    %v903 = vpack.c.b16 %v895, %v894
    %v904 = vpack.c.b16 %v897, %v896
    %v905 = vpack.c.b16 %v899, %v898
    %v906 = vpack.c.b16 %v901, %v900
    %v907 = vpack.c.b16 %v902, %v902
    %vm912 = vcmask 588800
    %v913 = vsel %vm912, %v858, 0
    %v915 = vsel %vm912, %v860, 0
    %v917 = vsel %vm912, %v862, 0
    %v919 = vsel %vm912, %v864, 0
    %v921 = vsel %vm912, %v866, 0
    %v923 = vsel %vm912, %v868, 0
    %v925 = vsel %vm912, %v870, 0
    %v927 = vsel %vm912, %v872, 0
    %v929 = vsel %vm912, %v874, 0
    %v931 = vsel %vm912, %v876, 0
    %v933 = vsel %vm912, %v878, 0
    %v935 = vsel %vm912, %v880, 0
    %v937 = vsel %vm912, %v882, 0
    %v939 = vsel %vm912, %v884, 0
    %vm941 = vcmask 1043456
    %v943 = vsel %vm941, %v907, 0
    %945 = vmatprep.subr.bf16.mxu0 0
    %946 = vmatpush1.bf16.msra.mxu0 %v903
    %947 = vmatprep.subr.bf16.mxu0 0
    %948 = vmatpush1.bf16.msra.mxu0 %v904
    %949 = vmatprep.subr.bf16.mxu0 0
    %950 = vmatpush1.bf16.msra.mxu0 %v905
    %951 = vmatprep.subr.bf16.mxu0 0
    %952 = vmatpush1.bf16.msra.mxu0 %v906
    %953 = vmatprep.subr.bf16.mxu0 0
    %954 = vmatpush1.bf16.msra.mxu0 %v943
    %955 = vmatprep.subr.bf16.mxu0 0
    %956 = vmatpush1.bf16.msra.mxu0 0
    %957 = vmatprep.subr.bf16.mxu0 0
    %958 = vmatpush1.bf16.msra.mxu0 0
    %959 = vmatprep.subr.bf16.mxu0 0
    %960 = vmatpush1.bf16.msra.mxu0 0
    %961 = vmatprep.subr.bf16.mxu0 0
    %962 = vmatpush1.bf16.msra.mxu0 0
    %963 = vmatprep.subr.bf16.mxu0 0
    %964 = vmatpush1.bf16.msra.mxu0 0
    %965 = vmatprep.subr.bf16.mxu0 0
    %966 = vmatpush1.bf16.msra.mxu0 0
    %967 = vmatprep.subr.bf16.mxu0 0
    %968 = vmatpush1.bf16.msra.mxu0 0
    %969 = vmatprep.subr.bf16.mxu0 0
    %970 = vmatpush1.bf16.msra.mxu0 0
    %971 = vmatprep.subr.bf16.mxu0 0
    %972 = vmatpush1.bf16.msra.mxu0 0
    %973 = vmatprep.subr.bf16.mxu0 0
    %974 = vmatpush1.bf16.msra.mxu0 0
    %975 = vmatprep.subr.bf16.mxu0 0
    %976 = vmatpush1.bf16.msra.mxu0 0
    %977 = vmatprep.mubr.bf16.mxu0 0
    %978 = vmatmul.mubr.bf16.gmra.mrb[0].mxu0 %v913
    %v979 = vpop.f32.mrb[0].mxu0
    %v980 = vadd.f32 0.0, %v979
    %v981 = vpop.f32.mrb[0].mxu0
    %v982 = vpop.f32.mrb[0].mxu0
    %v983 = vadd.f32 0.0, %v982
    %v984 = vpop.f32.mrb[0].mxu0
    %985 = vmatprep.mubr.bf16.mxu0 0
    %986 = vmatmul.mubr.bf16.gmra.mrb[0].mxu0 %v915
    %v987 = vpop.f32.mrb[0].mxu0
    %v988 = vadd.f32 0.0, %v987
    %v989 = vpop.f32.mrb[0].mxu0
    %v990 = vpop.f32.mrb[0].mxu0
    %v991 = vadd.f32 0.0, %v990
    %v992 = vpop.f32.mrb[0].mxu0
    %993 = vmatprep.mubr.bf16.mxu0 0
    %994 = vmatmul.mubr.bf16.gmra.mrb[0].mxu0 %v917
    %v995 = vpop.f32.mrb[0].mxu0
    %v996 = vadd.f32 0.0, %v995
    %v997 = vpop.f32.mrb[0].mxu0
    %v998 = vpop.f32.mrb[0].mxu0
    %v999 = vadd.f32 0.0, %v998
    %v1000 = vpop.f32.mrb[0].mxu0
    %1001 = vmatprep.mubr.bf16.mxu0 0
    %1002 = vmatmul.mubr.bf16.gmra.mrb[0].mxu0 %v919
    %v1003 = vpop.f32.mrb[0].mxu0
    %v1004 = vadd.f32 0.0, %v1003
    %v1005 = vpop.f32.mrb[0].mxu0
    %v1006 = vpop.f32.mrb[0].mxu0
    %v1007 = vadd.f32 0.0, %v1006
    %v1008 = vpop.f32.mrb[0].mxu0
    %1009 = vmatprep.mubr.bf16.mxu0 0
    %1010 = vmatmul.mubr.bf16.gmra.mrb[0].mxu0 %v921
    %v1011 = vpop.f32.mrb[0].mxu0
    %v1012 = vadd.f32 0.0, %v1011
    %v1013 = vpop.f32.mrb[0].mxu0
    %v1014 = vpop.f32.mrb[0].mxu0
    %v1015 = vadd.f32 0.0, %v1014
    %v1016 = vpop.f32.mrb[0].mxu0
    %1017 = vmatprep.mubr.bf16.mxu0 0
    %1018 = vmatmul.mubr.bf16.gmra.mrb[0].mxu0 %v923
    %v1019 = vpop.f32.mrb[0].mxu0
    %v1020 = vadd.f32 0.0, %v1019
    %v1021 = vpop.f32.mrb[0].mxu0
    %v1022 = vpop.f32.mrb[0].mxu0
    %v1023 = vadd.f32 0.0, %v1022
    %v1024 = vpop.f32.mrb[0].mxu0
    %1025 = vmatprep.mubr.bf16.mxu0 0
    %1026 = vmatmul.mubr.bf16.gmra.mrb[0].mxu0 %v925
    %v1027 = vpop.f32.mrb[0].mxu0
    %v1028 = vadd.f32 0.0, %v1027
    %v1029 = vpop.f32.mrb[0].mxu0
    %v1030 = vpop.f32.mrb[0].mxu0
    %v1031 = vadd.f32 0.0, %v1030
    %v1032 = vpop.f32.mrb[0].mxu0
    %1033 = vmatprep.mubr.bf16.mxu0 0
    %1034 = vmatmul.mubr.bf16.gmra.mrb[0].mxu0 %v927
    %v1035 = vpop.f32.mrb[0].mxu0
    %v1036 = vadd.f32 0.0, %v1035
    %v1037 = vpop.f32.mrb[0].mxu0
    %v1038 = vpop.f32.mrb[0].mxu0
    %v1039 = vadd.f32 0.0, %v1038
    %v1040 = vpop.f32.mrb[0].mxu0
    %1041 = vmatprep.mubr.bf16.mxu0 0
    %1042 = vmatmul.mubr.bf16.gmra.mrb[0].mxu0 %v929
    %v1043 = vpop.f32.mrb[0].mxu0
    %v1044 = vadd.f32 0.0, %v1043
    %v1045 = vpop.f32.mrb[0].mxu0
    %v1046 = vpop.f32.mrb[0].mxu0
    %v1047 = vadd.f32 0.0, %v1046
    %v1048 = vpop.f32.mrb[0].mxu0
    %1049 = vmatprep.mubr.bf16.mxu0 0
    %1050 = vmatmul.mubr.bf16.gmra.mrb[0].mxu0 %v931
    %v1051 = vpop.f32.mrb[0].mxu0
    %v1052 = vadd.f32 0.0, %v1051
    %v1053 = vpop.f32.mrb[0].mxu0
    %v1054 = vpop.f32.mrb[0].mxu0
    %v1055 = vadd.f32 0.0, %v1054
    %v1056 = vpop.f32.mrb[0].mxu0
    %1057 = vmatprep.mubr.bf16.mxu0 0
    %1058 = vmatmul.mubr.bf16.gmra.mrb[0].mxu0 %v933
    %v1059 = vpop.f32.mrb[0].mxu0
    %v1060 = vadd.f32 0.0, %v1059
    %v1061 = vpop.f32.mrb[0].mxu0
    %v1062 = vpop.f32.mrb[0].mxu0
    %v1063 = vadd.f32 0.0, %v1062
    %v1064 = vpop.f32.mrb[0].mxu0
    %1065 = vmatprep.mubr.bf16.mxu0 0
    %1066 = vmatmul.mubr.bf16.gmra.mrb[0].mxu0 %v935
    %v1067 = vpop.f32.mrb[0].mxu0
    %v1068 = vadd.f32 0.0, %v1067
    %v1069 = vpop.f32.mrb[0].mxu0
    %v1070 = vpop.f32.mrb[0].mxu0
    %v1071 = vadd.f32 0.0, %v1070
    %v1072 = vpop.f32.mrb[0].mxu0
    %1073 = vmatprep.mubr.bf16.mxu0 0
    %1074 = vmatmul.mubr.bf16.gmra.mrb[0].mxu0 %v937
    %v1075 = vpop.f32.mrb[0].mxu0
    %v1076 = vadd.f32 0.0, %v1075
    %v1077 = vpop.f32.mrb[0].mxu0
    %v1078 = vpop.f32.mrb[0].mxu0
    %v1079 = vadd.f32 0.0, %v1078
    %v1080 = vpop.f32.mrb[0].mxu0
    %1081 = vmatprep.mubr.bf16.mxu0 0
    %1082 = vmatmul.mubr.bf16.gmra.mrb[0].mxu0 %v939
    %v1083 = vpop.f32.mrb[0].mxu0
    %v1084 = vadd.f32 0.0, %v1083
    %v1085 = vpop.f32.mrb[0].mxu0
    %v1086 = vpop.f32.mrb[0].mxu0
    %v1087 = vadd.f32 0.0, %v1086
    %v1088 = vpop.f32.mrb[0].mxu0
    %1089 = vdwg.mxu0
    %1091 = vset.pattern.permute.xlu0 0
    %1092 = vperm.xlu0 %1091, %v80
    %v1093 = vpop.permute.xlu0 %1092
    %1096 = vset.pattern.permute.xlu0 0
    %1097 = vperm.xlu0 %1096, %v81
    %v1098 = vpop.permute.xlu0 %1097
    %1101 = vset.pattern.permute.xlu0 0
    %1102 = vperm.xlu0 %1101, %v82
    %v1103 = vpop.permute.xlu0 %1102
    %1106 = vset.pattern.permute.xlu0 0
    %1107 = vperm.xlu0 %1106, %v83
    %v1108 = vpop.permute.xlu0 %1107
    %1111 = vset.pattern.permute.xlu0 0
    %1112 = vperm.xlu0 %1111, %v84
    %v1113 = vpop.permute.xlu0 %1112
    %1116 = vset.pattern.permute.xlu0 0
    %1117 = vperm.xlu0 %1116, %v85
    %v1118 = vpop.permute.xlu0 %1117
    %1121 = vset.pattern.permute.xlu0 0
    %1122 = vperm.xlu0 %1121, %v86
    %v1123 = vpop.permute.xlu0 %1122
    %1126 = vset.pattern.permute.xlu0 0
    %1127 = vperm.xlu0 %1126, %v87
    %v1128 = vpop.permute.xlu0 %1127
    %1131 = vset.pattern.permute.xlu0 0
    %1132 = vperm.xlu0 %1131, %v88
    %v1133 = vpop.permute.xlu0 %1132
    %1136 = vset.pattern.permute.xlu0 0
    %1137 = vperm.xlu0 %1136, %v89
    %v1138 = vpop.permute.xlu0 %1137
    %1141 = vset.pattern.permute.xlu0 0
    %1142 = vperm.xlu0 %1141, %v90
    %v1143 = vpop.permute.xlu0 %1142
    %1146 = vset.pattern.permute.xlu0 0
    %1147 = vperm.xlu0 %1146, %v91
    %v1148 = vpop.permute.xlu0 %1147
    %1151 = vset.pattern.permute.xlu0 0
    %1152 = vperm.xlu0 %1151, %v92
    %v1153 = vpop.permute.xlu0 %1152
    %1156 = vset.pattern.permute.xlu0 0
    %1157 = vperm.xlu0 %1156, %v93
    %v1158 = vpop.permute.xlu0 %1157
    %1161 = vset.pattern.permute.xlu0 0
    %1162 = vperm.xlu0 %1161, %v94
    %v1163 = vpop.permute.xlu0 %1162
    %1166 = vset.pattern.permute.xlu0 0
    %1167 = vperm.xlu0 %1166, %v95
    %v1168 = vpop.permute.xlu0 %1167
    %1171 = vset.pattern.permute.xlu0 0
    %1172 = vperm.xlu0 %1171, %v96
    %v1173 = vpop.permute.xlu0 %1172
    %1176 = vset.pattern.permute.xlu0 0
    %1177 = vperm.xlu0 %1176, %v97
    %v1178 = vpop.permute.xlu0 %1177
    %1181 = vset.pattern.permute.xlu0 0
    %1182 = vperm.xlu0 %1181, %v98
    %v1183 = vpop.permute.xlu0 %1182
    %1186 = vset.pattern.permute.xlu0 0
    %1187 = vperm.xlu0 %1186, %v99
    %v1188 = vpop.permute.xlu0 %1187
    %1191 = vset.pattern.permute.xlu0 0
    %1192 = vperm.xlu0 %1191, %v100
    %v1193 = vpop.permute.xlu0 %1192
    %1196 = vset.pattern.permute.xlu0 0
    %1197 = vperm.xlu0 %1196, %v101
    %v1198 = vpop.permute.xlu0 %1197
    %1201 = vset.pattern.permute.xlu0 0
    %1202 = vperm.xlu0 %1201, %v102
    %v1203 = vpop.permute.xlu0 %1202
    %1206 = vset.pattern.permute.xlu0 0
    %1207 = vperm.xlu0 %1206, %v103
    %v1208 = vpop.permute.xlu0 %1207
    %1211 = vset.pattern.permute.xlu0 0
    %1212 = vperm.xlu0 %1211, %v104
    %v1213 = vpop.permute.xlu0 %1212
    %1216 = vset.pattern.permute.xlu0 0
    %1217 = vperm.xlu0 %1216, %v105
    %v1218 = vpop.permute.xlu0 %1217
    %1221 = vset.pattern.permute.xlu0 0
    %1222 = vperm.xlu0 %1221, %v106
    %v1223 = vpop.permute.xlu0 %1222
    %1226 = vset.pattern.permute.xlu0 0
    %1227 = vperm.xlu0 %1226, %v107
    %v1228 = vpop.permute.xlu0 %1227
    %v1230 = vmul.f32 %v980, %v1093
    %v1231 = vmul.f32 %v983, %v1098
    %v1232 = vmul.f32 %v988, %v1103
    %v1233 = vmul.f32 %v991, %v1108
    %v1234 = vmul.f32 %v996, %v1113
    %v1235 = vmul.f32 %v999, %v1118
    %v1236 = vmul.f32 %v1004, %v1123
    %v1237 = vmul.f32 %v1007, %v1128
    %v1238 = vmul.f32 %v1012, %v1133
    %v1239 = vmul.f32 %v1015, %v1138
    %v1240 = vmul.f32 %v1020, %v1143
    %v1241 = vmul.f32 %v1023, %v1148
    %v1242 = vmul.f32 %v1028, %v1153
    %v1243 = vmul.f32 %v1031, %v1158
    %v1244 = vmul.f32 %v1036, %v1163
    %v1245 = vmul.f32 %v1039, %v1168
    %v1246 = vmul.f32 %v1044, %v1173
    %v1247 = vmul.f32 %v1047, %v1178
    %v1248 = vmul.f32 %v1052, %v1183
    %v1249 = vmul.f32 %v1055, %v1188
    %v1250 = vmul.f32 %v1060, %v1193
    %v1251 = vmul.f32 %v1063, %v1198
    %v1252 = vmul.f32 %v1068, %v1203
    %v1253 = vmul.f32 %v1071, %v1208
    %v1254 = vmul.f32 %v1076, %v1213
    %v1255 = vmul.f32 %v1079, %v1218
    %v1256 = vmul.f32 %v1084, %v1223
    %v1257 = vmul.f32 %v1087, %v1228
    %v1258 = vadd.f32 %v1230, %v1231
    %v1259 = vadd.f32 %v1258, %v1232
    %v1260 = vadd.f32 %v1259, %v1233
    %v1261 = vadd.f32 %v1260, %v1234
    %v1262 = vadd.f32 %v1261, %v1235
    %v1263 = vadd.f32 %v1262, %v1236
    %v1264 = vadd.f32 %v1263, %v1237
    %v1265 = vadd.f32 %v1264, %v1238
    %v1266 = vadd.f32 %v1265, %v1239
    %v1267 = vadd.f32 %v1266, %v1240
    %v1268 = vadd.f32 %v1267, %v1241
    %v1269 = vadd.f32 %v1268, %v1242
    %v1270 = vadd.f32 %v1269, %v1243
    %v1271 = vadd.f32 %v1270, %v1244
    %v1272 = vadd.f32 %v1271, %v1245
    %v1273 = vadd.f32 %v1272, %v1246
    %v1274 = vadd.f32 %v1273, %v1247
    %v1275 = vadd.f32 %v1274, %v1248
    %v1276 = vadd.f32 %v1275, %v1249
    %v1277 = vadd.f32 %v1276, %v1250
    %v1278 = vadd.f32 %v1277, %v1251
    %v1279 = vadd.f32 %v1278, %v1252
    %v1280 = vadd.f32 %v1279, %v1253
    %v1281 = vadd.f32 %v1280, %v1254
    %v1282 = vadd.f32 %v1281, %v1255
    %v1283 = vadd.f32 %v1282, %v1256
    %v1284 = vadd.f32 %v1283, %v1257
    %v1285 = vrot.slane %v1284, 4
    %v1286 = vadd.f32 %v1284, %v1285
    %v1287 = vrot.slane %v1286, 2
    %v1288 = vadd.f32 %v1286, %v1287
    %v1289 = vrot.slane %v1288, 1
    %v1290 = vadd.f32 %v1288, %v1289
    %v1291 = vadd.f32 %v1290, 0.0
    %v1292 = vmul.f32 %v1230, %v980
    %v1293 = vmul.f32 %v1231, %v983
    %v1294 = vmul.f32 %v1232, %v988
    %v1295 = vmul.f32 %v1233, %v991
    %v1296 = vmul.f32 %v1234, %v996
    %v1297 = vmul.f32 %v1235, %v999
    %v1298 = vmul.f32 %v1236, %v1004
    %v1299 = vmul.f32 %v1237, %v1007
    %v1300 = vmul.f32 %v1238, %v1012
    %v1301 = vmul.f32 %v1239, %v1015
    %v1302 = vmul.f32 %v1240, %v1020
    %v1303 = vmul.f32 %v1241, %v1023
    %v1304 = vmul.f32 %v1242, %v1028
    %v1305 = vmul.f32 %v1243, %v1031
    %v1306 = vmul.f32 %v1244, %v1036
    %v1307 = vmul.f32 %v1245, %v1039
    %v1308 = vmul.f32 %v1246, %v1044
    %v1309 = vmul.f32 %v1247, %v1047
    %v1310 = vmul.f32 %v1248, %v1052
    %v1311 = vmul.f32 %v1249, %v1055
    %v1312 = vmul.f32 %v1250, %v1060
    %v1313 = vmul.f32 %v1251, %v1063
    %v1314 = vmul.f32 %v1252, %v1068
    %v1315 = vmul.f32 %v1253, %v1071
    %v1316 = vmul.f32 %v1254, %v1076
    %v1317 = vmul.f32 %v1255, %v1079
    %v1318 = vmul.f32 %v1256, %v1084
    %v1319 = vmul.f32 %v1257, %v1087
    %v1320 = vadd.f32 %v1292, %v1293
    %v1321 = vadd.f32 %v1320, %v1294
    %v1322 = vadd.f32 %v1321, %v1295
    %v1323 = vadd.f32 %v1322, %v1296
    %v1324 = vadd.f32 %v1323, %v1297
    %v1325 = vadd.f32 %v1324, %v1298
    %v1326 = vadd.f32 %v1325, %v1299
    %v1327 = vadd.f32 %v1326, %v1300
    %v1328 = vadd.f32 %v1327, %v1301
    %v1329 = vadd.f32 %v1328, %v1302
    %v1330 = vadd.f32 %v1329, %v1303
    %v1331 = vadd.f32 %v1330, %v1304
    %v1332 = vadd.f32 %v1331, %v1305
    %v1333 = vadd.f32 %v1332, %v1306
    %v1334 = vadd.f32 %v1333, %v1307
    %v1335 = vadd.f32 %v1334, %v1308
    %v1336 = vadd.f32 %v1335, %v1309
    %v1337 = vadd.f32 %v1336, %v1310
    %v1338 = vadd.f32 %v1337, %v1311
    %v1339 = vadd.f32 %v1338, %v1312
    %v1340 = vadd.f32 %v1339, %v1313
    %v1341 = vadd.f32 %v1340, %v1314
    %v1342 = vadd.f32 %v1341, %v1315
    %v1343 = vadd.f32 %v1342, %v1316
    %v1344 = vadd.f32 %v1343, %v1317
    %v1345 = vadd.f32 %v1344, %v1318
    %v1346 = vadd.f32 %v1345, %v1319
    %v1347 = vrot.slane %v1346, 4
    %v1348 = vadd.f32 %v1346, %v1347
    %v1349 = vrot.slane %v1348, 2
    %v1350 = vadd.f32 %v1348, %v1349
    %v1351 = vrot.slane %v1350, 1
    %v1352 = vadd.f32 %v1350, %v1351
    %v1353 = vadd.f32 %v1352, 0.0
    %s1354 = scalar_lea.vmem [#allocation2], 136
    %v1355 = vld [vmem:[%s1354] sm:$0xf]
    %v1356 = vld [vmem:[%s1354 + $0x4] sm:$0xf]
    %v1357 = vld [vmem:[%s1354 + $0x8] sm:$0xf]
    %v1358 = vld [vmem:[%s1354 + $0xc] sm:$0xf]
    %v1359 = vld [vmem:[%s1354 + $0x10] sm:$0xf]
    %v1360 = vld [vmem:[%s1354 + $0x14] sm:$0xf]
    %v1361 = vld [vmem:[%s1354 + $0x18] sm:$0xf]
    %v1362 = vld [vmem:[%s1354 + $0x1c] sm:$0xf]
    %v1363 = vld [vmem:[%s1354 + $0x20] sm:$0xf]
    %v1364 = vld [vmem:[%s1354 + $0x24] sm:$0xf]
    %v1365 = vld [vmem:[%s1354 + $0x28] sm:$0xf]
    %v1366 = vld [vmem:[%s1354 + $0x2c] sm:$0xf]
    %v1367 = vld [vmem:[%s1354 + $0x30] sm:$0xf]
    %v1368 = vld [vmem:[%s1354 + $0x34] sm:$0xf]
    %v1369 = vld [vmem:[%s1354 + $0x38] sm:$0xf]
    %v1370 = vld [vmem:[%s1354 + $0x3c] sm:$0xf]
    %v1371 = vld [vmem:[%s1354 + $0x40] sm:$0xf]
    %v1372 = vld [vmem:[%s1354 + $0x44] sm:$0xf]
    %v1373 = vld [vmem:[%s1354 + $0x48] sm:$0xf]
    %v1374 = vld [vmem:[%s1354 + $0x4c] sm:$0xf]
    %v1375 = vld [vmem:[%s1354 + $0x50] sm:$0xf]
    %v1376 = vld [vmem:[%s1354 + $0x54] sm:$0xf]
    %v1377 = vld [vmem:[%s1354 + $0x58] sm:$0xf]
    %v1378 = vld [vmem:[%s1354 + $0x5c] sm:$0xf]
    %v1379 = vld [vmem:[%s1354 + $0x60] sm:$0xf]
    %v1380 = vld [vmem:[%s1354 + $0x64] sm:$0xf]
    %v1381 = vld [vmem:[%s1354 + $0x68] sm:$0xf]
    %v1382 = vld [vmem:[%s1354 + $0x6c] sm:$0xf]
    %v1383 = vld [vmem:[%s1354 + $0x70] sm:$0x1]
    %v1384 = vld [vmem:[%s1354] sm:$0xe]
    %v1385 = vld [vmem:[%s1354 + $0x70] sm:$0xf]
    %v1386 = vld [vmem:[%s1354 + $0x74] sm:$0xf]
    %v1387 = vld [vmem:[%s1354 + $0x78] sm:$0x1]
    %v1388 = vld [vmem:[%s1354 + $0x8] sm:$0xe]
    %v1389 = vld [vmem:[%s1354 + $0x78] sm:$0xf]
    %v1390 = vld [vmem:[%s1354 + $0x7c] sm:$0xf]
    %v1391 = vld [vmem:[%s1354 + $0x80] sm:$0x1]
    %v1392 = vld [vmem:[%s1354 + $0x10] sm:$0xe]
    %v1421 = vunpack.c.l.b16 %v1355
    %v1422 = vunpack.c.l.b16 %v1356
    %v1423 = vunpack.c.l.b16 %v1357
    %v1424 = vunpack.c.l.b16 %v1358
    %v1425 = vunpack.c.l.b16 %v1359
    %v1426 = vunpack.c.l.b16 %v1360
    %v1427 = vunpack.c.l.b16 %v1361
    %v1428 = vunpack.c.l.b16 %v1362
    %v1429 = vunpack.c.l.b16 %v1363
    %v1430 = vunpack.c.l.b16 %v1364
    %v1431 = vunpack.c.l.b16 %v1365
    %v1432 = vunpack.c.l.b16 %v1366
    %v1433 = vunpack.c.l.b16 %v1367
    %v1434 = vunpack.c.l.b16 %v1368
    %v1435 = vunpack.c.l.b16 %v1369
    %v1436 = vunpack.c.l.b16 %v1370
    %v1437 = vunpack.c.l.b16 %v1371
    %v1438 = vunpack.c.l.b16 %v1372
    %v1439 = vunpack.c.l.b16 %v1373
    %v1440 = vunpack.c.l.b16 %v1374
    %v1441 = vunpack.c.l.b16 %v1375
    %v1442 = vunpack.c.l.b16 %v1376
    %v1443 = vunpack.c.l.b16 %v1377
    %v1444 = vunpack.c.l.b16 %v1378
    %v1445 = vunpack.c.l.b16 %v1379
    %v1446 = vunpack.c.l.b16 %v1380
    %v1447 = vunpack.c.l.b16 %v1381
    %v1448 = vunpack.c.l.b16 %v1382
    %v1449 = vpack.c.b16 %v1422, %v1421
    %v1450 = vpack.c.b16 %v1424, %v1423
    %v1451 = vpack.c.b16 %v1426, %v1425
    %v1452 = vpack.c.b16 %v1428, %v1427
    %v1453 = vpack.c.b16 %v1430, %v1429
    %v1454 = vpack.c.b16 %v1432, %v1431
    %v1455 = vpack.c.b16 %v1434, %v1433
    %v1456 = vpack.c.b16 %v1436, %v1435
    %v1457 = vpack.c.b16 %v1438, %v1437
    %v1458 = vpack.c.b16 %v1440, %v1439
    %v1459 = vpack.c.b16 %v1442, %v1441
    %v1460 = vpack.c.b16 %v1444, %v1443
    %v1461 = vpack.c.b16 %v1446, %v1445
    %v1462 = vpack.c.b16 %v1448, %v1447
    %v1464 = vunpack.c.l.b16 %v1383
    %v1465 = vpack.c.b16 %v1464, %v1464
    %v1467 = vshrl.u32 %v1449, 16
    %v1469 = vshll.u32 %v1449, 16
    %v1471 = vrot.slane %v1469, 1
    %v1472 = vor.u32 %v1467, %v1471
    %v1474 = vshll.u32 %v1450, 16
    %v1476 = vrot.slane %v1474, 1
    %v1477 = vsel %vm219, %v1472, %v1476
    %v1478 = vshrl.u32 %v1450, 16
    %v1480 = vor.u32 %v1478, %v1476
    %v1482 = vshll.u32 %v1451, 16
    %v1484 = vrot.slane %v1482, 1
    %v1485 = vsel %vm219, %v1480, %v1484
    %v1486 = vshrl.u32 %v1451, 16
    %v1488 = vor.u32 %v1486, %v1484
    %v1490 = vshll.u32 %v1452, 16
    %v1492 = vrot.slane %v1490, 1
    %v1493 = vsel %vm219, %v1488, %v1492
    %v1494 = vshrl.u32 %v1452, 16
    %v1496 = vor.u32 %v1494, %v1492
    %v1498 = vshll.u32 %v1453, 16
    %v1500 = vrot.slane %v1498, 1
    %v1501 = vsel %vm219, %v1496, %v1500
    %v1502 = vshrl.u32 %v1453, 16
    %v1504 = vor.u32 %v1502, %v1500
    %v1506 = vshll.u32 %v1454, 16
    %v1508 = vrot.slane %v1506, 1
    %v1509 = vsel %vm219, %v1504, %v1508
    %v1510 = vshrl.u32 %v1454, 16
    %v1512 = vor.u32 %v1510, %v1508
    %v1514 = vshll.u32 %v1455, 16
    %v1516 = vrot.slane %v1514, 1
    %v1517 = vsel %vm219, %v1512, %v1516
    %v1518 = vshrl.u32 %v1455, 16
    %v1520 = vor.u32 %v1518, %v1516
    %v1522 = vshll.u32 %v1456, 16
    %v1524 = vrot.slane %v1522, 1
    %v1525 = vsel %vm219, %v1520, %v1524
    %v1526 = vshrl.u32 %v1456, 16
    %v1528 = vor.u32 %v1526, %v1524
    %v1530 = vshll.u32 %v1457, 16
    %v1532 = vrot.slane %v1530, 1
    %v1533 = vsel %vm219, %v1528, %v1532
    %v1534 = vshrl.u32 %v1457, 16
    %v1536 = vor.u32 %v1534, %v1532
    %v1538 = vshll.u32 %v1458, 16
    %v1540 = vrot.slane %v1538, 1
    %v1541 = vsel %vm219, %v1536, %v1540
    %v1542 = vshrl.u32 %v1458, 16
    %v1544 = vor.u32 %v1542, %v1540
    %v1546 = vshll.u32 %v1459, 16
    %v1548 = vrot.slane %v1546, 1
    %v1549 = vsel %vm219, %v1544, %v1548
    %v1550 = vshrl.u32 %v1459, 16
    %v1552 = vor.u32 %v1550, %v1548
    %v1554 = vshll.u32 %v1460, 16
    %v1556 = vrot.slane %v1554, 1
    %v1557 = vsel %vm219, %v1552, %v1556
    %v1558 = vshrl.u32 %v1460, 16
    %v1560 = vor.u32 %v1558, %v1556
    %v1562 = vshll.u32 %v1461, 16
    %v1564 = vrot.slane %v1562, 1
    %v1565 = vsel %vm219, %v1560, %v1564
    %v1566 = vshrl.u32 %v1461, 16
    %v1568 = vor.u32 %v1566, %v1564
    %v1570 = vshll.u32 %v1462, 16
    %v1572 = vrot.slane %v1570, 1
    %v1573 = vsel %vm219, %v1568, %v1572
    %v1574 = vshrl.u32 %v1462, 16
    %v1576 = vor.u32 %v1574, %v1572
    %v1578 = vshll.u32 %v1465, 16
    %v1580 = vrot.slane %v1578, 1
    %v1581 = vsel %vm219, %v1576, %v1580
    %1582 = vrot.lane.b32.xlu0 %v1477, 8
    %v1583 = vpop.permute.xlu0 %1582
    %1584 = vrot.lane.b32.xlu0 %v1485, 8
    %v1585 = vpop.permute.xlu0 %1584
    %1586 = vrot.lane.b32.xlu0 %v1493, 8
    %v1587 = vpop.permute.xlu0 %1586
    %1588 = vrot.lane.b32.xlu0 %v1501, 8
    %v1589 = vpop.permute.xlu0 %1588
    %1590 = vrot.lane.b32.xlu0 %v1509, 8
    %v1591 = vpop.permute.xlu0 %1590
    %1592 = vrot.lane.b32.xlu0 %v1517, 8
    %v1593 = vpop.permute.xlu0 %1592
    %1594 = vrot.lane.b32.xlu0 %v1525, 8
    %v1595 = vpop.permute.xlu0 %1594
    %1596 = vrot.lane.b32.xlu0 %v1533, 8
    %v1597 = vpop.permute.xlu0 %1596
    %1598 = vrot.lane.b32.xlu0 %v1541, 8
    %v1599 = vpop.permute.xlu0 %1598
    %1600 = vrot.lane.b32.xlu0 %v1549, 8
    %v1601 = vpop.permute.xlu0 %1600
    %1602 = vrot.lane.b32.xlu0 %v1557, 8
    %v1603 = vpop.permute.xlu0 %1602
    %1604 = vrot.lane.b32.xlu0 %v1565, 8
    %v1605 = vpop.permute.xlu0 %1604
    %1606 = vrot.lane.b32.xlu0 %v1573, 8
    %v1607 = vpop.permute.xlu0 %1606
    %1608 = vrot.lane.b32.xlu0 %v1581, 8
    %v1609 = vpop.permute.xlu0 %1608
    %v1611 = vunpack.c.l.b16 %v1384
    %v1612 = vpack.c.b16 %v1422, %v1611
    %v1613 = vrot.slane %v1612, 1
    %v1614 = vrot.slane %v1450, 1
    %v1615 = vsel %vm367, %v1613, %v1614
    %v1616 = vrot.slane %v1451, 1
    %v1617 = vsel %vm367, %v1614, %v1616
    %v1618 = vrot.slane %v1452, 1
    %v1619 = vsel %vm367, %v1616, %v1618
    %v1620 = vrot.slane %v1453, 1
    %v1621 = vsel %vm367, %v1618, %v1620
    %v1622 = vrot.slane %v1454, 1
    %v1623 = vsel %vm367, %v1620, %v1622
    %v1624 = vrot.slane %v1455, 1
    %v1625 = vsel %vm367, %v1622, %v1624
    %v1626 = vrot.slane %v1456, 1
    %v1627 = vsel %vm367, %v1624, %v1626
    %v1628 = vrot.slane %v1457, 1
    %v1629 = vsel %vm367, %v1626, %v1628
    %v1630 = vrot.slane %v1458, 1
    %v1631 = vsel %vm367, %v1628, %v1630
    %v1632 = vrot.slane %v1459, 1
    %v1633 = vsel %vm367, %v1630, %v1632
    %v1634 = vrot.slane %v1460, 1
    %v1635 = vsel %vm367, %v1632, %v1634
    %v1636 = vrot.slane %v1461, 1
    %v1637 = vsel %vm367, %v1634, %v1636
    %v1638 = vrot.slane %v1462, 1
    %v1639 = vsel %vm367, %v1636, %v1638
    %v1640 = vrot.slane %v1465, 1
    %v1641 = vsel %vm367, %v1638, %v1640
    %1642 = vrot.lane.b32.xlu0 %v1615, 16
    %v1643 = vpop.permute.xlu0 %1642
    %1644 = vrot.lane.b32.xlu0 %v1617, 16
    %v1645 = vpop.permute.xlu0 %1644
    %1646 = vrot.lane.b32.xlu0 %v1619, 16
    %v1647 = vpop.permute.xlu0 %1646
    %1648 = vrot.lane.b32.xlu0 %v1621, 16
    %v1649 = vpop.permute.xlu0 %1648
    %1650 = vrot.lane.b32.xlu0 %v1623, 16
    %v1651 = vpop.permute.xlu0 %1650
    %1652 = vrot.lane.b32.xlu0 %v1625, 16
    %v1653 = vpop.permute.xlu0 %1652
    %1654 = vrot.lane.b32.xlu0 %v1627, 16
    %v1655 = vpop.permute.xlu0 %1654
    %1656 = vrot.lane.b32.xlu0 %v1629, 16
    %v1657 = vpop.permute.xlu0 %1656
    %1658 = vrot.lane.b32.xlu0 %v1631, 16
    %v1659 = vpop.permute.xlu0 %1658
    %1660 = vrot.lane.b32.xlu0 %v1633, 16
    %v1661 = vpop.permute.xlu0 %1660
    %1662 = vrot.lane.b32.xlu0 %v1635, 16
    %v1663 = vpop.permute.xlu0 %1662
    %1664 = vrot.lane.b32.xlu0 %v1637, 16
    %v1665 = vpop.permute.xlu0 %1664
    %1666 = vrot.lane.b32.xlu0 %v1639, 16
    %v1667 = vpop.permute.xlu0 %1666
    %1668 = vrot.lane.b32.xlu0 %v1641, 16
    %v1669 = vpop.permute.xlu0 %1668
    %v1672 = vunpack.c.l.b16 %v1385
    %v1673 = vunpack.c.l.b16 %v1386
    %v1674 = vpack.c.b16 %v1673, %v1672
    %1675 = vrot.lane.b32.xlu0 %v1450, 24
    %v1676 = vpop.permute.xlu0 %1675
    %1677 = vrot.lane.b32.xlu0 %v1451, 24
    %v1678 = vpop.permute.xlu0 %1677
    %1679 = vrot.lane.b32.xlu0 %v1452, 24
    %v1680 = vpop.permute.xlu0 %1679
    %1681 = vrot.lane.b32.xlu0 %v1453, 24
    %v1682 = vpop.permute.xlu0 %1681
    %1683 = vrot.lane.b32.xlu0 %v1454, 24
    %v1684 = vpop.permute.xlu0 %1683
    %1685 = vrot.lane.b32.xlu0 %v1455, 24
    %v1686 = vpop.permute.xlu0 %1685
    %1687 = vrot.lane.b32.xlu0 %v1456, 24
    %v1688 = vpop.permute.xlu0 %1687
    %1689 = vrot.lane.b32.xlu0 %v1457, 24
    %v1690 = vpop.permute.xlu0 %1689
    %1691 = vrot.lane.b32.xlu0 %v1458, 24
    %v1692 = vpop.permute.xlu0 %1691
    %1693 = vrot.lane.b32.xlu0 %v1459, 24
    %v1694 = vpop.permute.xlu0 %1693
    %1695 = vrot.lane.b32.xlu0 %v1460, 24
    %v1696 = vpop.permute.xlu0 %1695
    %1697 = vrot.lane.b32.xlu0 %v1461, 24
    %v1698 = vpop.permute.xlu0 %1697
    %1699 = vrot.lane.b32.xlu0 %v1462, 24
    %v1700 = vpop.permute.xlu0 %1699
    %1701 = vrot.lane.b32.xlu0 %v1674, 24
    %v1702 = vpop.permute.xlu0 %1701
    %v1704 = vunpack.c.l.b16 %v1387
    %v1705 = vpack.c.b16 %v1704, %v1704
    %v1707 = vshll.u32 %v1674, 16
    %v1709 = vrot.slane %v1707, 1
    %v1710 = vsel %vm219, %v1576, %v1709
    %v1711 = vshrl.u32 %v1674, 16
    %v1713 = vor.u32 %v1711, %v1709
    %v1715 = vshll.u32 %v1705, 16
    %v1717 = vrot.slane %v1715, 1
    %v1718 = vsel %vm219, %v1713, %v1717
    %1719 = vrot.lane.b32.xlu0 %v1485, 32
    %v1720 = vpop.permute.xlu0 %1719
    %1721 = vrot.lane.b32.xlu0 %v1493, 32
    %v1722 = vpop.permute.xlu0 %1721
    %1723 = vrot.lane.b32.xlu0 %v1501, 32
    %v1724 = vpop.permute.xlu0 %1723
    %1725 = vrot.lane.b32.xlu0 %v1509, 32
    %v1726 = vpop.permute.xlu0 %1725
    %1727 = vrot.lane.b32.xlu0 %v1517, 32
    %v1728 = vpop.permute.xlu0 %1727
    %1729 = vrot.lane.b32.xlu0 %v1525, 32
    %v1730 = vpop.permute.xlu0 %1729
    %1731 = vrot.lane.b32.xlu0 %v1533, 32
    %v1732 = vpop.permute.xlu0 %1731
    %1733 = vrot.lane.b32.xlu0 %v1541, 32
    %v1734 = vpop.permute.xlu0 %1733
    %1735 = vrot.lane.b32.xlu0 %v1549, 32
    %v1736 = vpop.permute.xlu0 %1735
    %1737 = vrot.lane.b32.xlu0 %v1557, 32
    %v1738 = vpop.permute.xlu0 %1737
    %1739 = vrot.lane.b32.xlu0 %v1565, 32
    %v1740 = vpop.permute.xlu0 %1739
    %1741 = vrot.lane.b32.xlu0 %v1573, 32
    %v1742 = vpop.permute.xlu0 %1741
    %1743 = vrot.lane.b32.xlu0 %v1710, 32
    %v1744 = vpop.permute.xlu0 %1743
    %1745 = vrot.lane.b32.xlu0 %v1718, 32
    %v1746 = vpop.permute.xlu0 %1745
    %v1748 = vunpack.c.l.b16 %v1388
    %v1749 = vpack.c.b16 %v1424, %v1748
    %v1750 = vrot.slane %v1749, 1
    %v1751 = vsel %vm367, %v1750, %v1616
    %v1752 = vrot.slane %v1674, 1
    %v1753 = vsel %vm367, %v1638, %v1752
    %v1754 = vrot.slane %v1705, 1
    %v1755 = vsel %vm367, %v1752, %v1754
    %1756 = vrot.lane.b32.xlu0 %v1751, 40
    %v1757 = vpop.permute.xlu0 %1756
    %1758 = vrot.lane.b32.xlu0 %v1619, 40
    %v1759 = vpop.permute.xlu0 %1758
    %1760 = vrot.lane.b32.xlu0 %v1621, 40
    %v1761 = vpop.permute.xlu0 %1760
    %1762 = vrot.lane.b32.xlu0 %v1623, 40
    %v1763 = vpop.permute.xlu0 %1762
    %1764 = vrot.lane.b32.xlu0 %v1625, 40
    %v1765 = vpop.permute.xlu0 %1764
    %1766 = vrot.lane.b32.xlu0 %v1627, 40
    %v1767 = vpop.permute.xlu0 %1766
    %1768 = vrot.lane.b32.xlu0 %v1629, 40
    %v1769 = vpop.permute.xlu0 %1768
    %1770 = vrot.lane.b32.xlu0 %v1631, 40
    %v1771 = vpop.permute.xlu0 %1770
    %1772 = vrot.lane.b32.xlu0 %v1633, 40
    %v1773 = vpop.permute.xlu0 %1772
    %1774 = vrot.lane.b32.xlu0 %v1635, 40
    %v1775 = vpop.permute.xlu0 %1774
    %1776 = vrot.lane.b32.xlu0 %v1637, 40
    %v1777 = vpop.permute.xlu0 %1776
    %1778 = vrot.lane.b32.xlu0 %v1639, 40
    %v1779 = vpop.permute.xlu0 %1778
    %1780 = vrot.lane.b32.xlu0 %v1753, 40
    %v1781 = vpop.permute.xlu0 %1780
    %1782 = vrot.lane.b32.xlu0 %v1755, 40
    %v1783 = vpop.permute.xlu0 %1782
    %v1786 = vunpack.c.l.b16 %v1389
    %v1787 = vunpack.c.l.b16 %v1390
    %v1788 = vpack.c.b16 %v1787, %v1786
    %1789 = vrot.lane.b32.xlu0 %v1451, 48
    %v1790 = vpop.permute.xlu0 %1789
    %1791 = vrot.lane.b32.xlu0 %v1452, 48
    %v1792 = vpop.permute.xlu0 %1791
    %1793 = vrot.lane.b32.xlu0 %v1453, 48
    %v1794 = vpop.permute.xlu0 %1793
    %1795 = vrot.lane.b32.xlu0 %v1454, 48
    %v1796 = vpop.permute.xlu0 %1795
    %1797 = vrot.lane.b32.xlu0 %v1455, 48
    %v1798 = vpop.permute.xlu0 %1797
    %1799 = vrot.lane.b32.xlu0 %v1456, 48
    %v1800 = vpop.permute.xlu0 %1799
    %1801 = vrot.lane.b32.xlu0 %v1457, 48
    %v1802 = vpop.permute.xlu0 %1801
    %1803 = vrot.lane.b32.xlu0 %v1458, 48
    %v1804 = vpop.permute.xlu0 %1803
    %1805 = vrot.lane.b32.xlu0 %v1459, 48
    %v1806 = vpop.permute.xlu0 %1805
    %1807 = vrot.lane.b32.xlu0 %v1460, 48
    %v1808 = vpop.permute.xlu0 %1807
    %1809 = vrot.lane.b32.xlu0 %v1461, 48
    %v1810 = vpop.permute.xlu0 %1809
    %1811 = vrot.lane.b32.xlu0 %v1462, 48
    %v1812 = vpop.permute.xlu0 %1811
    %1813 = vrot.lane.b32.xlu0 %v1674, 48
    %v1814 = vpop.permute.xlu0 %1813
    %1815 = vrot.lane.b32.xlu0 %v1788, 48
    %v1816 = vpop.permute.xlu0 %1815
    %v1818 = vunpack.c.l.b16 %v1391
    %v1819 = vpack.c.b16 %v1818, %v1818
    %v1821 = vshll.u32 %v1788, 16
    %v1823 = vrot.slane %v1821, 1
    %v1824 = vsel %vm219, %v1713, %v1823
    %v1825 = vshrl.u32 %v1788, 16
    %v1827 = vor.u32 %v1825, %v1823
    %v1829 = vshll.u32 %v1819, 16
    %v1831 = vrot.slane %v1829, 1
    %v1832 = vsel %vm219, %v1827, %v1831
    %1833 = vrot.lane.b32.xlu0 %v1493, 56
    %v1834 = vpop.permute.xlu0 %1833
    %1835 = vrot.lane.b32.xlu0 %v1501, 56
    %v1836 = vpop.permute.xlu0 %1835
    %1837 = vrot.lane.b32.xlu0 %v1509, 56
    %v1838 = vpop.permute.xlu0 %1837
    %1839 = vrot.lane.b32.xlu0 %v1517, 56
    %v1840 = vpop.permute.xlu0 %1839
    %1841 = vrot.lane.b32.xlu0 %v1525, 56
    %v1842 = vpop.permute.xlu0 %1841
    %1843 = vrot.lane.b32.xlu0 %v1533, 56
    %v1844 = vpop.permute.xlu0 %1843
    %1845 = vrot.lane.b32.xlu0 %v1541, 56
    %v1846 = vpop.permute.xlu0 %1845
    %1847 = vrot.lane.b32.xlu0 %v1549, 56
    %v1848 = vpop.permute.xlu0 %1847
    %1849 = vrot.lane.b32.xlu0 %v1557, 56
    %v1850 = vpop.permute.xlu0 %1849
    %1851 = vrot.lane.b32.xlu0 %v1565, 56
    %v1852 = vpop.permute.xlu0 %1851
    %1853 = vrot.lane.b32.xlu0 %v1573, 56
    %v1854 = vpop.permute.xlu0 %1853
    %1855 = vrot.lane.b32.xlu0 %v1710, 56
    %v1856 = vpop.permute.xlu0 %1855
    %1857 = vrot.lane.b32.xlu0 %v1824, 56
    %v1858 = vpop.permute.xlu0 %1857
    %1859 = vrot.lane.b32.xlu0 %v1832, 56
    %v1860 = vpop.permute.xlu0 %1859
    %v1862 = vunpack.c.l.b16 %v1392
    %v1863 = vpack.c.b16 %v1426, %v1862
    %v1864 = vrot.slane %v1863, 1
    %v1865 = vsel %vm367, %v1864, %v1618
    %v1866 = vrot.slane %v1788, 1
    %v1867 = vsel %vm367, %v1752, %v1866
    %v1868 = vrot.slane %v1819, 1
    %v1869 = vsel %vm367, %v1866, %v1868
    %1870 = vrot.lane.b32.xlu0 %v1865, 64
    %v1871 = vpop.permute.xlu0 %1870
    %1872 = vrot.lane.b32.xlu0 %v1621, 64
    %v1873 = vpop.permute.xlu0 %1872
    %1874 = vrot.lane.b32.xlu0 %v1623, 64
    %v1875 = vpop.permute.xlu0 %1874
    %1876 = vrot.lane.b32.xlu0 %v1625, 64
    %v1877 = vpop.permute.xlu0 %1876
    %1878 = vrot.lane.b32.xlu0 %v1627, 64
    %v1879 = vpop.permute.xlu0 %1878
    %1880 = vrot.lane.b32.xlu0 %v1629, 64
    %v1881 = vpop.permute.xlu0 %1880
    %1882 = vrot.lane.b32.xlu0 %v1631, 64
    %v1883 = vpop.permute.xlu0 %1882
    %1884 = vrot.lane.b32.xlu0 %v1633, 64
    %v1885 = vpop.permute.xlu0 %1884
    %1886 = vrot.lane.b32.xlu0 %v1635, 64
    %v1887 = vpop.permute.xlu0 %1886
    %1888 = vrot.lane.b32.xlu0 %v1637, 64
    %v1889 = vpop.permute.xlu0 %1888
    %1890 = vrot.lane.b32.xlu0 %v1639, 64
    %v1891 = vpop.permute.xlu0 %1890
    %1892 = vrot.lane.b32.xlu0 %v1753, 64
    %v1893 = vpop.permute.xlu0 %1892
    %1894 = vrot.lane.b32.xlu0 %v1867, 64
    %v1895 = vpop.permute.xlu0 %1894
    %1896 = vrot.lane.b32.xlu0 %v1869, 64
    %v1897 = vpop.permute.xlu0 %1896
    %v1899 = vsel %vm653, %v1449, %v1583
    %v1901 = vsel %vm653, %v1450, %v1585
    %v1903 = vsel %vm653, %v1451, %v1587
    %v1905 = vsel %vm653, %v1452, %v1589
    %v1907 = vsel %vm653, %v1453, %v1591
    %v1909 = vsel %vm653, %v1454, %v1593
    %v1911 = vsel %vm653, %v1455, %v1595
    %v1913 = vsel %vm653, %v1456, %v1597
    %v1915 = vsel %vm653, %v1457, %v1599
    %v1917 = vsel %vm653, %v1458, %v1601
    %v1919 = vsel %vm653, %v1459, %v1603
    %v1921 = vsel %vm653, %v1460, %v1605
    %v1923 = vsel %vm653, %v1461, %v1607
    %v1925 = vsel %vm653, %v1462, %v1609
    %v1927 = vsel %vm682, %v1899, %v1643
    %v1929 = vsel %vm682, %v1901, %v1645
    %v1931 = vsel %vm682, %v1903, %v1647
    %v1933 = vsel %vm682, %v1905, %v1649
    %v1935 = vsel %vm682, %v1907, %v1651
    %v1937 = vsel %vm682, %v1909, %v1653
    %v1939 = vsel %vm682, %v1911, %v1655
    %v1941 = vsel %vm682, %v1913, %v1657
    %v1943 = vsel %vm682, %v1915, %v1659
    %v1945 = vsel %vm682, %v1917, %v1661
    %v1947 = vsel %vm682, %v1919, %v1663
    %v1949 = vsel %vm682, %v1921, %v1665
    %v1951 = vsel %vm682, %v1923, %v1667
    %v1953 = vsel %vm682, %v1925, %v1669
    %v1955 = vsel %vm711, %v1927, %v1676
    %v1957 = vsel %vm711, %v1929, %v1678
    %v1959 = vsel %vm711, %v1931, %v1680
    %v1961 = vsel %vm711, %v1933, %v1682
    %v1963 = vsel %vm711, %v1935, %v1684
    %v1965 = vsel %vm711, %v1937, %v1686
    %v1967 = vsel %vm711, %v1939, %v1688
    %v1969 = vsel %vm711, %v1941, %v1690
    %v1971 = vsel %vm711, %v1943, %v1692
    %v1973 = vsel %vm711, %v1945, %v1694
    %v1975 = vsel %vm711, %v1947, %v1696
    %v1977 = vsel %vm711, %v1949, %v1698
    %v1979 = vsel %vm711, %v1951, %v1700
    %v1981 = vsel %vm711, %v1953, %v1702
    %v1983 = vsel %vm740, %v1955, %v1720
    %v1985 = vsel %vm740, %v1957, %v1722
    %v1987 = vsel %vm740, %v1959, %v1724
    %v1989 = vsel %vm740, %v1961, %v1726
    %v1991 = vsel %vm740, %v1963, %v1728
    %v1993 = vsel %vm740, %v1965, %v1730
    %v1995 = vsel %vm740, %v1967, %v1732
    %v1997 = vsel %vm740, %v1969, %v1734
    %v1999 = vsel %vm740, %v1971, %v1736
    %v2001 = vsel %vm740, %v1973, %v1738
    %v2003 = vsel %vm740, %v1975, %v1740
    %v2005 = vsel %vm740, %v1977, %v1742
    %v2007 = vsel %vm740, %v1979, %v1744
    %v2009 = vsel %vm740, %v1981, %v1746
    %v2011 = vsel %vm769, %v1983, %v1757
    %v2013 = vsel %vm769, %v1985, %v1759
    %v2015 = vsel %vm769, %v1987, %v1761
    %v2017 = vsel %vm769, %v1989, %v1763
    %v2019 = vsel %vm769, %v1991, %v1765
    %v2021 = vsel %vm769, %v1993, %v1767
    %v2023 = vsel %vm769, %v1995, %v1769
    %v2025 = vsel %vm769, %v1997, %v1771
    %v2027 = vsel %vm769, %v1999, %v1773
    %v2029 = vsel %vm769, %v2001, %v1775
    %v2031 = vsel %vm769, %v2003, %v1777
    %v2033 = vsel %vm769, %v2005, %v1779
    %v2035 = vsel %vm769, %v2007, %v1781
    %v2037 = vsel %vm769, %v2009, %v1783
    %v2039 = vsel %vm798, %v2011, %v1790
    %v2041 = vsel %vm798, %v2013, %v1792
    %v2043 = vsel %vm798, %v2015, %v1794
    %v2045 = vsel %vm798, %v2017, %v1796
    %v2047 = vsel %vm798, %v2019, %v1798
    %v2049 = vsel %vm798, %v2021, %v1800
    %v2051 = vsel %vm798, %v2023, %v1802
    %v2053 = vsel %vm798, %v2025, %v1804
    %v2055 = vsel %vm798, %v2027, %v1806
    %v2057 = vsel %vm798, %v2029, %v1808
    %v2059 = vsel %vm798, %v2031, %v1810
    %v2061 = vsel %vm798, %v2033, %v1812
    %v2063 = vsel %vm798, %v2035, %v1814
    %v2065 = vsel %vm798, %v2037, %v1816
    %v2067 = vsel %vm827, %v2039, %v1834
    %v2069 = vsel %vm827, %v2041, %v1836
    %v2071 = vsel %vm827, %v2043, %v1838
    %v2073 = vsel %vm827, %v2045, %v1840
    %v2075 = vsel %vm827, %v2047, %v1842
    %v2077 = vsel %vm827, %v2049, %v1844
    %v2079 = vsel %vm827, %v2051, %v1846
    %v2081 = vsel %vm827, %v2053, %v1848
    %v2083 = vsel %vm827, %v2055, %v1850
    %v2085 = vsel %vm827, %v2057, %v1852
    %v2087 = vsel %vm827, %v2059, %v1854
    %v2089 = vsel %vm827, %v2061, %v1856
    %v2091 = vsel %vm827, %v2063, %v1858
    %v2093 = vsel %vm827, %v2065, %v1860
    %v2095 = vsel %vm856, %v2067, %v1871
    %v2097 = vsel %vm856, %v2069, %v1873
    %v2099 = vsel %vm856, %v2071, %v1875
    %v2101 = vsel %vm856, %v2073, %v1877
    %v2103 = vsel %vm856, %v2075, %v1879
    %v2105 = vsel %vm856, %v2077, %v1881
    %v2107 = vsel %vm856, %v2079, %v1883
    %v2109 = vsel %vm856, %v2081, %v1885
    %v2111 = vsel %vm856, %v2083, %v1887
    %v2113 = vsel %vm856, %v2085, %v1889
    %v2115 = vsel %vm856, %v2087, %v1891
    %v2117 = vsel %vm856, %v2089, %v1893
    %v2119 = vsel %vm856, %v2091, %v1895
    %v2121 = vsel %vm856, %v2093, %v1897
    %v2122 = vsel %vm912, %v2095, 0
    %v2124 = vsel %vm912, %v2097, 0
    %v2126 = vsel %vm912, %v2099, 0
    %v2128 = vsel %vm912, %v2101, 0
    %v2130 = vsel %vm912, %v2103, 0
    %v2132 = vsel %vm912, %v2105, 0
    %v2134 = vsel %vm912, %v2107, 0
    %v2136 = vsel %vm912, %v2109, 0
    %v2138 = vsel %vm912, %v2111, 0
    %v2140 = vsel %vm912, %v2113, 0
    %v2142 = vsel %vm912, %v2115, 0
    %v2144 = vsel %vm912, %v2117, 0
    %v2146 = vsel %vm912, %v2119, 0
    %v2148 = vsel %vm912, %v2121, 0
    %2150 = vmatprep.subr.bf16.mxu0 0
    %2151 = vmatpush1.bf16.msra.mxu0 %v903
    %2152 = vmatprep.subr.bf16.mxu0 0
    %2153 = vmatpush1.bf16.msra.mxu0 %v904
    %2154 = vmatprep.subr.bf16.mxu0 0
    %2155 = vmatpush1.bf16.msra.mxu0 %v905
    %2156 = vmatprep.subr.bf16.mxu0 0
    %2157 = vmatpush1.bf16.msra.mxu0 %v906
    %2158 = vmatprep.subr.bf16.mxu0 0
    %2159 = vmatpush1.bf16.msra.mxu0 %v943
    %2160 = vmatprep.subr.bf16.mxu0 0
    %2161 = vmatpush1.bf16.msra.mxu0 0
    %2162 = vmatprep.subr.bf16.mxu0 0
    %2163 = vmatpush1.bf16.msra.mxu0 0
    %2164 = vmatprep.subr.bf16.mxu0 0
    %2165 = vmatpush1.bf16.msra.mxu0 0
    %2166 = vmatprep.subr.bf16.mxu0 0
    %2167 = vmatpush1.bf16.msra.mxu0 0
    %2168 = vmatprep.subr.bf16.mxu0 0
    %2169 = vmatpush1.bf16.msra.mxu0 0
    %2170 = vmatprep.subr.bf16.mxu0 0
    %2171 = vmatpush1.bf16.msra.mxu0 0
    %2172 = vmatprep.subr.bf16.mxu0 0
    %2173 = vmatpush1.bf16.msra.mxu0 0
    %2174 = vmatprep.subr.bf16.mxu0 0
    %2175 = vmatpush1.bf16.msra.mxu0 0
    %2176 = vmatprep.subr.bf16.mxu0 0
    %2177 = vmatpush1.bf16.msra.mxu0 0
    %2178 = vmatprep.subr.bf16.mxu0 0
    %2179 = vmatpush1.bf16.msra.mxu0 0
    %2180 = vmatprep.subr.bf16.mxu0 0
    %2181 = vmatpush1.bf16.msra.mxu0 0
    %2182 = vmatprep.mubr.bf16.mxu0 0
    %2183 = vmatmul.mubr.bf16.gmra.mrb[0].mxu0 %v2122
    %v2184 = vpop.f32.mrb[0].mxu0
    %v2185 = vadd.f32 0.0, %v2184
    %v2186 = vpop.f32.mrb[0].mxu0
    %v2187 = vpop.f32.mrb[0].mxu0
    %v2188 = vadd.f32 0.0, %v2187
    %v2189 = vpop.f32.mrb[0].mxu0
    %2190 = vmatprep.mubr.bf16.mxu0 0
    %2191 = vmatmul.mubr.bf16.gmra.mrb[0].mxu0 %v2124
    %v2192 = vpop.f32.mrb[0].mxu0
    %v2193 = vadd.f32 0.0, %v2192
    %v2194 = vpop.f32.mrb[0].mxu0
    %v2195 = vpop.f32.mrb[0].mxu0
    %v2196 = vadd.f32 0.0, %v2195
    %v2197 = vpop.f32.mrb[0].mxu0
    %2198 = vmatprep.mubr.bf16.mxu0 0
    %2199 = vmatmul.mubr.bf16.gmra.mrb[0].mxu0 %v2126
    %v2200 = vpop.f32.mrb[0].mxu0
    %v2201 = vadd.f32 0.0, %v2200
    %v2202 = vpop.f32.mrb[0].mxu0
    %v2203 = vpop.f32.mrb[0].mxu0
    %v2204 = vadd.f32 0.0, %v2203
    %v2205 = vpop.f32.mrb[0].mxu0
    %2206 = vmatprep.mubr.bf16.mxu0 0
    %2207 = vmatmul.mubr.bf16.gmra.mrb[0].mxu0 %v2128
    %v2208 = vpop.f32.mrb[0].mxu0
    %v2209 = vadd.f32 0.0, %v2208
    %v2210 = vpop.f32.mrb[0].mxu0
    %v2211 = vpop.f32.mrb[0].mxu0
    %v2212 = vadd.f32 0.0, %v2211
    %v2213 = vpop.f32.mrb[0].mxu0
    %2214 = vmatprep.mubr.bf16.mxu0 0
    %2215 = vmatmul.mubr.bf16.gmra.mrb[0].mxu0 %v2130
    %v2216 = vpop.f32.mrb[0].mxu0
    %v2217 = vadd.f32 0.0, %v2216
    %v2218 = vpop.f32.mrb[0].mxu0
    %v2219 = vpop.f32.mrb[0].mxu0
    %v2220 = vadd.f32 0.0, %v2219
    %v2221 = vpop.f32.mrb[0].mxu0
    %2222 = vmatprep.mubr.bf16.mxu0 0
    %2223 = vmatmul.mubr.bf16.gmra.mrb[0].mxu0 %v2132
    %v2224 = vpop.f32.mrb[0].mxu0
    %v2225 = vadd.f32 0.0, %v2224
    %v2226 = vpop.f32.mrb[0].mxu0
    %v2227 = vpop.f32.mrb[0].mxu0
    %v2228 = vadd.f32 0.0, %v2227
    %v2229 = vpop.f32.mrb[0].mxu0
    %2230 = vmatprep.mubr.bf16.mxu0 0
    %2231 = vmatmul.mubr.bf16.gmra.mrb[0].mxu0 %v2134
    %v2232 = vpop.f32.mrb[0].mxu0
    %v2233 = vadd.f32 0.0, %v2232
    %v2234 = vpop.f32.mrb[0].mxu0
    %v2235 = vpop.f32.mrb[0].mxu0
    %v2236 = vadd.f32 0.0, %v2235
    %v2237 = vpop.f32.mrb[0].mxu0
    %2238 = vmatprep.mubr.bf16.mxu0 0
    %2239 = vmatmul.mubr.bf16.gmra.mrb[0].mxu0 %v2136
    %v2240 = vpop.f32.mrb[0].mxu0
    %v2241 = vadd.f32 0.0, %v2240
    %v2242 = vpop.f32.mrb[0].mxu0
    %v2243 = vpop.f32.mrb[0].mxu0
    %v2244 = vadd.f32 0.0, %v2243
    %v2245 = vpop.f32.mrb[0].mxu0
    %2246 = vmatprep.mubr.bf16.mxu0 0
    %2247 = vmatmul.mubr.bf16.gmra.mrb[0].mxu0 %v2138
    %v2248 = vpop.f32.mrb[0].mxu0
    %v2249 = vadd.f32 0.0, %v2248
    %v2250 = vpop.f32.mrb[0].mxu0
    %v2251 = vpop.f32.mrb[0].mxu0
    %v2252 = vadd.f32 0.0, %v2251
    %v2253 = vpop.f32.mrb[0].mxu0
    %2254 = vmatprep.mubr.bf16.mxu0 0
    %2255 = vmatmul.mubr.bf16.gmra.mrb[0].mxu0 %v2140
    %v2256 = vpop.f32.mrb[0].mxu0
    %v2257 = vadd.f32 0.0, %v2256
    %v2258 = vpop.f32.mrb[0].mxu0
    %v2259 = vpop.f32.mrb[0].mxu0
    %v2260 = vadd.f32 0.0, %v2259
    %v2261 = vpop.f32.mrb[0].mxu0
    %2262 = vmatprep.mubr.bf16.mxu0 0
    %2263 = vmatmul.mubr.bf16.gmra.mrb[0].mxu0 %v2142
    %v2264 = vpop.f32.mrb[0].mxu0
    %v2265 = vadd.f32 0.0, %v2264
    %v2266 = vpop.f32.mrb[0].mxu0
    %v2267 = vpop.f32.mrb[0].mxu0
    %v2268 = vadd.f32 0.0, %v2267
    %v2269 = vpop.f32.mrb[0].mxu0
    %2270 = vmatprep.mubr.bf16.mxu0 0
    %2271 = vmatmul.mubr.bf16.gmra.mrb[0].mxu0 %v2144
    %v2272 = vpop.f32.mrb[0].mxu0
    %v2273 = vadd.f32 0.0, %v2272
    %v2274 = vpop.f32.mrb[0].mxu0
    %v2275 = vpop.f32.mrb[0].mxu0
    %v2276 = vadd.f32 0.0, %v2275
    %v2277 = vpop.f32.mrb[0].mxu0
    %2278 = vmatprep.mubr.bf16.mxu0 0
    %2279 = vmatmul.mubr.bf16.gmra.mrb[0].mxu0 %v2146
    %v2280 = vpop.f32.mrb[0].mxu0
    %v2281 = vadd.f32 0.0, %v2280
    %v2282 = vpop.f32.mrb[0].mxu0
    %v2283 = vpop.f32.mrb[0].mxu0
    %v2284 = vadd.f32 0.0, %v2283
    %v2285 = vpop.f32.mrb[0].mxu0
    %2286 = vmatprep.mubr.bf16.mxu0 0
    %2287 = vmatmul.mubr.bf16.gmra.mrb[0].mxu0 %v2148
    %v2288 = vpop.f32.mrb[0].mxu0
    %v2289 = vadd.f32 0.0, %v2288
    %v2290 = vpop.f32.mrb[0].mxu0
    %v2291 = vpop.f32.mrb[0].mxu0
    %v2292 = vadd.f32 0.0, %v2291
    %v2293 = vpop.f32.mrb[0].mxu0
    %2294 = vdwg.mxu0
    %v2295 = vmul.f32 %v2185, %v1093
    %v2296 = vmul.f32 %v2188, %v1098
    %v2297 = vmul.f32 %v2193, %v1103
    %v2298 = vmul.f32 %v2196, %v1108
    %v2299 = vmul.f32 %v2201, %v1113
    %v2300 = vmul.f32 %v2204, %v1118
    %v2301 = vmul.f32 %v2209, %v1123
    %v2302 = vmul.f32 %v2212, %v1128
    %v2303 = vmul.f32 %v2217, %v1133
    %v2304 = vmul.f32 %v2220, %v1138
    %v2305 = vmul.f32 %v2225, %v1143
    %v2306 = vmul.f32 %v2228, %v1148
    %v2307 = vmul.f32 %v2233, %v1153
    %v2308 = vmul.f32 %v2236, %v1158
    %v2309 = vmul.f32 %v2241, %v1163
    %v2310 = vmul.f32 %v2244, %v1168
    %v2311 = vmul.f32 %v2249, %v1173
    %v2312 = vmul.f32 %v2252, %v1178
    %v2313 = vmul.f32 %v2257, %v1183
    %v2314 = vmul.f32 %v2260, %v1188
    %v2315 = vmul.f32 %v2265, %v1193
    %v2316 = vmul.f32 %v2268, %v1198
    %v2317 = vmul.f32 %v2273, %v1203
    %v2318 = vmul.f32 %v2276, %v1208
    %v2319 = vmul.f32 %v2281, %v1213
    %v2320 = vmul.f32 %v2284, %v1218
    %v2321 = vmul.f32 %v2289, %v1223
    %v2322 = vmul.f32 %v2292, %v1228
    %v2323 = vadd.f32 %v2295, %v2296
    %v2324 = vadd.f32 %v2323, %v2297
    %v2325 = vadd.f32 %v2324, %v2298
    %v2326 = vadd.f32 %v2325, %v2299
    %v2327 = vadd.f32 %v2326, %v2300
    %v2328 = vadd.f32 %v2327, %v2301
    %v2329 = vadd.f32 %v2328, %v2302
    %v2330 = vadd.f32 %v2329, %v2303
    %v2331 = vadd.f32 %v2330, %v2304
    %v2332 = vadd.f32 %v2331, %v2305
    %v2333 = vadd.f32 %v2332, %v2306
    %v2334 = vadd.f32 %v2333, %v2307
    %v2335 = vadd.f32 %v2334, %v2308
    %v2336 = vadd.f32 %v2335, %v2309
    %v2337 = vadd.f32 %v2336, %v2310
    %v2338 = vadd.f32 %v2337, %v2311
    %v2339 = vadd.f32 %v2338, %v2312
    %v2340 = vadd.f32 %v2339, %v2313
    %v2341 = vadd.f32 %v2340, %v2314
    %v2342 = vadd.f32 %v2341, %v2315
    %v2343 = vadd.f32 %v2342, %v2316
    %v2344 = vadd.f32 %v2343, %v2317
    %v2345 = vadd.f32 %v2344, %v2318
    %v2346 = vadd.f32 %v2345, %v2319
    %v2347 = vadd.f32 %v2346, %v2320
    %v2348 = vadd.f32 %v2347, %v2321
    %v2349 = vadd.f32 %v2348, %v2322
    %v2350 = vrot.slane %v2349, 4
    %v2351 = vadd.f32 %v2349, %v2350
    %v2352 = vrot.slane %v2351, 2
    %v2353 = vadd.f32 %v2351, %v2352
    %v2354 = vrot.slane %v2353, 1
    %v2355 = vadd.f32 %v2353, %v2354
    %v2356 = vadd.f32 %v1291, %v2355
    %v2357 = vmul.f32 %v2295, %v2185
    %v2358 = vmul.f32 %v2296, %v2188
    %v2359 = vmul.f32 %v2297, %v2193
    %v2360 = vmul.f32 %v2298, %v2196
    %v2361 = vmul.f32 %v2299, %v2201
    %v2362 = vmul.f32 %v2300, %v2204
    %v2363 = vmul.f32 %v2301, %v2209
    %v2364 = vmul.f32 %v2302, %v2212
    %v2365 = vmul.f32 %v2303, %v2217
    %v2366 = vmul.f32 %v2304, %v2220
    %v2367 = vmul.f32 %v2305, %v2225
    %v2368 = vmul.f32 %v2306, %v2228
    %v2369 = vmul.f32 %v2307, %v2233
    %v2370 = vmul.f32 %v2308, %v2236
    %v2371 = vmul.f32 %v2309, %v2241
    %v2372 = vmul.f32 %v2310, %v2244
    %v2373 = vmul.f32 %v2311, %v2249
    %v2374 = vmul.f32 %v2312, %v2252
    %v2375 = vmul.f32 %v2313, %v2257
    %v2376 = vmul.f32 %v2314, %v2260
    %v2377 = vmul.f32 %v2315, %v2265
    %v2378 = vmul.f32 %v2316, %v2268
    %v2379 = vmul.f32 %v2317, %v2273
    %v2380 = vmul.f32 %v2318, %v2276
    %v2381 = vmul.f32 %v2319, %v2281
    %v2382 = vmul.f32 %v2320, %v2284
    %v2383 = vmul.f32 %v2321, %v2289
    %v2384 = vmul.f32 %v2322, %v2292
    %v2385 = vadd.f32 %v2357, %v2358
    %v2386 = vadd.f32 %v2385, %v2359
    %v2387 = vadd.f32 %v2386, %v2360
    %v2388 = vadd.f32 %v2387, %v2361
    %v2389 = vadd.f32 %v2388, %v2362
    %v2390 = vadd.f32 %v2389, %v2363
    %v2391 = vadd.f32 %v2390, %v2364
    %v2392 = vadd.f32 %v2391, %v2365
    %v2393 = vadd.f32 %v2392, %v2366
    %v2394 = vadd.f32 %v2393, %v2367
    %v2395 = vadd.f32 %v2394, %v2368
    %v2396 = vadd.f32 %v2395, %v2369
    %v2397 = vadd.f32 %v2396, %v2370
    %v2398 = vadd.f32 %v2397, %v2371
    %v2399 = vadd.f32 %v2398, %v2372
    %v2400 = vadd.f32 %v2399, %v2373
    %v2401 = vadd.f32 %v2400, %v2374
    %v2402 = vadd.f32 %v2401, %v2375
    %v2403 = vadd.f32 %v2402, %v2376
    %v2404 = vadd.f32 %v2403, %v2377
    %v2405 = vadd.f32 %v2404, %v2378
    %v2406 = vadd.f32 %v2405, %v2379
    %v2407 = vadd.f32 %v2406, %v2380
    %v2408 = vadd.f32 %v2407, %v2381
    %v2409 = vadd.f32 %v2408, %v2382
    %v2410 = vadd.f32 %v2409, %v2383
    %v2411 = vadd.f32 %v2410, %v2384
    %v2412 = vrot.slane %v2411, 4
    %v2413 = vadd.f32 %v2411, %v2412
    %v2414 = vrot.slane %v2413, 2
    %v2415 = vadd.f32 %v2413, %v2414
    %v2416 = vrot.slane %v2415, 1
    %v2417 = vadd.f32 %v2415, %v2416
    %v2418 = vadd.f32 %v1353, %v2417
    %v2419 = vld [vmem:[#allocation8] sm:$0xff]
    %v2420 = vadd.f32 %v2419, %v2356
    %2421 = vst [vmem:[#allocation8] sm:$0xff] %v2420
    %v2422 = vld [vmem:[#allocation9] sm:$0xff]
    %v2423 = vadd.f32 %v2422, %v2418
    %2424 = vst [vmem:[#allocation9] sm:$0xff] %v2423
    // Predicated region
    $region30: #{downblock_forward.2} parent=1 // pred_check
      _
    $region31: #{downblock_forward.2} parent=1 // pred_check_branch
      %2426 = sbr.rel (0) target = $region33
    $region32: #{downblock_forward.2} parent=1 // pred_region
      %s2428 = ssub.s32 128, 128
      %2429 = vsyncadd [#allocation4], %s2428
      %s2431 = sshll.u32 [#allocation8], 4
      %s2432 = int_to_ptr.vmem [resolvable:$true] %s2431
      %2434 = dma.vmem_to_hbm [thread:$0]  %s2432, 128, %s3, [#allocation4]
    $region33: #{downblock_forward.2} parent=1 // pred_fallthru
      _
    // Predicated region
    $region34: #{downblock_forward.2} parent=1 // pred_check
      _
    $region35: #{downblock_forward.2} parent=1 // pred_check_branch
      %2436 = sbr.rel (0) target = $region37
    $region36: #{downblock_forward.2} parent=1 // pred_region
      %s2438 = ssub.s32 128, 128
      %2439 = vsyncadd [#allocation10], %s2438
      %s2441 = sshll.u32 [#allocation9], 4
      %s2442 = int_to_ptr.vmem [resolvable:$true] %s2441
      %2444 = dma.vmem_to_hbm [thread:$0]  %s2442, 128, %s4, [#allocation10]
    $region37: #{downblock_forward.2} parent=1 // pred_fallthru
      _
    // Predicated region
    $region38: #{downblock_forward.2} parent=1 // pred_check
      _
    $region39: #{downblock_forward.2} parent=1 // pred_check_branch
      %2446 = sbr.rel (0) target = $region41
    $region40: #{downblock_forward.2} parent=1 // pred_region
      %2447 = dma.done [#allocation4], 128
    $region41: #{downblock_forward.2} parent=1 // pred_fallthru
      _
    // Predicated region
    $region42: #{downblock_forward.2} parent=1 // pred_check
      _
    $region43: #{downblock_forward.2} parent=1 // pred_check_branch
      %2449 = sbr.rel (0) target = $region45
    $region44: #{downblock_forward.2} parent=1 // pred_region
      %2450 = dma.done [#allocation10], 128
    $region45: #{downblock_forward.2} parent=1 // pred_fallthru
      _
    %2451 = vsyncpa [#allocation3], 1
    %2452 = vsyncpa [#allocation6], 1
    %2453 = vsyncpa [#allocation4], 1
    %2454 = vsyncpa [#allocation10], 1

// kernel: downblock_forward.3
$region0: #{downblock_forward.3}
  #allocation0 [shape = 'u32[]', space=smem, size = 0x4, offset = 0x4, fixed_abs, tag = 'smem constant byte address 0x4 - core index']
  #allocation1 [shape = 'u32[144,128]{1,0:T(1,128)}', space=vmem, size = 0x12000, scoped, tag = 'internal scratch']
  %s0 = inlined_call_operand.hbm [shape: bf16[1,2,272,8], index: 0, kind: input, shape index: {}]
  %s1 = inlined_call_operand.hbm [shape: bf16[72,128], index: 1, kind: input, shape index: {}]
  %s2 = inlined_call_operand.hbm [shape: f32[1,128], index: 2, kind: input, shape index: {}]
  %s3 = inlined_call_operand.hbm [shape: f32[1,128], index: 3, kind: input, shape index: {}]
  %s4 = inlined_call_operand.hbm [shape: f32[1,2,224,8], index: 4, kind: output, shape index: {}]
  %s5 = sld [smem:[#allocation0]]
  $region42: #{downblock_forward.3} parent=0
    _
  %s7 = ssub.s32 1, %s5
  %s8 = scalar_select 0, %s7, %s5
  $region1: #{downblock_forward.3} parent=0
    #allocation2 [shape = 'u8[139264]{0}', space=vmem, size = 0x22000, scoped, tag = 'input window, operand 0, single buffered']
    #allocation3 [shape = 's32[1]{0}', space=sflag, size = 0x4, scoped, tag = 'scoped memory for downblock_forward.3']
    #allocation4 [shape = 's32[1]{0}', space=sflag, size = 0x4, scoped, tag = 'scoped memory for downblock_forward.3']
    #allocation5 [shape = 'u8[18432]{0}', space=vmem, size = 0x4800, scoped, tag = 'input window, operand 1, single buffered']
    #allocation6 [shape = 's32[1]{0}', space=sflag, size = 0x4, scoped, tag = 'scoped memory for downblock_forward.3']
    #allocation7 [shape = 'u8[512]{0}', space=vmem, size = 0x400, scoped, tag = 'input window, operand 2, single buffered']
    #allocation8 [shape = 'u8[512]{0}', space=vmem, size = 0x400, scoped, tag = 'input window, operand 3, single buffered']
    #allocation9 [shape = 's32[1]{0}', space=sflag, size = 0x4, scoped, tag = 'scoped memory for downblock_forward.3']
    #allocation10 [shape = 'u8[229376]{0}', space=vmem, size = 0x38000, scoped, tag = 'output window, operand 0, single buffered']
    %9 = vsyncpa [#allocation3], 0
    %10 = vsyncpa [#allocation6], 0
    %11 = vsyncpa [#allocation9], 0
    %12 = vsyncpa [#allocation4], 0
    // Predicated region
    $region2: #{downblock_forward.3} parent=1 // pred_check
      _
    $region3: #{downblock_forward.3} parent=1 // pred_check_branch
      %14 = sbr.rel (0) target = $region5
    $region4: #{downblock_forward.3} parent=1 // pred_region
      %s16 = ssub.s32 4352, 4352
      %17 = vsyncadd [#allocation3], %s16
      %s18 = sshll.u32 [#allocation2], 4
      %s19 = int_to_ptr.vmem [resolvable:$true] %s18
      %24 = dma.hbm_to_vmem [thread:$0]  %s0, 4352, %s19, [#allocation3], 64, 64, 4
    $region5: #{downblock_forward.3} parent=1 // pred_fallthru
      _
    // Predicated region
    $region6: #{downblock_forward.3} parent=1 // pred_check
      _
    $region7: #{downblock_forward.3} parent=1 // pred_check_branch
      %26 = sbr.rel (0) target = $region9
    $region8: #{downblock_forward.3} parent=1 // pred_region
      %s28 = ssub.s32 576, 576
      %29 = vsyncadd [#allocation6], %s28
      %s30 = sshll.u32 [#allocation5], 4
      %s31 = int_to_ptr.vmem [resolvable:$true] %s30
      %36 = dma.hbm_to_vmem [thread:$0]  %s1, 576, %s31, [#allocation6], 64, 64, 4
    $region9: #{downblock_forward.3} parent=1 // pred_fallthru
      _
    // Predicated region
    $region10: #{downblock_forward.3} parent=1 // pred_check
      _
    $region11: #{downblock_forward.3} parent=1 // pred_check_branch
      %38 = sbr.rel (0) target = $region13
    $region12: #{downblock_forward.3} parent=1 // pred_region
      %s40 = ssub.s32 16, 16
      %41 = vsyncadd [#allocation6], %s40
      %s43 = sshll.u32 [#allocation7], 4
      %s44 = int_to_ptr.vmem [resolvable:$true] %s43
      %46 = dma.hbm_to_vmem [thread:$0]  %s2, 16, %s44, [#allocation6]
    $region13: #{downblock_forward.3} parent=1 // pred_fallthru
      _
    // Predicated region
    $region14: #{downblock_forward.3} parent=1 // pred_check
      _
    $region15: #{downblock_forward.3} parent=1 // pred_check_branch
      %48 = sbr.rel (0) target = $region17
    $region16: #{downblock_forward.3} parent=1 // pred_region
      %s50 = ssub.s32 16, 16
      %51 = vsyncadd [#allocation9], %s50
      %s53 = sshll.u32 [#allocation8], 4
      %s54 = int_to_ptr.vmem [resolvable:$true] %s53
      %56 = dma.hbm_to_vmem [thread:$0]  %s3, 16, %s54, [#allocation9]
    $region17: #{downblock_forward.3} parent=1 // pred_fallthru
      _
    // Predicated region
    $region18: #{downblock_forward.3} parent=1 // pred_check
      _
    $region19: #{downblock_forward.3} parent=1 // pred_check_branch
      %58 = sbr.rel (0) target = $region21
    $region20: #{downblock_forward.3} parent=1 // pred_region
      %59 = dma.done [#allocation3], 4352
    $region21: #{downblock_forward.3} parent=1 // pred_fallthru
      _
    // Predicated region
    $region22: #{downblock_forward.3} parent=1 // pred_check
      _
    $region23: #{downblock_forward.3} parent=1 // pred_check_branch
      %61 = sbr.rel (0) target = $region25
    $region24: #{downblock_forward.3} parent=1 // pred_region
      %62 = dma.done [#allocation6], 576
    $region25: #{downblock_forward.3} parent=1 // pred_fallthru
      _
    // Predicated region
    $region26: #{downblock_forward.3} parent=1 // pred_check
      _
    $region27: #{downblock_forward.3} parent=1 // pred_check_branch
      %64 = sbr.rel (0) target = $region29
    $region28: #{downblock_forward.3} parent=1 // pred_region
      %65 = dma.done [#allocation6], 16
    $region29: #{downblock_forward.3} parent=1 // pred_fallthru
      _
    // Predicated region
    $region30: #{downblock_forward.3} parent=1 // pred_check
      _
    $region31: #{downblock_forward.3} parent=1 // pred_check_branch
      %67 = sbr.rel (0) target = $region33
    $region32: #{downblock_forward.3} parent=1 // pred_region
      %68 = dma.done [#allocation9], 16
    $region33: #{downblock_forward.3} parent=1 // pred_fallthru
      _
    %v70 = vld [vmem:[#allocation5] sm:$0xf]
    %v71 = vld [vmem:[#allocation5 + $0x4] sm:$0xf]
    %v72 = vld [vmem:[#allocation5 + $0x8] sm:$0xf]
    %v73 = vld [vmem:[#allocation5 + $0xc] sm:$0xf]
    %v74 = vld [vmem:[#allocation5 + $0x10] sm:$0xf]
    %v75 = vld [vmem:[#allocation5 + $0x14] sm:$0xf]
    %v76 = vld [vmem:[#allocation5 + $0x18] sm:$0xf]
    %v77 = vld [vmem:[#allocation5 + $0x1c] sm:$0xf]
    %v78 = vld [vmem:[#allocation5 + $0x20] sm:$0xf]
    %v79 = vld [vmem:[#allocation7] sm:$0x1]
    %v80 = vld [vmem:[#allocation8] sm:$0x1]
    %v81 = vld [vmem:[#allocation2] sm:$0xf]
    %v82 = vld [vmem:[#allocation2 + $0x4] sm:$0xf]
    %v83 = vld [vmem:[#allocation2 + $0x8] sm:$0xf]
    %v84 = vld [vmem:[#allocation2 + $0xc] sm:$0xf]
    %v85 = vld [vmem:[#allocation2 + $0x10] sm:$0xf]
    %v86 = vld [vmem:[#allocation2 + $0x14] sm:$0xf]
    %v87 = vld [vmem:[#allocation2 + $0x18] sm:$0xf]
    %v88 = vld [vmem:[#allocation2 + $0x1c] sm:$0xf]
    %v89 = vld [vmem:[#allocation2 + $0x20] sm:$0xf]
    %v90 = vld [vmem:[#allocation2 + $0x24] sm:$0xf]
    %v91 = vld [vmem:[#allocation2 + $0x28] sm:$0xf]
    %v92 = vld [vmem:[#allocation2 + $0x2c] sm:$0xf]
    %v93 = vld [vmem:[#allocation2 + $0x30] sm:$0xf]
    %v94 = vld [vmem:[#allocation2 + $0x34] sm:$0xf]
    %v95 = vld [vmem:[#allocation2 + $0x38] sm:$0xf]
    %v96 = vld [vmem:[#allocation2 + $0x3c] sm:$0xf]
    %v97 = vld [vmem:[#allocation2 + $0x40] sm:$0xf]
    %v98 = vld [vmem:[#allocation2 + $0x44] sm:$0xf]
    %v99 = vld [vmem:[#allocation2 + $0x48] sm:$0xf]
    %v100 = vld [vmem:[#allocation2 + $0x4c] sm:$0xf]
    %v101 = vld [vmem:[#allocation2 + $0x50] sm:$0xf]
    %v102 = vld [vmem:[#allocation2 + $0x54] sm:$0xf]
    %v103 = vld [vmem:[#allocation2 + $0x58] sm:$0xf]
    %v104 = vld [vmem:[#allocation2 + $0x5c] sm:$0xf]
    %v105 = vld [vmem:[#allocation2 + $0x60] sm:$0xf]
    %v106 = vld [vmem:[#allocation2 + $0x64] sm:$0xf]
    %v107 = vld [vmem:[#allocation2 + $0x68] sm:$0xf]
    %v108 = vld [vmem:[#allocation2 + $0x6c] sm:$0xf]
    %v109 = vld [vmem:[#allocation2 + $0x70] sm:$0x1]
    %v110 = vld [vmem:[#allocation2] sm:$0xe]
    %v111 = vld [vmem:[#allocation2 + $0x70] sm:$0xf]
    %v112 = vld [vmem:[#allocation2 + $0x74] sm:$0xf]
    %v113 = vld [vmem:[#allocation2 + $0x78] sm:$0x1]
    %v114 = vld [vmem:[#allocation2 + $0x8] sm:$0xe]
    %v115 = vld [vmem:[#allocation2 + $0x78] sm:$0xf]
    %v116 = vld [vmem:[#allocation2 + $0x7c] sm:$0xf]
    %v117 = vld [vmem:[#allocation2 + $0x80] sm:$0x1]
    %v118 = vld [vmem:[#allocation2 + $0x10] sm:$0xe]
    %v147 = vunpack.c.l.b16 %v81
    %v148 = vunpack.c.l.b16 %v82
    %v149 = vunpack.c.l.b16 %v83
    %v150 = vunpack.c.l.b16 %v84
    %v151 = vunpack.c.l.b16 %v85
    %v152 = vunpack.c.l.b16 %v86
    %v153 = vunpack.c.l.b16 %v87
    %v154 = vunpack.c.l.b16 %v88
    %v155 = vunpack.c.l.b16 %v89
    %v156 = vunpack.c.l.b16 %v90
    %v157 = vunpack.c.l.b16 %v91
    %v158 = vunpack.c.l.b16 %v92
    %v159 = vunpack.c.l.b16 %v93
    %v160 = vunpack.c.l.b16 %v94
    %v161 = vunpack.c.l.b16 %v95
    %v162 = vunpack.c.l.b16 %v96
    %v163 = vunpack.c.l.b16 %v97
    %v164 = vunpack.c.l.b16 %v98
    %v165 = vunpack.c.l.b16 %v99
    %v166 = vunpack.c.l.b16 %v100
    %v167 = vunpack.c.l.b16 %v101
    %v168 = vunpack.c.l.b16 %v102
    %v169 = vunpack.c.l.b16 %v103
    %v170 = vunpack.c.l.b16 %v104
    %v171 = vunpack.c.l.b16 %v105
    %v172 = vunpack.c.l.b16 %v106
    %v173 = vunpack.c.l.b16 %v107
    %v174 = vunpack.c.l.b16 %v108
    %v175 = vpack.c.b16 %v148, %v147
    %v176 = vpack.c.b16 %v150, %v149
    %v177 = vpack.c.b16 %v152, %v151
    %v178 = vpack.c.b16 %v154, %v153
    %v179 = vpack.c.b16 %v156, %v155
    %v180 = vpack.c.b16 %v158, %v157
    %v181 = vpack.c.b16 %v160, %v159
    %v182 = vpack.c.b16 %v162, %v161
    %v183 = vpack.c.b16 %v164, %v163
    %v184 = vpack.c.b16 %v166, %v165
    %v185 = vpack.c.b16 %v168, %v167
    %v186 = vpack.c.b16 %v170, %v169
    %v187 = vpack.c.b16 %v172, %v171
    %v188 = vpack.c.b16 %v174, %v173
    %v190 = vunpack.c.l.b16 %v109
    %v191 = vpack.c.b16 %v190, %v190
    %vm192 = vsmask.f32 7424
    %v194 = vshrl.u32 %v175, 16
    %v196 = vshll.u32 %v175, 16
    %v198 = vrot.slane %v196, 1
    %v199 = vor.u32 %v194, %v198
    %v201 = vshll.u32 %v176, 16
    %v203 = vrot.slane %v201, 1
    %v204 = vsel %vm192, %v199, %v203
    %v205 = vshrl.u32 %v176, 16
    %v207 = vor.u32 %v205, %v203
    %v209 = vshll.u32 %v177, 16
    %v211 = vrot.slane %v209, 1
    %v212 = vsel %vm192, %v207, %v211
    %v213 = vshrl.u32 %v177, 16
    %v215 = vor.u32 %v213, %v211
    %v217 = vshll.u32 %v178, 16
    %v219 = vrot.slane %v217, 1
    %v220 = vsel %vm192, %v215, %v219
    %v221 = vshrl.u32 %v178, 16
    %v223 = vor.u32 %v221, %v219
    %v225 = vshll.u32 %v179, 16
    %v227 = vrot.slane %v225, 1
    %v228 = vsel %vm192, %v223, %v227
    %v229 = vshrl.u32 %v179, 16
    %v231 = vor.u32 %v229, %v227
    %v233 = vshll.u32 %v180, 16
    %v235 = vrot.slane %v233, 1
    %v236 = vsel %vm192, %v231, %v235
    %v237 = vshrl.u32 %v180, 16
    %v239 = vor.u32 %v237, %v235
    %v241 = vshll.u32 %v181, 16
    %v243 = vrot.slane %v241, 1
    %v244 = vsel %vm192, %v239, %v243
    %v245 = vshrl.u32 %v181, 16
    %v247 = vor.u32 %v245, %v243
    %v249 = vshll.u32 %v182, 16
    %v251 = vrot.slane %v249, 1
    %v252 = vsel %vm192, %v247, %v251
    %v253 = vshrl.u32 %v182, 16
    %v255 = vor.u32 %v253, %v251
    %v257 = vshll.u32 %v183, 16
    %v259 = vrot.slane %v257, 1
    %v260 = vsel %vm192, %v255, %v259
    %v261 = vshrl.u32 %v183, 16
    %v263 = vor.u32 %v261, %v259
    %v265 = vshll.u32 %v184, 16
    %v267 = vrot.slane %v265, 1
    %v268 = vsel %vm192, %v263, %v267
    %v269 = vshrl.u32 %v184, 16
    %v271 = vor.u32 %v269, %v267
    %v273 = vshll.u32 %v185, 16
    %v275 = vrot.slane %v273, 1
    %v276 = vsel %vm192, %v271, %v275
    %v277 = vshrl.u32 %v185, 16
    %v279 = vor.u32 %v277, %v275
    %v281 = vshll.u32 %v186, 16
    %v283 = vrot.slane %v281, 1
    %v284 = vsel %vm192, %v279, %v283
    %v285 = vshrl.u32 %v186, 16
    %v287 = vor.u32 %v285, %v283
    %v289 = vshll.u32 %v187, 16
    %v291 = vrot.slane %v289, 1
    %v292 = vsel %vm192, %v287, %v291
    %v293 = vshrl.u32 %v187, 16
    %v295 = vor.u32 %v293, %v291
    %v297 = vshll.u32 %v188, 16
    %v299 = vrot.slane %v297, 1
    %v300 = vsel %vm192, %v295, %v299
    %v301 = vshrl.u32 %v188, 16
    %v303 = vor.u32 %v301, %v299
    %v305 = vshll.u32 %v191, 16
    %v307 = vrot.slane %v305, 1
    %v308 = vsel %vm192, %v303, %v307
    %309 = vrot.lane.b32.xlu0 %v204, 8
    %v310 = vpop.permute.xlu0 %309
    %311 = vrot.lane.b32.xlu0 %v212, 8
    %v312 = vpop.permute.xlu0 %311
    %313 = vrot.lane.b32.xlu0 %v220, 8
    %v314 = vpop.permute.xlu0 %313
    %315 = vrot.lane.b32.xlu0 %v228, 8
    %v316 = vpop.permute.xlu0 %315
    %317 = vrot.lane.b32.xlu0 %v236, 8
    %v318 = vpop.permute.xlu0 %317
    %319 = vrot.lane.b32.xlu0 %v244, 8
    %v320 = vpop.permute.xlu0 %319
    %321 = vrot.lane.b32.xlu0 %v252, 8
    %v322 = vpop.permute.xlu0 %321
    %323 = vrot.lane.b32.xlu0 %v260, 8
    %v324 = vpop.permute.xlu0 %323
    %325 = vrot.lane.b32.xlu0 %v268, 8
    %v326 = vpop.permute.xlu0 %325
    %327 = vrot.lane.b32.xlu0 %v276, 8
    %v328 = vpop.permute.xlu0 %327
    %329 = vrot.lane.b32.xlu0 %v284, 8
    %v330 = vpop.permute.xlu0 %329
    %331 = vrot.lane.b32.xlu0 %v292, 8
    %v332 = vpop.permute.xlu0 %331
    %333 = vrot.lane.b32.xlu0 %v300, 8
    %v334 = vpop.permute.xlu0 %333
    %335 = vrot.lane.b32.xlu0 %v308, 8
    %v336 = vpop.permute.xlu0 %335
    %v338 = vunpack.c.l.b16 %v110
    %v339 = vpack.c.b16 %v148, %v338
    %vm340 = vcmask 1046528
    %v341 = vrot.slane %v339, 1
    %v342 = vrot.slane %v176, 1
    %v343 = vsel %vm340, %v341, %v342
    %v344 = vrot.slane %v177, 1
    %v345 = vsel %vm340, %v342, %v344
    %v346 = vrot.slane %v178, 1
    %v347 = vsel %vm340, %v344, %v346
    %v348 = vrot.slane %v179, 1
    %v349 = vsel %vm340, %v346, %v348
    %v350 = vrot.slane %v180, 1
    %v351 = vsel %vm340, %v348, %v350
    %v352 = vrot.slane %v181, 1
    %v353 = vsel %vm340, %v350, %v352
    %v354 = vrot.slane %v182, 1
    %v355 = vsel %vm340, %v352, %v354
    %v356 = vrot.slane %v183, 1
    %v357 = vsel %vm340, %v354, %v356
    %v358 = vrot.slane %v184, 1
    %v359 = vsel %vm340, %v356, %v358
    %v360 = vrot.slane %v185, 1
    %v361 = vsel %vm340, %v358, %v360
    %v362 = vrot.slane %v186, 1
    %v363 = vsel %vm340, %v360, %v362
    %v364 = vrot.slane %v187, 1
    %v365 = vsel %vm340, %v362, %v364
    %v366 = vrot.slane %v188, 1
    %v367 = vsel %vm340, %v364, %v366
    %v368 = vrot.slane %v191, 1
    %v369 = vsel %vm340, %v366, %v368
    %370 = vrot.lane.b32.xlu0 %v343, 16
    %v371 = vpop.permute.xlu0 %370
    %372 = vrot.lane.b32.xlu0 %v345, 16
    %v373 = vpop.permute.xlu0 %372
    %374 = vrot.lane.b32.xlu0 %v347, 16
    %v375 = vpop.permute.xlu0 %374
    %376 = vrot.lane.b32.xlu0 %v349, 16
    %v377 = vpop.permute.xlu0 %376
    %378 = vrot.lane.b32.xlu0 %v351, 16
    %v379 = vpop.permute.xlu0 %378
    %380 = vrot.lane.b32.xlu0 %v353, 16
    %v381 = vpop.permute.xlu0 %380
    %382 = vrot.lane.b32.xlu0 %v355, 16
    %v383 = vpop.permute.xlu0 %382
    %384 = vrot.lane.b32.xlu0 %v357, 16
    %v385 = vpop.permute.xlu0 %384
    %386 = vrot.lane.b32.xlu0 %v359, 16
    %v387 = vpop.permute.xlu0 %386
    %388 = vrot.lane.b32.xlu0 %v361, 16
    %v389 = vpop.permute.xlu0 %388
    %390 = vrot.lane.b32.xlu0 %v363, 16
    %v391 = vpop.permute.xlu0 %390
    %392 = vrot.lane.b32.xlu0 %v365, 16
    %v393 = vpop.permute.xlu0 %392
    %394 = vrot.lane.b32.xlu0 %v367, 16
    %v395 = vpop.permute.xlu0 %394
    %396 = vrot.lane.b32.xlu0 %v369, 16
    %v397 = vpop.permute.xlu0 %396
    %v400 = vunpack.c.l.b16 %v111
    %v401 = vunpack.c.l.b16 %v112
    %v402 = vpack.c.b16 %v401, %v400
    %403 = vrot.lane.b32.xlu0 %v176, 24
    %v404 = vpop.permute.xlu0 %403
    %405 = vrot.lane.b32.xlu0 %v177, 24
    %v406 = vpop.permute.xlu0 %405
    %407 = vrot.lane.b32.xlu0 %v178, 24
    %v408 = vpop.permute.xlu0 %407
    %409 = vrot.lane.b32.xlu0 %v179, 24
    %v410 = vpop.permute.xlu0 %409
    %411 = vrot.lane.b32.xlu0 %v180, 24
    %v412 = vpop.permute.xlu0 %411
    %413 = vrot.lane.b32.xlu0 %v181, 24
    %v414 = vpop.permute.xlu0 %413
    %415 = vrot.lane.b32.xlu0 %v182, 24
    %v416 = vpop.permute.xlu0 %415
    %417 = vrot.lane.b32.xlu0 %v183, 24
    %v418 = vpop.permute.xlu0 %417
    %419 = vrot.lane.b32.xlu0 %v184, 24
    %v420 = vpop.permute.xlu0 %419
    %421 = vrot.lane.b32.xlu0 %v185, 24
    %v422 = vpop.permute.xlu0 %421
    %423 = vrot.lane.b32.xlu0 %v186, 24
    %v424 = vpop.permute.xlu0 %423
    %425 = vrot.lane.b32.xlu0 %v187, 24
    %v426 = vpop.permute.xlu0 %425
    %427 = vrot.lane.b32.xlu0 %v188, 24
    %v428 = vpop.permute.xlu0 %427
    %429 = vrot.lane.b32.xlu0 %v402, 24
    %v430 = vpop.permute.xlu0 %429
    %v432 = vunpack.c.l.b16 %v113
    %v433 = vpack.c.b16 %v432, %v432
    %v435 = vshll.u32 %v402, 16
    %v437 = vrot.slane %v435, 1
    %v438 = vsel %vm192, %v303, %v437
    %v439 = vshrl.u32 %v402, 16
    %v441 = vor.u32 %v439, %v437
    %v443 = vshll.u32 %v433, 16
    %v445 = vrot.slane %v443, 1
    %v446 = vsel %vm192, %v441, %v445
    %447 = vrot.lane.b32.xlu0 %v212, 32
    %v448 = vpop.permute.xlu0 %447
    %449 = vrot.lane.b32.xlu0 %v220, 32
    %v450 = vpop.permute.xlu0 %449
    %451 = vrot.lane.b32.xlu0 %v228, 32
    %v452 = vpop.permute.xlu0 %451
    %453 = vrot.lane.b32.xlu0 %v236, 32
    %v454 = vpop.permute.xlu0 %453
    %455 = vrot.lane.b32.xlu0 %v244, 32
    %v456 = vpop.permute.xlu0 %455
    %457 = vrot.lane.b32.xlu0 %v252, 32
    %v458 = vpop.permute.xlu0 %457
    %459 = vrot.lane.b32.xlu0 %v260, 32
    %v460 = vpop.permute.xlu0 %459
    %461 = vrot.lane.b32.xlu0 %v268, 32
    %v462 = vpop.permute.xlu0 %461
    %463 = vrot.lane.b32.xlu0 %v276, 32
    %v464 = vpop.permute.xlu0 %463
    %465 = vrot.lane.b32.xlu0 %v284, 32
    %v466 = vpop.permute.xlu0 %465
    %467 = vrot.lane.b32.xlu0 %v292, 32
    %v468 = vpop.permute.xlu0 %467
    %469 = vrot.lane.b32.xlu0 %v300, 32
    %v470 = vpop.permute.xlu0 %469
    %471 = vrot.lane.b32.xlu0 %v438, 32
    %v472 = vpop.permute.xlu0 %471
    %473 = vrot.lane.b32.xlu0 %v446, 32
    %v474 = vpop.permute.xlu0 %473
    %v476 = vunpack.c.l.b16 %v114
    %v477 = vpack.c.b16 %v150, %v476
    %v478 = vrot.slane %v477, 1
    %v479 = vsel %vm340, %v478, %v344
    %v480 = vrot.slane %v402, 1
    %v481 = vsel %vm340, %v366, %v480
    %v482 = vrot.slane %v433, 1
    %v483 = vsel %vm340, %v480, %v482
    %484 = vrot.lane.b32.xlu0 %v479, 40
    %v485 = vpop.permute.xlu0 %484
    %486 = vrot.lane.b32.xlu0 %v347, 40
    %v487 = vpop.permute.xlu0 %486
    %488 = vrot.lane.b32.xlu0 %v349, 40
    %v489 = vpop.permute.xlu0 %488
    %490 = vrot.lane.b32.xlu0 %v351, 40
    %v491 = vpop.permute.xlu0 %490
    %492 = vrot.lane.b32.xlu0 %v353, 40
    %v493 = vpop.permute.xlu0 %492
    %494 = vrot.lane.b32.xlu0 %v355, 40
    %v495 = vpop.permute.xlu0 %494
    %496 = vrot.lane.b32.xlu0 %v357, 40
    %v497 = vpop.permute.xlu0 %496
    %498 = vrot.lane.b32.xlu0 %v359, 40
    %v499 = vpop.permute.xlu0 %498
    %500 = vrot.lane.b32.xlu0 %v361, 40
    %v501 = vpop.permute.xlu0 %500
    %502 = vrot.lane.b32.xlu0 %v363, 40
    %v503 = vpop.permute.xlu0 %502
    %504 = vrot.lane.b32.xlu0 %v365, 40
    %v505 = vpop.permute.xlu0 %504
    %506 = vrot.lane.b32.xlu0 %v367, 40
    %v507 = vpop.permute.xlu0 %506
    %508 = vrot.lane.b32.xlu0 %v481, 40
    %v509 = vpop.permute.xlu0 %508
    %510 = vrot.lane.b32.xlu0 %v483, 40
    %v511 = vpop.permute.xlu0 %510
    %v514 = vunpack.c.l.b16 %v115
    %v515 = vunpack.c.l.b16 %v116
    %v516 = vpack.c.b16 %v515, %v514
    %517 = vrot.lane.b32.xlu0 %v177, 48
    %v518 = vpop.permute.xlu0 %517
    %519 = vrot.lane.b32.xlu0 %v178, 48
    %v520 = vpop.permute.xlu0 %519
    %521 = vrot.lane.b32.xlu0 %v179, 48
    %v522 = vpop.permute.xlu0 %521
    %523 = vrot.lane.b32.xlu0 %v180, 48
    %v524 = vpop.permute.xlu0 %523
    %525 = vrot.lane.b32.xlu0 %v181, 48
    %v526 = vpop.permute.xlu0 %525
    %527 = vrot.lane.b32.xlu0 %v182, 48
    %v528 = vpop.permute.xlu0 %527
    %529 = vrot.lane.b32.xlu0 %v183, 48
    %v530 = vpop.permute.xlu0 %529
    %531 = vrot.lane.b32.xlu0 %v184, 48
    %v532 = vpop.permute.xlu0 %531
    %533 = vrot.lane.b32.xlu0 %v185, 48
    %v534 = vpop.permute.xlu0 %533
    %535 = vrot.lane.b32.xlu0 %v186, 48
    %v536 = vpop.permute.xlu0 %535
    %537 = vrot.lane.b32.xlu0 %v187, 48
    %v538 = vpop.permute.xlu0 %537
    %539 = vrot.lane.b32.xlu0 %v188, 48
    %v540 = vpop.permute.xlu0 %539
    %541 = vrot.lane.b32.xlu0 %v402, 48
    %v542 = vpop.permute.xlu0 %541
    %543 = vrot.lane.b32.xlu0 %v516, 48
    %v544 = vpop.permute.xlu0 %543
    %v546 = vunpack.c.l.b16 %v117
    %v547 = vpack.c.b16 %v546, %v546
    %v549 = vshll.u32 %v516, 16
    %v551 = vrot.slane %v549, 1
    %v552 = vsel %vm192, %v441, %v551
    %v553 = vshrl.u32 %v516, 16
    %v555 = vor.u32 %v553, %v551
    %v557 = vshll.u32 %v547, 16
    %v559 = vrot.slane %v557, 1
    %v560 = vsel %vm192, %v555, %v559
    %561 = vrot.lane.b32.xlu0 %v220, 56
    %v562 = vpop.permute.xlu0 %561
    %563 = vrot.lane.b32.xlu0 %v228, 56
    %v564 = vpop.permute.xlu0 %563
    %565 = vrot.lane.b32.xlu0 %v236, 56
    %v566 = vpop.permute.xlu0 %565
    %567 = vrot.lane.b32.xlu0 %v244, 56
    %v568 = vpop.permute.xlu0 %567
    %569 = vrot.lane.b32.xlu0 %v252, 56
    %v570 = vpop.permute.xlu0 %569
    %571 = vrot.lane.b32.xlu0 %v260, 56
    %v572 = vpop.permute.xlu0 %571
    %573 = vrot.lane.b32.xlu0 %v268, 56
    %v574 = vpop.permute.xlu0 %573
    %575 = vrot.lane.b32.xlu0 %v276, 56
    %v576 = vpop.permute.xlu0 %575
    %577 = vrot.lane.b32.xlu0 %v284, 56
    %v578 = vpop.permute.xlu0 %577
    %579 = vrot.lane.b32.xlu0 %v292, 56
    %v580 = vpop.permute.xlu0 %579
    %581 = vrot.lane.b32.xlu0 %v300, 56
    %v582 = vpop.permute.xlu0 %581
    %583 = vrot.lane.b32.xlu0 %v438, 56
    %v584 = vpop.permute.xlu0 %583
    %585 = vrot.lane.b32.xlu0 %v552, 56
    %v586 = vpop.permute.xlu0 %585
    %587 = vrot.lane.b32.xlu0 %v560, 56
    %v588 = vpop.permute.xlu0 %587
    %v590 = vunpack.c.l.b16 %v118
    %v591 = vpack.c.b16 %v152, %v590
    %v592 = vrot.slane %v591, 1
    %v593 = vsel %vm340, %v592, %v346
    %v594 = vrot.slane %v516, 1
    %v595 = vsel %vm340, %v480, %v594
    %v596 = vrot.slane %v547, 1
    %v597 = vsel %vm340, %v594, %v596
    %598 = vrot.lane.b32.xlu0 %v593, 64
    %v599 = vpop.permute.xlu0 %598
    %600 = vrot.lane.b32.xlu0 %v349, 64
    %v601 = vpop.permute.xlu0 %600
    %602 = vrot.lane.b32.xlu0 %v351, 64
    %v603 = vpop.permute.xlu0 %602
    %604 = vrot.lane.b32.xlu0 %v353, 64
    %v605 = vpop.permute.xlu0 %604
    %606 = vrot.lane.b32.xlu0 %v355, 64
    %v607 = vpop.permute.xlu0 %606
    %608 = vrot.lane.b32.xlu0 %v357, 64
    %v609 = vpop.permute.xlu0 %608
    %610 = vrot.lane.b32.xlu0 %v359, 64
    %v611 = vpop.permute.xlu0 %610
    %612 = vrot.lane.b32.xlu0 %v361, 64
    %v613 = vpop.permute.xlu0 %612
    %614 = vrot.lane.b32.xlu0 %v363, 64
    %v615 = vpop.permute.xlu0 %614
    %616 = vrot.lane.b32.xlu0 %v365, 64
    %v617 = vpop.permute.xlu0 %616
    %618 = vrot.lane.b32.xlu0 %v367, 64
    %v619 = vpop.permute.xlu0 %618
    %620 = vrot.lane.b32.xlu0 %v481, 64
    %v621 = vpop.permute.xlu0 %620
    %622 = vrot.lane.b32.xlu0 %v595, 64
    %v623 = vpop.permute.xlu0 %622
    %624 = vrot.lane.b32.xlu0 %v597, 64
    %v625 = vpop.permute.xlu0 %624
    %vm626 = vcmask 64512
    %v628 = vsel %vm626, %v175, %v310
    %v630 = vsel %vm626, %v176, %v312
    %v632 = vsel %vm626, %v177, %v314
    %v634 = vsel %vm626, %v178, %v316
    %v636 = vsel %vm626, %v179, %v318
    %v638 = vsel %vm626, %v180, %v320
    %v640 = vsel %vm626, %v181, %v322
    %v642 = vsel %vm626, %v182, %v324
    %v644 = vsel %vm626, %v183, %v326
    %v646 = vsel %vm626, %v184, %v328
    %v648 = vsel %vm626, %v185, %v330
    %v650 = vsel %vm626, %v186, %v332
    %v652 = vsel %vm626, %v187, %v334
    %v654 = vsel %vm626, %v188, %v336
    %vm655 = vcmask 130048
    %v657 = vsel %vm655, %v628, %v371
    %v659 = vsel %vm655, %v630, %v373
    %v661 = vsel %vm655, %v632, %v375
    %v663 = vsel %vm655, %v634, %v377
    %v665 = vsel %vm655, %v636, %v379
    %v667 = vsel %vm655, %v638, %v381
    %v669 = vsel %vm655, %v640, %v383
    %v671 = vsel %vm655, %v642, %v385
    %v673 = vsel %vm655, %v644, %v387
    %v675 = vsel %vm655, %v646, %v389
    %v677 = vsel %vm655, %v648, %v391
    %v679 = vsel %vm655, %v650, %v393
    %v681 = vsel %vm655, %v652, %v395
    %v683 = vsel %vm655, %v654, %v397
    %vm684 = vcmask 195584
    %v686 = vsel %vm684, %v657, %v404
    %v688 = vsel %vm684, %v659, %v406
    %v690 = vsel %vm684, %v661, %v408
    %v692 = vsel %vm684, %v663, %v410
    %v694 = vsel %vm684, %v665, %v412
    %v696 = vsel %vm684, %v667, %v414
    %v698 = vsel %vm684, %v669, %v416
    %v700 = vsel %vm684, %v671, %v418
    %v702 = vsel %vm684, %v673, %v420
    %v704 = vsel %vm684, %v675, %v422
    %v706 = vsel %vm684, %v677, %v424
    %v708 = vsel %vm684, %v679, %v426
    %v710 = vsel %vm684, %v681, %v428
    %v712 = vsel %vm684, %v683, %v430
    %vm713 = vcmask 261120
    %v715 = vsel %vm713, %v686, %v448
    %v717 = vsel %vm713, %v688, %v450
    %v719 = vsel %vm713, %v690, %v452
    %v721 = vsel %vm713, %v692, %v454
    %v723 = vsel %vm713, %v694, %v456
    %v725 = vsel %vm713, %v696, %v458
    %v727 = vsel %vm713, %v698, %v460
    %v729 = vsel %vm713, %v700, %v462
    %v731 = vsel %vm713, %v702, %v464
    %v733 = vsel %vm713, %v704, %v466
    %v735 = vsel %vm713, %v706, %v468
    %v737 = vsel %vm713, %v708, %v470
    %v739 = vsel %vm713, %v710, %v472
    %v741 = vsel %vm713, %v712, %v474
    %vm742 = vcmask 326656
    %v744 = vsel %vm742, %v715, %v485
    %v746 = vsel %vm742, %v717, %v487
    %v748 = vsel %vm742, %v719, %v489
    %v750 = vsel %vm742, %v721, %v491
    %v752 = vsel %vm742, %v723, %v493
    %v754 = vsel %vm742, %v725, %v495
    %v756 = vsel %vm742, %v727, %v497
    %v758 = vsel %vm742, %v729, %v499
    %v760 = vsel %vm742, %v731, %v501
    %v762 = vsel %vm742, %v733, %v503
    %v764 = vsel %vm742, %v735, %v505
    %v766 = vsel %vm742, %v737, %v507
    %v768 = vsel %vm742, %v739, %v509
    %v770 = vsel %vm742, %v741, %v511
    %vm771 = vcmask 392192
    %v773 = vsel %vm771, %v744, %v518
    %v775 = vsel %vm771, %v746, %v520
    %v777 = vsel %vm771, %v748, %v522
    %v779 = vsel %vm771, %v750, %v524
    %v781 = vsel %vm771, %v752, %v526
    %v783 = vsel %vm771, %v754, %v528
    %v785 = vsel %vm771, %v756, %v530
    %v787 = vsel %vm771, %v758, %v532
    %v789 = vsel %vm771, %v760, %v534
    %v791 = vsel %vm771, %v762, %v536
    %v793 = vsel %vm771, %v764, %v538
    %v795 = vsel %vm771, %v766, %v540
    %v797 = vsel %vm771, %v768, %v542
    %v799 = vsel %vm771, %v770, %v544
    %vm800 = vcmask 457728
    %v802 = vsel %vm800, %v773, %v562
    %v804 = vsel %vm800, %v775, %v564
    %v806 = vsel %vm800, %v777, %v566
    %v808 = vsel %vm800, %v779, %v568
    %v810 = vsel %vm800, %v781, %v570
    %v812 = vsel %vm800, %v783, %v572
    %v814 = vsel %vm800, %v785, %v574
    %v816 = vsel %vm800, %v787, %v576
    %v818 = vsel %vm800, %v789, %v578
    %v820 = vsel %vm800, %v791, %v580
    %v822 = vsel %vm800, %v793, %v582
    %v824 = vsel %vm800, %v795, %v584
    %v826 = vsel %vm800, %v797, %v586
    %v828 = vsel %vm800, %v799, %v588
    %vm829 = vcmask 523264
    %v831 = vsel %vm829, %v802, %v599
    %v833 = vsel %vm829, %v804, %v601
    %v835 = vsel %vm829, %v806, %v603
    %v837 = vsel %vm829, %v808, %v605
    %v839 = vsel %vm829, %v810, %v607
    %v841 = vsel %vm829, %v812, %v609
    %v843 = vsel %vm829, %v814, %v611
    %v845 = vsel %vm829, %v816, %v613
    %v847 = vsel %vm829, %v818, %v615
    %v849 = vsel %vm829, %v820, %v617
    %v851 = vsel %vm829, %v822, %v619
    %v853 = vsel %vm829, %v824, %v621
    %v855 = vsel %vm829, %v826, %v623
    %v857 = vsel %vm829, %v828, %v625
    %v867 = vunpack.c.l.b16 %v70
    %v868 = vunpack.c.l.b16 %v71
    %v869 = vunpack.c.l.b16 %v72
    %v870 = vunpack.c.l.b16 %v73
    %v871 = vunpack.c.l.b16 %v74
    %v872 = vunpack.c.l.b16 %v75
    %v873 = vunpack.c.l.b16 %v76
    %v874 = vunpack.c.l.b16 %v77
    %v875 = vunpack.c.l.b16 %v78
    %v876 = vpack.c.b16 %v868, %v867
    %v877 = vpack.c.b16 %v870, %v869
    %v878 = vpack.c.b16 %v872, %v871
    %v879 = vpack.c.b16 %v874, %v873
    %v880 = vpack.c.b16 %v875, %v875
    %vm885 = vcmask 588800
    %v886 = vsel %vm885, %v831, 0
    %v888 = vsel %vm885, %v833, 0
    %v890 = vsel %vm885, %v835, 0
    %v892 = vsel %vm885, %v837, 0
    %v894 = vsel %vm885, %v839, 0
    %v896 = vsel %vm885, %v841, 0
    %v898 = vsel %vm885, %v843, 0
    %v900 = vsel %vm885, %v845, 0
    %v902 = vsel %vm885, %v847, 0
    %v904 = vsel %vm885, %v849, 0
    %v906 = vsel %vm885, %v851, 0
    %v908 = vsel %vm885, %v853, 0
    %v910 = vsel %vm885, %v855, 0
    %v912 = vsel %vm885, %v857, 0
    %vm914 = vcmask 1043456
    %v916 = vsel %vm914, %v880, 0
    %918 = vmatprep.subr.bf16.mxu0 0
    %919 = vmatpush1.bf16.msra.mxu0 %v876
    %920 = vmatprep.subr.bf16.mxu0 0
    %921 = vmatpush1.bf16.msra.mxu0 %v877
    %922 = vmatprep.subr.bf16.mxu0 0
    %923 = vmatpush1.bf16.msra.mxu0 %v878
    %924 = vmatprep.subr.bf16.mxu0 0
    %925 = vmatpush1.bf16.msra.mxu0 %v879
    %926 = vmatprep.subr.bf16.mxu0 0
    %927 = vmatpush1.bf16.msra.mxu0 %v916
    %928 = vmatprep.subr.bf16.mxu0 0
    %929 = vmatpush1.bf16.msra.mxu0 0
    %930 = vmatprep.subr.bf16.mxu0 0
    %931 = vmatpush1.bf16.msra.mxu0 0
    %932 = vmatprep.subr.bf16.mxu0 0
    %933 = vmatpush1.bf16.msra.mxu0 0
    %934 = vmatprep.subr.bf16.mxu0 0
    %935 = vmatpush1.bf16.msra.mxu0 0
    %936 = vmatprep.subr.bf16.mxu0 0
    %937 = vmatpush1.bf16.msra.mxu0 0
    %938 = vmatprep.subr.bf16.mxu0 0
    %939 = vmatpush1.bf16.msra.mxu0 0
    %940 = vmatprep.subr.bf16.mxu0 0
    %941 = vmatpush1.bf16.msra.mxu0 0
    %942 = vmatprep.subr.bf16.mxu0 0
    %943 = vmatpush1.bf16.msra.mxu0 0
    %944 = vmatprep.subr.bf16.mxu0 0
    %945 = vmatpush1.bf16.msra.mxu0 0
    %946 = vmatprep.subr.bf16.mxu0 0
    %947 = vmatpush1.bf16.msra.mxu0 0
    %948 = vmatprep.subr.bf16.mxu0 0
    %949 = vmatpush1.bf16.msra.mxu0 0
    %950 = vmatprep.mubr.bf16.mxu0 0
    %951 = vmatmul.mubr.bf16.gmra.mrb[0].mxu0 %v886
    %v952 = vpop.f32.mrb[0].mxu0
    %v953 = vadd.f32 0.0, %v952
    %v954 = vpop.f32.mrb[0].mxu0
    %v955 = vpop.f32.mrb[0].mxu0
    %v956 = vadd.f32 0.0, %v955
    %v957 = vpop.f32.mrb[0].mxu0
    %958 = vmatprep.mubr.bf16.mxu0 0
    %959 = vmatmul.mubr.bf16.gmra.mrb[0].mxu0 %v888
    %v960 = vpop.f32.mrb[0].mxu0
    %v961 = vadd.f32 0.0, %v960
    %v962 = vpop.f32.mrb[0].mxu0
    %v963 = vpop.f32.mrb[0].mxu0
    %v964 = vadd.f32 0.0, %v963
    %v965 = vpop.f32.mrb[0].mxu0
    %966 = vmatprep.mubr.bf16.mxu0 0
    %967 = vmatmul.mubr.bf16.gmra.mrb[0].mxu0 %v890
    %v968 = vpop.f32.mrb[0].mxu0
    %v969 = vadd.f32 0.0, %v968
    %v970 = vpop.f32.mrb[0].mxu0
    %v971 = vpop.f32.mrb[0].mxu0
    %v972 = vadd.f32 0.0, %v971
    %v973 = vpop.f32.mrb[0].mxu0
    %974 = vmatprep.mubr.bf16.mxu0 0
    %975 = vmatmul.mubr.bf16.gmra.mrb[0].mxu0 %v892
    %v976 = vpop.f32.mrb[0].mxu0
    %v977 = vadd.f32 0.0, %v976
    %v978 = vpop.f32.mrb[0].mxu0
    %v979 = vpop.f32.mrb[0].mxu0
    %v980 = vadd.f32 0.0, %v979
    %v981 = vpop.f32.mrb[0].mxu0
    %982 = vmatprep.mubr.bf16.mxu0 0
    %983 = vmatmul.mubr.bf16.gmra.mrb[0].mxu0 %v894
    %v984 = vpop.f32.mrb[0].mxu0
    %v985 = vadd.f32 0.0, %v984
    %v986 = vpop.f32.mrb[0].mxu0
    %v987 = vpop.f32.mrb[0].mxu0
    %v988 = vadd.f32 0.0, %v987
    %v989 = vpop.f32.mrb[0].mxu0
    %990 = vmatprep.mubr.bf16.mxu0 0
    %991 = vmatmul.mubr.bf16.gmra.mrb[0].mxu0 %v896
    %v992 = vpop.f32.mrb[0].mxu0
    %v993 = vadd.f32 0.0, %v992
    %v994 = vpop.f32.mrb[0].mxu0
    %v995 = vpop.f32.mrb[0].mxu0
    %v996 = vadd.f32 0.0, %v995
    %v997 = vpop.f32.mrb[0].mxu0
    %998 = vmatprep.mubr.bf16.mxu0 0
    %999 = vmatmul.mubr.bf16.gmra.mrb[0].mxu0 %v898
    %v1000 = vpop.f32.mrb[0].mxu0
    %v1001 = vadd.f32 0.0, %v1000
    %v1002 = vpop.f32.mrb[0].mxu0
    %v1003 = vpop.f32.mrb[0].mxu0
    %v1004 = vadd.f32 0.0, %v1003
    %v1005 = vpop.f32.mrb[0].mxu0
    %1006 = vmatprep.mubr.bf16.mxu0 0
    %1007 = vmatmul.mubr.bf16.gmra.mrb[0].mxu0 %v900
    %v1008 = vpop.f32.mrb[0].mxu0
    %v1009 = vadd.f32 0.0, %v1008
    %v1010 = vpop.f32.mrb[0].mxu0
    %v1011 = vpop.f32.mrb[0].mxu0
    %v1012 = vadd.f32 0.0, %v1011
    %v1013 = vpop.f32.mrb[0].mxu0
    %1014 = vmatprep.mubr.bf16.mxu0 0
    %1015 = vmatmul.mubr.bf16.gmra.mrb[0].mxu0 %v902
    %v1016 = vpop.f32.mrb[0].mxu0
    %v1017 = vadd.f32 0.0, %v1016
    %v1018 = vpop.f32.mrb[0].mxu0
    %v1019 = vpop.f32.mrb[0].mxu0
    %v1020 = vadd.f32 0.0, %v1019
    %v1021 = vpop.f32.mrb[0].mxu0
    %1022 = vmatprep.mubr.bf16.mxu0 0
    %1023 = vmatmul.mubr.bf16.gmra.mrb[0].mxu0 %v904
    %v1024 = vpop.f32.mrb[0].mxu0
    %v1025 = vadd.f32 0.0, %v1024
    %v1026 = vpop.f32.mrb[0].mxu0
    %v1027 = vpop.f32.mrb[0].mxu0
    %v1028 = vadd.f32 0.0, %v1027
    %v1029 = vpop.f32.mrb[0].mxu0
    %1030 = vmatprep.mubr.bf16.mxu0 0
    %1031 = vmatmul.mubr.bf16.gmra.mrb[0].mxu0 %v906
    %v1032 = vpop.f32.mrb[0].mxu0
    %v1033 = vadd.f32 0.0, %v1032
    %v1034 = vpop.f32.mrb[0].mxu0
    %v1035 = vpop.f32.mrb[0].mxu0
    %v1036 = vadd.f32 0.0, %v1035
    %v1037 = vpop.f32.mrb[0].mxu0
    %1038 = vmatprep.mubr.bf16.mxu0 0
    %1039 = vmatmul.mubr.bf16.gmra.mrb[0].mxu0 %v908
    %v1040 = vpop.f32.mrb[0].mxu0
    %v1041 = vadd.f32 0.0, %v1040
    %v1042 = vpop.f32.mrb[0].mxu0
    %v1043 = vpop.f32.mrb[0].mxu0
    %v1044 = vadd.f32 0.0, %v1043
    %v1045 = vpop.f32.mrb[0].mxu0
    %1046 = vmatprep.mubr.bf16.mxu0 0
    %1047 = vmatmul.mubr.bf16.gmra.mrb[0].mxu0 %v910
    %v1048 = vpop.f32.mrb[0].mxu0
    %v1049 = vadd.f32 0.0, %v1048
    %v1050 = vpop.f32.mrb[0].mxu0
    %v1051 = vpop.f32.mrb[0].mxu0
    %v1052 = vadd.f32 0.0, %v1051
    %v1053 = vpop.f32.mrb[0].mxu0
    %1054 = vmatprep.mubr.bf16.mxu0 0
    %1055 = vmatmul.mubr.bf16.gmra.mrb[0].mxu0 %v912
    %v1056 = vpop.f32.mrb[0].mxu0
    %v1057 = vadd.f32 0.0, %v1056
    %v1058 = vpop.f32.mrb[0].mxu0
    %v1059 = vpop.f32.mrb[0].mxu0
    %v1060 = vadd.f32 0.0, %v1059
    %v1061 = vpop.f32.mrb[0].mxu0
    %1062 = vdwg.mxu0
    %v1064 = vlaneseq
    %v1065 = vshrl.u32 %v1064, 7
    %v1066 = vsub.s32 0, %v1065
    %v1067 = vrot.slane %v79, %v1066
    %v1069 = vmul.f32 %v953, %v1067
    %v1070 = vmul.f32 %v956, %v1067
    %v1071 = vmul.f32 %v961, %v1067
    %v1072 = vmul.f32 %v964, %v1067
    %v1073 = vmul.f32 %v969, %v1067
    %v1074 = vmul.f32 %v972, %v1067
    %v1075 = vmul.f32 %v977, %v1067
    %v1076 = vmul.f32 %v980, %v1067
    %v1077 = vmul.f32 %v985, %v1067
    %v1078 = vmul.f32 %v988, %v1067
    %v1079 = vmul.f32 %v993, %v1067
    %v1080 = vmul.f32 %v996, %v1067
    %v1081 = vmul.f32 %v1001, %v1067
    %v1082 = vmul.f32 %v1004, %v1067
    %v1083 = vmul.f32 %v1009, %v1067
    %v1084 = vmul.f32 %v1012, %v1067
    %v1085 = vmul.f32 %v1017, %v1067
    %v1086 = vmul.f32 %v1020, %v1067
    %v1087 = vmul.f32 %v1025, %v1067
    %v1088 = vmul.f32 %v1028, %v1067
    %v1089 = vmul.f32 %v1033, %v1067
    %v1090 = vmul.f32 %v1036, %v1067
    %v1091 = vmul.f32 %v1041, %v1067
    %v1092 = vmul.f32 %v1044, %v1067
    %v1093 = vmul.f32 %v1049, %v1067
    %v1094 = vmul.f32 %v1052, %v1067
    %v1095 = vmul.f32 %v1057, %v1067
    %v1096 = vmul.f32 %v1060, %v1067
    %v1098 = vlaneseq
    %v1099 = vshrl.u32 %v1098, 7
    %v1100 = vsub.s32 0, %v1099
    %v1101 = vrot.slane %v80, %v1100
    %v1103 = vadd.f32 %v1069, %v1101
    %v1104 = vadd.f32 %v1070, %v1101
    %v1105 = vadd.f32 %v1071, %v1101
    %v1106 = vadd.f32 %v1072, %v1101
    %v1107 = vadd.f32 %v1073, %v1101
    %v1108 = vadd.f32 %v1074, %v1101
    %v1109 = vadd.f32 %v1075, %v1101
    %v1110 = vadd.f32 %v1076, %v1101
    %v1111 = vadd.f32 %v1077, %v1101
    %v1112 = vadd.f32 %v1078, %v1101
    %v1113 = vadd.f32 %v1079, %v1101
    %v1114 = vadd.f32 %v1080, %v1101
    %v1115 = vadd.f32 %v1081, %v1101
    %v1116 = vadd.f32 %v1082, %v1101
    %v1117 = vadd.f32 %v1083, %v1101
    %v1118 = vadd.f32 %v1084, %v1101
    %v1119 = vadd.f32 %v1085, %v1101
    %v1120 = vadd.f32 %v1086, %v1101
    %v1121 = vadd.f32 %v1087, %v1101
    %v1122 = vadd.f32 %v1088, %v1101
    %v1123 = vadd.f32 %v1089, %v1101
    %v1124 = vadd.f32 %v1090, %v1101
    %v1125 = vadd.f32 %v1091, %v1101
    %v1126 = vadd.f32 %v1092, %v1101
    %v1127 = vadd.f32 %v1093, %v1101
    %v1128 = vadd.f32 %v1094, %v1101
    %v1129 = vadd.f32 %v1095, %v1101
    %v1130 = vadd.f32 %v1096, %v1101
    %vm1131 = vcmp.gt.f32.partialorder %v1103, 0.0
    %vm1132 = vcmp.gt.f32.partialorder %v1104, 0.0
    %vm1133 = vcmp.gt.f32.partialorder %v1105, 0.0
    %vm1134 = vcmp.gt.f32.partialorder %v1106, 0.0
    %vm1135 = vcmp.gt.f32.partialorder %v1107, 0.0
    %vm1136 = vcmp.gt.f32.partialorder %v1108, 0.0
    %vm1137 = vcmp.gt.f32.partialorder %v1109, 0.0
    %vm1138 = vcmp.gt.f32.partialorder %v1110, 0.0
    %vm1139 = vcmp.gt.f32.partialorder %v1111, 0.0
    %vm1140 = vcmp.gt.f32.partialorder %v1112, 0.0
    %vm1141 = vcmp.gt.f32.partialorder %v1113, 0.0
    %vm1142 = vcmp.gt.f32.partialorder %v1114, 0.0
    %vm1143 = vcmp.gt.f32.partialorder %v1115, 0.0
    %vm1144 = vcmp.gt.f32.partialorder %v1116, 0.0
    %vm1145 = vcmp.gt.f32.partialorder %v1117, 0.0
    %vm1146 = vcmp.gt.f32.partialorder %v1118, 0.0
    %vm1147 = vcmp.gt.f32.partialorder %v1119, 0.0
    %vm1148 = vcmp.gt.f32.partialorder %v1120, 0.0
    %vm1149 = vcmp.gt.f32.partialorder %v1121, 0.0
    %vm1150 = vcmp.gt.f32.partialorder %v1122, 0.0
    %vm1151 = vcmp.gt.f32.partialorder %v1123, 0.0
    %vm1152 = vcmp.gt.f32.partialorder %v1124, 0.0
    %vm1153 = vcmp.gt.f32.partialorder %v1125, 0.0
    %vm1154 = vcmp.gt.f32.partialorder %v1126, 0.0
    %vm1155 = vcmp.gt.f32.partialorder %v1127, 0.0
    %vm1156 = vcmp.gt.f32.partialorder %v1128, 0.0
    %vm1157 = vcmp.gt.f32.partialorder %v1129, 0.0
    %vm1158 = vcmp.gt.f32.partialorder %v1130, 0.0
    %v1159 = vmul.f32 %v1103, 0.01
    %v1160 = vmul.f32 %v1104, 0.01
    %v1161 = vmul.f32 %v1105, 0.01
    %v1162 = vmul.f32 %v1106, 0.01
    %v1163 = vmul.f32 %v1107, 0.01
    %v1164 = vmul.f32 %v1108, 0.01
    %v1165 = vmul.f32 %v1109, 0.01
    %v1166 = vmul.f32 %v1110, 0.01
    %v1167 = vmul.f32 %v1111, 0.01
    %v1168 = vmul.f32 %v1112, 0.01
    %v1169 = vmul.f32 %v1113, 0.01
    %v1170 = vmul.f32 %v1114, 0.01
    %v1171 = vmul.f32 %v1115, 0.01
    %v1172 = vmul.f32 %v1116, 0.01
    %v1173 = vmul.f32 %v1117, 0.01
    %v1174 = vmul.f32 %v1118, 0.01
    %v1175 = vmul.f32 %v1119, 0.01
    %v1176 = vmul.f32 %v1120, 0.01
    %v1177 = vmul.f32 %v1121, 0.01
    %v1178 = vmul.f32 %v1122, 0.01
    %v1179 = vmul.f32 %v1123, 0.01
    %v1180 = vmul.f32 %v1124, 0.01
    %v1181 = vmul.f32 %v1125, 0.01
    %v1182 = vmul.f32 %v1126, 0.01
    %v1183 = vmul.f32 %v1127, 0.01
    %v1184 = vmul.f32 %v1128, 0.01
    %v1185 = vmul.f32 %v1129, 0.01
    %v1186 = vmul.f32 %v1130, 0.01
    %v1187 = vsel %vm1131, %v1103, %v1159
    %v1188 = vsel %vm1132, %v1104, %v1160
    %v1189 = vsel %vm1133, %v1105, %v1161
    %v1190 = vsel %vm1134, %v1106, %v1162
    %v1191 = vsel %vm1135, %v1107, %v1163
    %v1192 = vsel %vm1136, %v1108, %v1164
    %v1193 = vsel %vm1137, %v1109, %v1165
    %v1194 = vsel %vm1138, %v1110, %v1166
    %v1195 = vsel %vm1139, %v1111, %v1167
    %v1196 = vsel %vm1140, %v1112, %v1168
    %v1197 = vsel %vm1141, %v1113, %v1169
    %v1198 = vsel %vm1142, %v1114, %v1170
    %v1199 = vsel %vm1143, %v1115, %v1171
    %v1200 = vsel %vm1144, %v1116, %v1172
    %v1201 = vsel %vm1145, %v1117, %v1173
    %v1202 = vsel %vm1146, %v1118, %v1174
    %v1203 = vsel %vm1147, %v1119, %v1175
    %v1204 = vsel %vm1148, %v1120, %v1176
    %v1205 = vsel %vm1149, %v1121, %v1177
    %v1206 = vsel %vm1150, %v1122, %v1178
    %v1207 = vsel %vm1151, %v1123, %v1179
    %v1208 = vsel %vm1152, %v1124, %v1180
    %v1209 = vsel %vm1153, %v1125, %v1181
    %v1210 = vsel %vm1154, %v1126, %v1182
    %v1211 = vsel %vm1155, %v1127, %v1183
    %v1212 = vsel %vm1156, %v1128, %v1184
    %v1213 = vsel %vm1157, %v1129, %v1185
    %v1214 = vsel %vm1158, %v1130, %v1186
    %1215 = vst.msk [vmem:[#allocation10] sm:$0xff] %vm626, %v1187
    %1216 = vst.msk [vmem:[#allocation10 + $0x8] sm:$0xff] %vm626, %v1188
    %1217 = vst.msk [vmem:[#allocation10 + $0x10] sm:$0xff] %vm626, %v1189
    %1218 = vst.msk [vmem:[#allocation10 + $0x18] sm:$0xff] %vm626, %v1190
    %1219 = vst.msk [vmem:[#allocation10 + $0x20] sm:$0xff] %vm626, %v1191
    %1220 = vst.msk [vmem:[#allocation10 + $0x28] sm:$0xff] %vm626, %v1192
    %1221 = vst.msk [vmem:[#allocation10 + $0x30] sm:$0xff] %vm626, %v1193
    %1222 = vst.msk [vmem:[#allocation10 + $0x38] sm:$0xff] %vm626, %v1194
    %1223 = vst.msk [vmem:[#allocation10 + $0x40] sm:$0xff] %vm626, %v1195
    %1224 = vst.msk [vmem:[#allocation10 + $0x48] sm:$0xff] %vm626, %v1196
    %1225 = vst.msk [vmem:[#allocation10 + $0x50] sm:$0xff] %vm626, %v1197
    %1226 = vst.msk [vmem:[#allocation10 + $0x58] sm:$0xff] %vm626, %v1198
    %1227 = vst.msk [vmem:[#allocation10 + $0x60] sm:$0xff] %vm626, %v1199
    %1228 = vst.msk [vmem:[#allocation10 + $0x68] sm:$0xff] %vm626, %v1200
    %1229 = vst.msk [vmem:[#allocation10 + $0x70] sm:$0xff] %vm626, %v1201
    %1230 = vst.msk [vmem:[#allocation10 + $0x78] sm:$0xff] %vm626, %v1202
    %1231 = vst.msk [vmem:[#allocation10 + $0x80] sm:$0xff] %vm626, %v1203
    %1232 = vst.msk [vmem:[#allocation10 + $0x88] sm:$0xff] %vm626, %v1204
    %1233 = vst.msk [vmem:[#allocation10 + $0x90] sm:$0xff] %vm626, %v1205
    %1234 = vst.msk [vmem:[#allocation10 + $0x98] sm:$0xff] %vm626, %v1206
    %1235 = vst.msk [vmem:[#allocation10 + $0xa0] sm:$0xff] %vm626, %v1207
    %1236 = vst.msk [vmem:[#allocation10 + $0xa8] sm:$0xff] %vm626, %v1208
    %1237 = vst.msk [vmem:[#allocation10 + $0xb0] sm:$0xff] %vm626, %v1209
    %1238 = vst.msk [vmem:[#allocation10 + $0xb8] sm:$0xff] %vm626, %v1210
    %1239 = vst.msk [vmem:[#allocation10 + $0xc0] sm:$0xff] %vm626, %v1211
    %1240 = vst.msk [vmem:[#allocation10 + $0xc8] sm:$0xff] %vm626, %v1212
    %1241 = vst.msk [vmem:[#allocation10 + $0xd0] sm:$0xff] %vm626, %v1213
    %1242 = vst.msk [vmem:[#allocation10 + $0xd8] sm:$0xff] %vm626, %v1214
    %s1243 = scalar_lea.vmem [#allocation2], 136
    %v1244 = vld [vmem:[%s1243] sm:$0xf]
    %v1245 = vld [vmem:[%s1243 + $0x4] sm:$0xf]
    %v1246 = vld [vmem:[%s1243 + $0x8] sm:$0xf]
    %v1247 = vld [vmem:[%s1243 + $0xc] sm:$0xf]
    %v1248 = vld [vmem:[%s1243 + $0x10] sm:$0xf]
    %v1249 = vld [vmem:[%s1243 + $0x14] sm:$0xf]
    %v1250 = vld [vmem:[%s1243 + $0x18] sm:$0xf]
    %v1251 = vld [vmem:[%s1243 + $0x1c] sm:$0xf]
    %v1252 = vld [vmem:[%s1243 + $0x20] sm:$0xf]
    %v1253 = vld [vmem:[%s1243 + $0x24] sm:$0xf]
    %v1254 = vld [vmem:[%s1243 + $0x28] sm:$0xf]
    %v1255 = vld [vmem:[%s1243 + $0x2c] sm:$0xf]
    %v1256 = vld [vmem:[%s1243 + $0x30] sm:$0xf]
    %v1257 = vld [vmem:[%s1243 + $0x34] sm:$0xf]
    %v1258 = vld [vmem:[%s1243 + $0x38] sm:$0xf]
    %v1259 = vld [vmem:[%s1243 + $0x3c] sm:$0xf]
    %v1260 = vld [vmem:[%s1243 + $0x40] sm:$0xf]
    %v1261 = vld [vmem:[%s1243 + $0x44] sm:$0xf]
    %v1262 = vld [vmem:[%s1243 + $0x48] sm:$0xf]
    %v1263 = vld [vmem:[%s1243 + $0x4c] sm:$0xf]
    %v1264 = vld [vmem:[%s1243 + $0x50] sm:$0xf]
    %v1265 = vld [vmem:[%s1243 + $0x54] sm:$0xf]
    %v1266 = vld [vmem:[%s1243 + $0x58] sm:$0xf]
    %v1267 = vld [vmem:[%s1243 + $0x5c] sm:$0xf]
    %v1268 = vld [vmem:[%s1243 + $0x60] sm:$0xf]
    %v1269 = vld [vmem:[%s1243 + $0x64] sm:$0xf]
    %v1270 = vld [vmem:[%s1243 + $0x68] sm:$0xf]
    %v1271 = vld [vmem:[%s1243 + $0x6c] sm:$0xf]
    %v1272 = vld [vmem:[%s1243 + $0x70] sm:$0x1]
    %v1273 = vld [vmem:[%s1243] sm:$0xe]
    %v1274 = vld [vmem:[%s1243 + $0x70] sm:$0xf]
    %v1275 = vld [vmem:[%s1243 + $0x74] sm:$0xf]
    %v1276 = vld [vmem:[%s1243 + $0x78] sm:$0x1]
    %v1277 = vld [vmem:[%s1243 + $0x8] sm:$0xe]
    %v1278 = vld [vmem:[%s1243 + $0x78] sm:$0xf]
    %v1279 = vld [vmem:[%s1243 + $0x7c] sm:$0xf]
    %v1280 = vld [vmem:[%s1243 + $0x80] sm:$0x1]
    %v1281 = vld [vmem:[%s1243 + $0x10] sm:$0xe]
    %v1310 = vunpack.c.l.b16 %v1244
    %v1311 = vunpack.c.l.b16 %v1245
    %v1312 = vunpack.c.l.b16 %v1246
    %v1313 = vunpack.c.l.b16 %v1247
    %v1314 = vunpack.c.l.b16 %v1248
    %v1315 = vunpack.c.l.b16 %v1249
    %v1316 = vunpack.c.l.b16 %v1250
    %v1317 = vunpack.c.l.b16 %v1251
    %v1318 = vunpack.c.l.b16 %v1252
    %v1319 = vunpack.c.l.b16 %v1253
    %v1320 = vunpack.c.l.b16 %v1254
    %v1321 = vunpack.c.l.b16 %v1255
    %v1322 = vunpack.c.l.b16 %v1256
    %v1323 = vunpack.c.l.b16 %v1257
    %v1324 = vunpack.c.l.b16 %v1258
    %v1325 = vunpack.c.l.b16 %v1259
    %v1326 = vunpack.c.l.b16 %v1260
    %v1327 = vunpack.c.l.b16 %v1261
    %v1328 = vunpack.c.l.b16 %v1262
    %v1329 = vunpack.c.l.b16 %v1263
    %v1330 = vunpack.c.l.b16 %v1264
    %v1331 = vunpack.c.l.b16 %v1265
    %v1332 = vunpack.c.l.b16 %v1266
    %v1333 = vunpack.c.l.b16 %v1267
    %v1334 = vunpack.c.l.b16 %v1268
    %v1335 = vunpack.c.l.b16 %v1269
    %v1336 = vunpack.c.l.b16 %v1270
    %v1337 = vunpack.c.l.b16 %v1271
    %v1338 = vpack.c.b16 %v1311, %v1310
    %v1339 = vpack.c.b16 %v1313, %v1312
    %v1340 = vpack.c.b16 %v1315, %v1314
    %v1341 = vpack.c.b16 %v1317, %v1316
    %v1342 = vpack.c.b16 %v1319, %v1318
    %v1343 = vpack.c.b16 %v1321, %v1320
    %v1344 = vpack.c.b16 %v1323, %v1322
    %v1345 = vpack.c.b16 %v1325, %v1324
    %v1346 = vpack.c.b16 %v1327, %v1326
    %v1347 = vpack.c.b16 %v1329, %v1328
    %v1348 = vpack.c.b16 %v1331, %v1330
    %v1349 = vpack.c.b16 %v1333, %v1332
    %v1350 = vpack.c.b16 %v1335, %v1334
    %v1351 = vpack.c.b16 %v1337, %v1336
    %v1353 = vunpack.c.l.b16 %v1272
    %v1354 = vpack.c.b16 %v1353, %v1353
    %v1356 = vshrl.u32 %v1338, 16
    %v1358 = vshll.u32 %v1338, 16
    %v1360 = vrot.slane %v1358, 1
    %v1361 = vor.u32 %v1356, %v1360
    %v1363 = vshll.u32 %v1339, 16
    %v1365 = vrot.slane %v1363, 1
    %v1366 = vsel %vm192, %v1361, %v1365
    %v1367 = vshrl.u32 %v1339, 16
    %v1369 = vor.u32 %v1367, %v1365
    %v1371 = vshll.u32 %v1340, 16
    %v1373 = vrot.slane %v1371, 1
    %v1374 = vsel %vm192, %v1369, %v1373
    %v1375 = vshrl.u32 %v1340, 16
    %v1377 = vor.u32 %v1375, %v1373
    %v1379 = vshll.u32 %v1341, 16
    %v1381 = vrot.slane %v1379, 1
    %v1382 = vsel %vm192, %v1377, %v1381
    %v1383 = vshrl.u32 %v1341, 16
    %v1385 = vor.u32 %v1383, %v1381
    %v1387 = vshll.u32 %v1342, 16
    %v1389 = vrot.slane %v1387, 1
    %v1390 = vsel %vm192, %v1385, %v1389
    %v1391 = vshrl.u32 %v1342, 16
    %v1393 = vor.u32 %v1391, %v1389
    %v1395 = vshll.u32 %v1343, 16
    %v1397 = vrot.slane %v1395, 1
    %v1398 = vsel %vm192, %v1393, %v1397
    %v1399 = vshrl.u32 %v1343, 16
    %v1401 = vor.u32 %v1399, %v1397
    %v1403 = vshll.u32 %v1344, 16
    %v1405 = vrot.slane %v1403, 1
    %v1406 = vsel %vm192, %v1401, %v1405
    %v1407 = vshrl.u32 %v1344, 16
    %v1409 = vor.u32 %v1407, %v1405
    %v1411 = vshll.u32 %v1345, 16
    %v1413 = vrot.slane %v1411, 1
    %v1414 = vsel %vm192, %v1409, %v1413
    %v1415 = vshrl.u32 %v1345, 16
    %v1417 = vor.u32 %v1415, %v1413
    %v1419 = vshll.u32 %v1346, 16
    %v1421 = vrot.slane %v1419, 1
    %v1422 = vsel %vm192, %v1417, %v1421
    %v1423 = vshrl.u32 %v1346, 16
    %v1425 = vor.u32 %v1423, %v1421
    %v1427 = vshll.u32 %v1347, 16
    %v1429 = vrot.slane %v1427, 1
    %v1430 = vsel %vm192, %v1425, %v1429
    %v1431 = vshrl.u32 %v1347, 16
    %v1433 = vor.u32 %v1431, %v1429
    %v1435 = vshll.u32 %v1348, 16
    %v1437 = vrot.slane %v1435, 1
    %v1438 = vsel %vm192, %v1433, %v1437
    %v1439 = vshrl.u32 %v1348, 16
    %v1441 = vor.u32 %v1439, %v1437
    %v1443 = vshll.u32 %v1349, 16
    %v1445 = vrot.slane %v1443, 1
    %v1446 = vsel %vm192, %v1441, %v1445
    %v1447 = vshrl.u32 %v1349, 16
    %v1449 = vor.u32 %v1447, %v1445
    %v1451 = vshll.u32 %v1350, 16
    %v1453 = vrot.slane %v1451, 1
    %v1454 = vsel %vm192, %v1449, %v1453
    %v1455 = vshrl.u32 %v1350, 16
    %v1457 = vor.u32 %v1455, %v1453
    %v1459 = vshll.u32 %v1351, 16
    %v1461 = vrot.slane %v1459, 1
    %v1462 = vsel %vm192, %v1457, %v1461
    %v1463 = vshrl.u32 %v1351, 16
    %v1465 = vor.u32 %v1463, %v1461
    %v1467 = vshll.u32 %v1354, 16
    %v1469 = vrot.slane %v1467, 1
    %v1470 = vsel %vm192, %v1465, %v1469
    %1471 = vrot.lane.b32.xlu0 %v1366, 8
    %v1472 = vpop.permute.xlu0 %1471
    %1473 = vrot.lane.b32.xlu0 %v1374, 8
    %v1474 = vpop.permute.xlu0 %1473
    %1475 = vrot.lane.b32.xlu0 %v1382, 8
    %v1476 = vpop.permute.xlu0 %1475
    %1477 = vrot.lane.b32.xlu0 %v1390, 8
    %v1478 = vpop.permute.xlu0 %1477
    %1479 = vrot.lane.b32.xlu0 %v1398, 8
    %v1480 = vpop.permute.xlu0 %1479
    %1481 = vrot.lane.b32.xlu0 %v1406, 8
    %v1482 = vpop.permute.xlu0 %1481
    %1483 = vrot.lane.b32.xlu0 %v1414, 8
    %v1484 = vpop.permute.xlu0 %1483
    %1485 = vrot.lane.b32.xlu0 %v1422, 8
    %v1486 = vpop.permute.xlu0 %1485
    %1487 = vrot.lane.b32.xlu0 %v1430, 8
    %v1488 = vpop.permute.xlu0 %1487
    %1489 = vrot.lane.b32.xlu0 %v1438, 8
    %v1490 = vpop.permute.xlu0 %1489
    %1491 = vrot.lane.b32.xlu0 %v1446, 8
    %v1492 = vpop.permute.xlu0 %1491
    %1493 = vrot.lane.b32.xlu0 %v1454, 8
    %v1494 = vpop.permute.xlu0 %1493
    %1495 = vrot.lane.b32.xlu0 %v1462, 8
    %v1496 = vpop.permute.xlu0 %1495
    %1497 = vrot.lane.b32.xlu0 %v1470, 8
    %v1498 = vpop.permute.xlu0 %1497
    %v1500 = vunpack.c.l.b16 %v1273
    %v1501 = vpack.c.b16 %v1311, %v1500
    %v1502 = vrot.slane %v1501, 1
    %v1503 = vrot.slane %v1339, 1
    %v1504 = vsel %vm340, %v1502, %v1503
    %v1505 = vrot.slane %v1340, 1
    %v1506 = vsel %vm340, %v1503, %v1505
    %v1507 = vrot.slane %v1341, 1
    %v1508 = vsel %vm340, %v1505, %v1507
    %v1509 = vrot.slane %v1342, 1
    %v1510 = vsel %vm340, %v1507, %v1509
    %v1511 = vrot.slane %v1343, 1
    %v1512 = vsel %vm340, %v1509, %v1511
    %v1513 = vrot.slane %v1344, 1
    %v1514 = vsel %vm340, %v1511, %v1513
    %v1515 = vrot.slane %v1345, 1
    %v1516 = vsel %vm340, %v1513, %v1515
    %v1517 = vrot.slane %v1346, 1
    %v1518 = vsel %vm340, %v1515, %v1517
    %v1519 = vrot.slane %v1347, 1
    %v1520 = vsel %vm340, %v1517, %v1519
    %v1521 = vrot.slane %v1348, 1
    %v1522 = vsel %vm340, %v1519, %v1521
    %v1523 = vrot.slane %v1349, 1
    %v1524 = vsel %vm340, %v1521, %v1523
    %v1525 = vrot.slane %v1350, 1
    %v1526 = vsel %vm340, %v1523, %v1525
    %v1527 = vrot.slane %v1351, 1
    %v1528 = vsel %vm340, %v1525, %v1527
    %v1529 = vrot.slane %v1354, 1
    %v1530 = vsel %vm340, %v1527, %v1529
    %1531 = vrot.lane.b32.xlu0 %v1504, 16
    %v1532 = vpop.permute.xlu0 %1531
    %1533 = vrot.lane.b32.xlu0 %v1506, 16
    %v1534 = vpop.permute.xlu0 %1533
    %1535 = vrot.lane.b32.xlu0 %v1508, 16
    %v1536 = vpop.permute.xlu0 %1535
    %1537 = vrot.lane.b32.xlu0 %v1510, 16
    %v1538 = vpop.permute.xlu0 %1537
    %1539 = vrot.lane.b32.xlu0 %v1512, 16
    %v1540 = vpop.permute.xlu0 %1539
    %1541 = vrot.lane.b32.xlu0 %v1514, 16
    %v1542 = vpop.permute.xlu0 %1541
    %1543 = vrot.lane.b32.xlu0 %v1516, 16
    %v1544 = vpop.permute.xlu0 %1543
    %1545 = vrot.lane.b32.xlu0 %v1518, 16
    %v1546 = vpop.permute.xlu0 %1545
    %1547 = vrot.lane.b32.xlu0 %v1520, 16
    %v1548 = vpop.permute.xlu0 %1547
    %1549 = vrot.lane.b32.xlu0 %v1522, 16
    %v1550 = vpop.permute.xlu0 %1549
    %1551 = vrot.lane.b32.xlu0 %v1524, 16
    %v1552 = vpop.permute.xlu0 %1551
    %1553 = vrot.lane.b32.xlu0 %v1526, 16
    %v1554 = vpop.permute.xlu0 %1553
    %1555 = vrot.lane.b32.xlu0 %v1528, 16
    %v1556 = vpop.permute.xlu0 %1555
    %1557 = vrot.lane.b32.xlu0 %v1530, 16
    %v1558 = vpop.permute.xlu0 %1557
    %v1561 = vunpack.c.l.b16 %v1274
    %v1562 = vunpack.c.l.b16 %v1275
    %v1563 = vpack.c.b16 %v1562, %v1561
    %1564 = vrot.lane.b32.xlu0 %v1339, 24
    %v1565 = vpop.permute.xlu0 %1564
    %1566 = vrot.lane.b32.xlu0 %v1340, 24
    %v1567 = vpop.permute.xlu0 %1566
    %1568 = vrot.lane.b32.xlu0 %v1341, 24
    %v1569 = vpop.permute.xlu0 %1568
    %1570 = vrot.lane.b32.xlu0 %v1342, 24
    %v1571 = vpop.permute.xlu0 %1570
    %1572 = vrot.lane.b32.xlu0 %v1343, 24
    %v1573 = vpop.permute.xlu0 %1572
    %1574 = vrot.lane.b32.xlu0 %v1344, 24
    %v1575 = vpop.permute.xlu0 %1574
    %1576 = vrot.lane.b32.xlu0 %v1345, 24
    %v1577 = vpop.permute.xlu0 %1576
    %1578 = vrot.lane.b32.xlu0 %v1346, 24
    %v1579 = vpop.permute.xlu0 %1578
    %1580 = vrot.lane.b32.xlu0 %v1347, 24
    %v1581 = vpop.permute.xlu0 %1580
    %1582 = vrot.lane.b32.xlu0 %v1348, 24
    %v1583 = vpop.permute.xlu0 %1582
    %1584 = vrot.lane.b32.xlu0 %v1349, 24
    %v1585 = vpop.permute.xlu0 %1584
    %1586 = vrot.lane.b32.xlu0 %v1350, 24
    %v1587 = vpop.permute.xlu0 %1586
    %1588 = vrot.lane.b32.xlu0 %v1351, 24
    %v1589 = vpop.permute.xlu0 %1588
    %1590 = vrot.lane.b32.xlu0 %v1563, 24
    %v1591 = vpop.permute.xlu0 %1590
    %v1593 = vunpack.c.l.b16 %v1276
    %v1594 = vpack.c.b16 %v1593, %v1593
    %v1596 = vshll.u32 %v1563, 16
    %v1598 = vrot.slane %v1596, 1
    %v1599 = vsel %vm192, %v1465, %v1598
    %v1600 = vshrl.u32 %v1563, 16
    %v1602 = vor.u32 %v1600, %v1598
    %v1604 = vshll.u32 %v1594, 16
    %v1606 = vrot.slane %v1604, 1
    %v1607 = vsel %vm192, %v1602, %v1606
    %1608 = vrot.lane.b32.xlu0 %v1374, 32
    %v1609 = vpop.permute.xlu0 %1608
    %1610 = vrot.lane.b32.xlu0 %v1382, 32
    %v1611 = vpop.permute.xlu0 %1610
    %1612 = vrot.lane.b32.xlu0 %v1390, 32
    %v1613 = vpop.permute.xlu0 %1612
    %1614 = vrot.lane.b32.xlu0 %v1398, 32
    %v1615 = vpop.permute.xlu0 %1614
    %1616 = vrot.lane.b32.xlu0 %v1406, 32
    %v1617 = vpop.permute.xlu0 %1616
    %1618 = vrot.lane.b32.xlu0 %v1414, 32
    %v1619 = vpop.permute.xlu0 %1618
    %1620 = vrot.lane.b32.xlu0 %v1422, 32
    %v1621 = vpop.permute.xlu0 %1620
    %1622 = vrot.lane.b32.xlu0 %v1430, 32
    %v1623 = vpop.permute.xlu0 %1622
    %1624 = vrot.lane.b32.xlu0 %v1438, 32
    %v1625 = vpop.permute.xlu0 %1624
    %1626 = vrot.lane.b32.xlu0 %v1446, 32
    %v1627 = vpop.permute.xlu0 %1626
    %1628 = vrot.lane.b32.xlu0 %v1454, 32
    %v1629 = vpop.permute.xlu0 %1628
    %1630 = vrot.lane.b32.xlu0 %v1462, 32
    %v1631 = vpop.permute.xlu0 %1630
    %1632 = vrot.lane.b32.xlu0 %v1599, 32
    %v1633 = vpop.permute.xlu0 %1632
    %1634 = vrot.lane.b32.xlu0 %v1607, 32
    %v1635 = vpop.permute.xlu0 %1634
    %v1637 = vunpack.c.l.b16 %v1277
    %v1638 = vpack.c.b16 %v1313, %v1637
    %v1639 = vrot.slane %v1638, 1
    %v1640 = vsel %vm340, %v1639, %v1505
    %v1641 = vrot.slane %v1563, 1
    %v1642 = vsel %vm340, %v1527, %v1641
    %v1643 = vrot.slane %v1594, 1
    %v1644 = vsel %vm340, %v1641, %v1643
    %1645 = vrot.lane.b32.xlu0 %v1640, 40
    %v1646 = vpop.permute.xlu0 %1645
    %1647 = vrot.lane.b32.xlu0 %v1508, 40
    %v1648 = vpop.permute.xlu0 %1647
    %1649 = vrot.lane.b32.xlu0 %v1510, 40
    %v1650 = vpop.permute.xlu0 %1649
    %1651 = vrot.lane.b32.xlu0 %v1512, 40
    %v1652 = vpop.permute.xlu0 %1651
    %1653 = vrot.lane.b32.xlu0 %v1514, 40
    %v1654 = vpop.permute.xlu0 %1653
    %1655 = vrot.lane.b32.xlu0 %v1516, 40
    %v1656 = vpop.permute.xlu0 %1655
    %1657 = vrot.lane.b32.xlu0 %v1518, 40
    %v1658 = vpop.permute.xlu0 %1657
    %1659 = vrot.lane.b32.xlu0 %v1520, 40
    %v1660 = vpop.permute.xlu0 %1659
    %1661 = vrot.lane.b32.xlu0 %v1522, 40
    %v1662 = vpop.permute.xlu0 %1661
    %1663 = vrot.lane.b32.xlu0 %v1524, 40
    %v1664 = vpop.permute.xlu0 %1663
    %1665 = vrot.lane.b32.xlu0 %v1526, 40
    %v1666 = vpop.permute.xlu0 %1665
    %1667 = vrot.lane.b32.xlu0 %v1528, 40
    %v1668 = vpop.permute.xlu0 %1667
    %1669 = vrot.lane.b32.xlu0 %v1642, 40
    %v1670 = vpop.permute.xlu0 %1669
    %1671 = vrot.lane.b32.xlu0 %v1644, 40
    %v1672 = vpop.permute.xlu0 %1671
    %v1675 = vunpack.c.l.b16 %v1278
    %v1676 = vunpack.c.l.b16 %v1279
    %v1677 = vpack.c.b16 %v1676, %v1675
    %1678 = vrot.lane.b32.xlu0 %v1340, 48
    %v1679 = vpop.permute.xlu0 %1678
    %1680 = vrot.lane.b32.xlu0 %v1341, 48
    %v1681 = vpop.permute.xlu0 %1680
    %1682 = vrot.lane.b32.xlu0 %v1342, 48
    %v1683 = vpop.permute.xlu0 %1682
    %1684 = vrot.lane.b32.xlu0 %v1343, 48
    %v1685 = vpop.permute.xlu0 %1684
    %1686 = vrot.lane.b32.xlu0 %v1344, 48
    %v1687 = vpop.permute.xlu0 %1686
    %1688 = vrot.lane.b32.xlu0 %v1345, 48
    %v1689 = vpop.permute.xlu0 %1688
    %1690 = vrot.lane.b32.xlu0 %v1346, 48
    %v1691 = vpop.permute.xlu0 %1690
    %1692 = vrot.lane.b32.xlu0 %v1347, 48
    %v1693 = vpop.permute.xlu0 %1692
    %1694 = vrot.lane.b32.xlu0 %v1348, 48
    %v1695 = vpop.permute.xlu0 %1694
    %1696 = vrot.lane.b32.xlu0 %v1349, 48
    %v1697 = vpop.permute.xlu0 %1696
    %1698 = vrot.lane.b32.xlu0 %v1350, 48
    %v1699 = vpop.permute.xlu0 %1698
    %1700 = vrot.lane.b32.xlu0 %v1351, 48
    %v1701 = vpop.permute.xlu0 %1700
    %1702 = vrot.lane.b32.xlu0 %v1563, 48
    %v1703 = vpop.permute.xlu0 %1702
    %1704 = vrot.lane.b32.xlu0 %v1677, 48
    %v1705 = vpop.permute.xlu0 %1704
    %v1707 = vunpack.c.l.b16 %v1280
    %v1708 = vpack.c.b16 %v1707, %v1707
    %v1710 = vshll.u32 %v1677, 16
    %v1712 = vrot.slane %v1710, 1
    %v1713 = vsel %vm192, %v1602, %v1712
    %v1714 = vshrl.u32 %v1677, 16
    %v1716 = vor.u32 %v1714, %v1712
    %v1718 = vshll.u32 %v1708, 16
    %v1720 = vrot.slane %v1718, 1
    %v1721 = vsel %vm192, %v1716, %v1720
    %1722 = vrot.lane.b32.xlu0 %v1382, 56
    %v1723 = vpop.permute.xlu0 %1722
    %1724 = vrot.lane.b32.xlu0 %v1390, 56
    %v1725 = vpop.permute.xlu0 %1724
    %1726 = vrot.lane.b32.xlu0 %v1398, 56
    %v1727 = vpop.permute.xlu0 %1726
    %1728 = vrot.lane.b32.xlu0 %v1406, 56
    %v1729 = vpop.permute.xlu0 %1728
    %1730 = vrot.lane.b32.xlu0 %v1414, 56
    %v1731 = vpop.permute.xlu0 %1730
    %1732 = vrot.lane.b32.xlu0 %v1422, 56
    %v1733 = vpop.permute.xlu0 %1732
    %1734 = vrot.lane.b32.xlu0 %v1430, 56
    %v1735 = vpop.permute.xlu0 %1734
    %1736 = vrot.lane.b32.xlu0 %v1438, 56
    %v1737 = vpop.permute.xlu0 %1736
    %1738 = vrot.lane.b32.xlu0 %v1446, 56
    %v1739 = vpop.permute.xlu0 %1738
    %1740 = vrot.lane.b32.xlu0 %v1454, 56
    %v1741 = vpop.permute.xlu0 %1740
    %1742 = vrot.lane.b32.xlu0 %v1462, 56
    %v1743 = vpop.permute.xlu0 %1742
    %1744 = vrot.lane.b32.xlu0 %v1599, 56
    %v1745 = vpop.permute.xlu0 %1744
    %1746 = vrot.lane.b32.xlu0 %v1713, 56
    %v1747 = vpop.permute.xlu0 %1746
    %1748 = vrot.lane.b32.xlu0 %v1721, 56
    %v1749 = vpop.permute.xlu0 %1748
    %v1751 = vunpack.c.l.b16 %v1281
    %v1752 = vpack.c.b16 %v1315, %v1751
    %v1753 = vrot.slane %v1752, 1
    %v1754 = vsel %vm340, %v1753, %v1507
    %v1755 = vrot.slane %v1677, 1
    %v1756 = vsel %vm340, %v1641, %v1755
    %v1757 = vrot.slane %v1708, 1
    %v1758 = vsel %vm340, %v1755, %v1757
    %1759 = vrot.lane.b32.xlu0 %v1754, 64
    %v1760 = vpop.permute.xlu0 %1759
    %1761 = vrot.lane.b32.xlu0 %v1510, 64
    %v1762 = vpop.permute.xlu0 %1761
    %1763 = vrot.lane.b32.xlu0 %v1512, 64
    %v1764 = vpop.permute.xlu0 %1763
    %1765 = vrot.lane.b32.xlu0 %v1514, 64
    %v1766 = vpop.permute.xlu0 %1765
    %1767 = vrot.lane.b32.xlu0 %v1516, 64
    %v1768 = vpop.permute.xlu0 %1767
    %1769 = vrot.lane.b32.xlu0 %v1518, 64
    %v1770 = vpop.permute.xlu0 %1769
    %1771 = vrot.lane.b32.xlu0 %v1520, 64
    %v1772 = vpop.permute.xlu0 %1771
    %1773 = vrot.lane.b32.xlu0 %v1522, 64
    %v1774 = vpop.permute.xlu0 %1773
    %1775 = vrot.lane.b32.xlu0 %v1524, 64
    %v1776 = vpop.permute.xlu0 %1775
    %1777 = vrot.lane.b32.xlu0 %v1526, 64
    %v1778 = vpop.permute.xlu0 %1777
    %1779 = vrot.lane.b32.xlu0 %v1528, 64
    %v1780 = vpop.permute.xlu0 %1779
    %1781 = vrot.lane.b32.xlu0 %v1642, 64
    %v1782 = vpop.permute.xlu0 %1781
    %1783 = vrot.lane.b32.xlu0 %v1756, 64
    %v1784 = vpop.permute.xlu0 %1783
    %1785 = vrot.lane.b32.xlu0 %v1758, 64
    %v1786 = vpop.permute.xlu0 %1785
    %v1788 = vsel %vm626, %v1338, %v1472
    %v1790 = vsel %vm626, %v1339, %v1474
    %v1792 = vsel %vm626, %v1340, %v1476
    %v1794 = vsel %vm626, %v1341, %v1478
    %v1796 = vsel %vm626, %v1342, %v1480
    %v1798 = vsel %vm626, %v1343, %v1482
    %v1800 = vsel %vm626, %v1344, %v1484
    %v1802 = vsel %vm626, %v1345, %v1486
    %v1804 = vsel %vm626, %v1346, %v1488
    %v1806 = vsel %vm626, %v1347, %v1490
    %v1808 = vsel %vm626, %v1348, %v1492
    %v1810 = vsel %vm626, %v1349, %v1494
    %v1812 = vsel %vm626, %v1350, %v1496
    %v1814 = vsel %vm626, %v1351, %v1498
    %v1816 = vsel %vm655, %v1788, %v1532
    %v1818 = vsel %vm655, %v1790, %v1534
    %v1820 = vsel %vm655, %v1792, %v1536
    %v1822 = vsel %vm655, %v1794, %v1538
    %v1824 = vsel %vm655, %v1796, %v1540
    %v1826 = vsel %vm655, %v1798, %v1542
    %v1828 = vsel %vm655, %v1800, %v1544
    %v1830 = vsel %vm655, %v1802, %v1546
    %v1832 = vsel %vm655, %v1804, %v1548
    %v1834 = vsel %vm655, %v1806, %v1550
    %v1836 = vsel %vm655, %v1808, %v1552
    %v1838 = vsel %vm655, %v1810, %v1554
    %v1840 = vsel %vm655, %v1812, %v1556
    %v1842 = vsel %vm655, %v1814, %v1558
    %v1844 = vsel %vm684, %v1816, %v1565
    %v1846 = vsel %vm684, %v1818, %v1567
    %v1848 = vsel %vm684, %v1820, %v1569
    %v1850 = vsel %vm684, %v1822, %v1571
    %v1852 = vsel %vm684, %v1824, %v1573
    %v1854 = vsel %vm684, %v1826, %v1575
    %v1856 = vsel %vm684, %v1828, %v1577
    %v1858 = vsel %vm684, %v1830, %v1579
    %v1860 = vsel %vm684, %v1832, %v1581
    %v1862 = vsel %vm684, %v1834, %v1583
    %v1864 = vsel %vm684, %v1836, %v1585
    %v1866 = vsel %vm684, %v1838, %v1587
    %v1868 = vsel %vm684, %v1840, %v1589
    %v1870 = vsel %vm684, %v1842, %v1591
    %v1872 = vsel %vm713, %v1844, %v1609
    %v1874 = vsel %vm713, %v1846, %v1611
    %v1876 = vsel %vm713, %v1848, %v1613
    %v1878 = vsel %vm713, %v1850, %v1615
    %v1880 = vsel %vm713, %v1852, %v1617
    %v1882 = vsel %vm713, %v1854, %v1619
    %v1884 = vsel %vm713, %v1856, %v1621
    %v1886 = vsel %vm713, %v1858, %v1623
    %v1888 = vsel %vm713, %v1860, %v1625
    %v1890 = vsel %vm713, %v1862, %v1627
    %v1892 = vsel %vm713, %v1864, %v1629
    %v1894 = vsel %vm713, %v1866, %v1631
    %v1896 = vsel %vm713, %v1868, %v1633
    %v1898 = vsel %vm713, %v1870, %v1635
    %v1900 = vsel %vm742, %v1872, %v1646
    %v1902 = vsel %vm742, %v1874, %v1648
    %v1904 = vsel %vm742, %v1876, %v1650
    %v1906 = vsel %vm742, %v1878, %v1652
    %v1908 = vsel %vm742, %v1880, %v1654
    %v1910 = vsel %vm742, %v1882, %v1656
    %v1912 = vsel %vm742, %v1884, %v1658
    %v1914 = vsel %vm742, %v1886, %v1660
    %v1916 = vsel %vm742, %v1888, %v1662
    %v1918 = vsel %vm742, %v1890, %v1664
    %v1920 = vsel %vm742, %v1892, %v1666
    %v1922 = vsel %vm742, %v1894, %v1668
    %v1924 = vsel %vm742, %v1896, %v1670
    %v1926 = vsel %vm742, %v1898, %v1672
    %v1928 = vsel %vm771, %v1900, %v1679
    %v1930 = vsel %vm771, %v1902, %v1681
    %v1932 = vsel %vm771, %v1904, %v1683
    %v1934 = vsel %vm771, %v1906, %v1685
    %v1936 = vsel %vm771, %v1908, %v1687
    %v1938 = vsel %vm771, %v1910, %v1689
    %v1940 = vsel %vm771, %v1912, %v1691
    %v1942 = vsel %vm771, %v1914, %v1693
    %v1944 = vsel %vm771, %v1916, %v1695
    %v1946 = vsel %vm771, %v1918, %v1697
    %v1948 = vsel %vm771, %v1920, %v1699
    %v1950 = vsel %vm771, %v1922, %v1701
    %v1952 = vsel %vm771, %v1924, %v1703
    %v1954 = vsel %vm771, %v1926, %v1705
    %v1956 = vsel %vm800, %v1928, %v1723
    %v1958 = vsel %vm800, %v1930, %v1725
    %v1960 = vsel %vm800, %v1932, %v1727
    %v1962 = vsel %vm800, %v1934, %v1729
    %v1964 = vsel %vm800, %v1936, %v1731
    %v1966 = vsel %vm800, %v1938, %v1733
    %v1968 = vsel %vm800, %v1940, %v1735
    %v1970 = vsel %vm800, %v1942, %v1737
    %v1972 = vsel %vm800, %v1944, %v1739
    %v1974 = vsel %vm800, %v1946, %v1741
    %v1976 = vsel %vm800, %v1948, %v1743
    %v1978 = vsel %vm800, %v1950, %v1745
    %v1980 = vsel %vm800, %v1952, %v1747
    %v1982 = vsel %vm800, %v1954, %v1749
    %v1984 = vsel %vm829, %v1956, %v1760
    %v1986 = vsel %vm829, %v1958, %v1762
    %v1988 = vsel %vm829, %v1960, %v1764
    %v1990 = vsel %vm829, %v1962, %v1766
    %v1992 = vsel %vm829, %v1964, %v1768
    %v1994 = vsel %vm829, %v1966, %v1770
    %v1996 = vsel %vm829, %v1968, %v1772
    %v1998 = vsel %vm829, %v1970, %v1774
    %v2000 = vsel %vm829, %v1972, %v1776
    %v2002 = vsel %vm829, %v1974, %v1778
    %v2004 = vsel %vm829, %v1976, %v1780
    %v2006 = vsel %vm829, %v1978, %v1782
    %v2008 = vsel %vm829, %v1980, %v1784
    %v2010 = vsel %vm829, %v1982, %v1786
    %v2011 = vsel %vm885, %v1984, 0
    %v2013 = vsel %vm885, %v1986, 0
    %v2015 = vsel %vm885, %v1988, 0
    %v2017 = vsel %vm885, %v1990, 0
    %v2019 = vsel %vm885, %v1992, 0
    %v2021 = vsel %vm885, %v1994, 0
    %v2023 = vsel %vm885, %v1996, 0
    %v2025 = vsel %vm885, %v1998, 0
    %v2027 = vsel %vm885, %v2000, 0
    %v2029 = vsel %vm885, %v2002, 0
    %v2031 = vsel %vm885, %v2004, 0
    %v2033 = vsel %vm885, %v2006, 0
    %v2035 = vsel %vm885, %v2008, 0
    %v2037 = vsel %vm885, %v2010, 0
    %2039 = vmatprep.subr.bf16.mxu0 0
    %2040 = vmatpush1.bf16.msra.mxu0 %v876
    %2041 = vmatprep.subr.bf16.mxu0 0
    %2042 = vmatpush1.bf16.msra.mxu0 %v877
    %2043 = vmatprep.subr.bf16.mxu0 0
    %2044 = vmatpush1.bf16.msra.mxu0 %v878
    %2045 = vmatprep.subr.bf16.mxu0 0
    %2046 = vmatpush1.bf16.msra.mxu0 %v879
    %2047 = vmatprep.subr.bf16.mxu0 0
    %2048 = vmatpush1.bf16.msra.mxu0 %v916
    %2049 = vmatprep.subr.bf16.mxu0 0
    %2050 = vmatpush1.bf16.msra.mxu0 0
    %2051 = vmatprep.subr.bf16.mxu0 0
    %2052 = vmatpush1.bf16.msra.mxu0 0
    %2053 = vmatprep.subr.bf16.mxu0 0
    %2054 = vmatpush1.bf16.msra.mxu0 0
    %2055 = vmatprep.subr.bf16.mxu0 0
    %2056 = vmatpush1.bf16.msra.mxu0 0
    %2057 = vmatprep.subr.bf16.mxu0 0
    %2058 = vmatpush1.bf16.msra.mxu0 0
    %2059 = vmatprep.subr.bf16.mxu0 0
    %2060 = vmatpush1.bf16.msra.mxu0 0
    %2061 = vmatprep.subr.bf16.mxu0 0
    %2062 = vmatpush1.bf16.msra.mxu0 0
    %2063 = vmatprep.subr.bf16.mxu0 0
    %2064 = vmatpush1.bf16.msra.mxu0 0
    %2065 = vmatprep.subr.bf16.mxu0 0
    %2066 = vmatpush1.bf16.msra.mxu0 0
    %2067 = vmatprep.subr.bf16.mxu0 0
    %2068 = vmatpush1.bf16.msra.mxu0 0
    %2069 = vmatprep.subr.bf16.mxu0 0
    %2070 = vmatpush1.bf16.msra.mxu0 0
    %2071 = vmatprep.mubr.bf16.mxu0 0
    %2072 = vmatmul.mubr.bf16.gmra.mrb[0].mxu0 %v2011
    %v2073 = vpop.f32.mrb[0].mxu0
    %v2074 = vadd.f32 0.0, %v2073
    %v2075 = vpop.f32.mrb[0].mxu0
    %v2076 = vpop.f32.mrb[0].mxu0
    %v2077 = vadd.f32 0.0, %v2076
    %v2078 = vpop.f32.mrb[0].mxu0
    %2079 = vmatprep.mubr.bf16.mxu0 0
    %2080 = vmatmul.mubr.bf16.gmra.mrb[0].mxu0 %v2013
    %v2081 = vpop.f32.mrb[0].mxu0
    %v2082 = vadd.f32 0.0, %v2081
    %v2083 = vpop.f32.mrb[0].mxu0
    %v2084 = vpop.f32.mrb[0].mxu0
    %v2085 = vadd.f32 0.0, %v2084
    %v2086 = vpop.f32.mrb[0].mxu0
    %2087 = vmatprep.mubr.bf16.mxu0 0
    %2088 = vmatmul.mubr.bf16.gmra.mrb[0].mxu0 %v2015
    %v2089 = vpop.f32.mrb[0].mxu0
    %v2090 = vadd.f32 0.0, %v2089
    %v2091 = vpop.f32.mrb[0].mxu0
    %v2092 = vpop.f32.mrb[0].mxu0
    %v2093 = vadd.f32 0.0, %v2092
    %v2094 = vpop.f32.mrb[0].mxu0
    %2095 = vmatprep.mubr.bf16.mxu0 0
    %2096 = vmatmul.mubr.bf16.gmra.mrb[0].mxu0 %v2017
    %v2097 = vpop.f32.mrb[0].mxu0
    %v2098 = vadd.f32 0.0, %v2097
    %v2099 = vpop.f32.mrb[0].mxu0
    %v2100 = vpop.f32.mrb[0].mxu0
    %v2101 = vadd.f32 0.0, %v2100
    %v2102 = vpop.f32.mrb[0].mxu0
    %2103 = vmatprep.mubr.bf16.mxu0 0
    %2104 = vmatmul.mubr.bf16.gmra.mrb[0].mxu0 %v2019
    %v2105 = vpop.f32.mrb[0].mxu0
    %v2106 = vadd.f32 0.0, %v2105
    %v2107 = vpop.f32.mrb[0].mxu0
    %v2108 = vpop.f32.mrb[0].mxu0
    %v2109 = vadd.f32 0.0, %v2108
    %v2110 = vpop.f32.mrb[0].mxu0
    %2111 = vmatprep.mubr.bf16.mxu0 0
    %2112 = vmatmul.mubr.bf16.gmra.mrb[0].mxu0 %v2021
    %v2113 = vpop.f32.mrb[0].mxu0
    %v2114 = vadd.f32 0.0, %v2113
    %v2115 = vpop.f32.mrb[0].mxu0
    %v2116 = vpop.f32.mrb[0].mxu0
    %v2117 = vadd.f32 0.0, %v2116
    %v2118 = vpop.f32.mrb[0].mxu0
    %2119 = vmatprep.mubr.bf16.mxu0 0
    %2120 = vmatmul.mubr.bf16.gmra.mrb[0].mxu0 %v2023
    %v2121 = vpop.f32.mrb[0].mxu0
    %v2122 = vadd.f32 0.0, %v2121
    %v2123 = vpop.f32.mrb[0].mxu0
    %v2124 = vpop.f32.mrb[0].mxu0
    %v2125 = vadd.f32 0.0, %v2124
    %v2126 = vpop.f32.mrb[0].mxu0
    %2127 = vmatprep.mubr.bf16.mxu0 0
    %2128 = vmatmul.mubr.bf16.gmra.mrb[0].mxu0 %v2025
    %v2129 = vpop.f32.mrb[0].mxu0
    %v2130 = vadd.f32 0.0, %v2129
    %v2131 = vpop.f32.mrb[0].mxu0
    %v2132 = vpop.f32.mrb[0].mxu0
    %v2133 = vadd.f32 0.0, %v2132
    %v2134 = vpop.f32.mrb[0].mxu0
    %2135 = vmatprep.mubr.bf16.mxu0 0
    %2136 = vmatmul.mubr.bf16.gmra.mrb[0].mxu0 %v2027
    %v2137 = vpop.f32.mrb[0].mxu0
    %v2138 = vadd.f32 0.0, %v2137
    %v2139 = vpop.f32.mrb[0].mxu0
    %v2140 = vpop.f32.mrb[0].mxu0
    %v2141 = vadd.f32 0.0, %v2140
    %v2142 = vpop.f32.mrb[0].mxu0
    %2143 = vmatprep.mubr.bf16.mxu0 0
    %2144 = vmatmul.mubr.bf16.gmra.mrb[0].mxu0 %v2029
    %v2145 = vpop.f32.mrb[0].mxu0
    %v2146 = vadd.f32 0.0, %v2145
    %v2147 = vpop.f32.mrb[0].mxu0
    %v2148 = vpop.f32.mrb[0].mxu0
    %v2149 = vadd.f32 0.0, %v2148
    %v2150 = vpop.f32.mrb[0].mxu0
    %2151 = vmatprep.mubr.bf16.mxu0 0
    %2152 = vmatmul.mubr.bf16.gmra.mrb[0].mxu0 %v2031
    %v2153 = vpop.f32.mrb[0].mxu0
    %v2154 = vadd.f32 0.0, %v2153
    %v2155 = vpop.f32.mrb[0].mxu0
    %v2156 = vpop.f32.mrb[0].mxu0
    %v2157 = vadd.f32 0.0, %v2156
    %v2158 = vpop.f32.mrb[0].mxu0
    %2159 = vmatprep.mubr.bf16.mxu0 0
    %2160 = vmatmul.mubr.bf16.gmra.mrb[0].mxu0 %v2033
    %v2161 = vpop.f32.mrb[0].mxu0
    %v2162 = vadd.f32 0.0, %v2161
    %v2163 = vpop.f32.mrb[0].mxu0
    %v2164 = vpop.f32.mrb[0].mxu0
    %v2165 = vadd.f32 0.0, %v2164
    %v2166 = vpop.f32.mrb[0].mxu0
    %2167 = vmatprep.mubr.bf16.mxu0 0
    %2168 = vmatmul.mubr.bf16.gmra.mrb[0].mxu0 %v2035
    %v2169 = vpop.f32.mrb[0].mxu0
    %v2170 = vadd.f32 0.0, %v2169
    %v2171 = vpop.f32.mrb[0].mxu0
    %v2172 = vpop.f32.mrb[0].mxu0
    %v2173 = vadd.f32 0.0, %v2172
    %v2174 = vpop.f32.mrb[0].mxu0
    %2175 = vmatprep.mubr.bf16.mxu0 0
    %2176 = vmatmul.mubr.bf16.gmra.mrb[0].mxu0 %v2037
    %v2177 = vpop.f32.mrb[0].mxu0
    %v2178 = vadd.f32 0.0, %v2177
    %v2179 = vpop.f32.mrb[0].mxu0
    %v2180 = vpop.f32.mrb[0].mxu0
    %v2181 = vadd.f32 0.0, %v2180
    %v2182 = vpop.f32.mrb[0].mxu0
    %2183 = vdwg.mxu0
    %v2184 = vmul.f32 %v2074, %v1067
    %v2185 = vmul.f32 %v2077, %v1067
    %v2186 = vmul.f32 %v2082, %v1067
    %v2187 = vmul.f32 %v2085, %v1067
    %v2188 = vmul.f32 %v2090, %v1067
    %v2189 = vmul.f32 %v2093, %v1067
    %v2190 = vmul.f32 %v2098, %v1067
    %v2191 = vmul.f32 %v2101, %v1067
    %v2192 = vmul.f32 %v2106, %v1067
    %v2193 = vmul.f32 %v2109, %v1067
    %v2194 = vmul.f32 %v2114, %v1067
    %v2195 = vmul.f32 %v2117, %v1067
    %v2196 = vmul.f32 %v2122, %v1067
    %v2197 = vmul.f32 %v2125, %v1067
    %v2198 = vmul.f32 %v2130, %v1067
    %v2199 = vmul.f32 %v2133, %v1067
    %v2200 = vmul.f32 %v2138, %v1067
    %v2201 = vmul.f32 %v2141, %v1067
    %v2202 = vmul.f32 %v2146, %v1067
    %v2203 = vmul.f32 %v2149, %v1067
    %v2204 = vmul.f32 %v2154, %v1067
    %v2205 = vmul.f32 %v2157, %v1067
    %v2206 = vmul.f32 %v2162, %v1067
    %v2207 = vmul.f32 %v2165, %v1067
    %v2208 = vmul.f32 %v2170, %v1067
    %v2209 = vmul.f32 %v2173, %v1067
    %v2210 = vmul.f32 %v2178, %v1067
    %v2211 = vmul.f32 %v2181, %v1067
    %v2212 = vadd.f32 %v2184, %v1101
    %v2213 = vadd.f32 %v2185, %v1101
    %v2214 = vadd.f32 %v2186, %v1101
    %v2215 = vadd.f32 %v2187, %v1101
    %v2216 = vadd.f32 %v2188, %v1101
    %v2217 = vadd.f32 %v2189, %v1101
    %v2218 = vadd.f32 %v2190, %v1101
    %v2219 = vadd.f32 %v2191, %v1101
    %v2220 = vadd.f32 %v2192, %v1101
    %v2221 = vadd.f32 %v2193, %v1101
    %v2222 = vadd.f32 %v2194, %v1101
    %v2223 = vadd.f32 %v2195, %v1101
    %v2224 = vadd.f32 %v2196, %v1101
    %v2225 = vadd.f32 %v2197, %v1101
    %v2226 = vadd.f32 %v2198, %v1101
    %v2227 = vadd.f32 %v2199, %v1101
    %v2228 = vadd.f32 %v2200, %v1101
    %v2229 = vadd.f32 %v2201, %v1101
    %v2230 = vadd.f32 %v2202, %v1101
    %v2231 = vadd.f32 %v2203, %v1101
    %v2232 = vadd.f32 %v2204, %v1101
    %v2233 = vadd.f32 %v2205, %v1101
    %v2234 = vadd.f32 %v2206, %v1101
    %v2235 = vadd.f32 %v2207, %v1101
    %v2236 = vadd.f32 %v2208, %v1101
    %v2237 = vadd.f32 %v2209, %v1101
    %v2238 = vadd.f32 %v2210, %v1101
    %v2239 = vadd.f32 %v2211, %v1101
    %vm2240 = vcmp.gt.f32.partialorder %v2212, 0.0
    %vm2241 = vcmp.gt.f32.partialorder %v2213, 0.0
    %vm2242 = vcmp.gt.f32.partialorder %v2214, 0.0
    %vm2243 = vcmp.gt.f32.partialorder %v2215, 0.0
    %vm2244 = vcmp.gt.f32.partialorder %v2216, 0.0
    %vm2245 = vcmp.gt.f32.partialorder %v2217, 0.0
    %vm2246 = vcmp.gt.f32.partialorder %v2218, 0.0
    %vm2247 = vcmp.gt.f32.partialorder %v2219, 0.0
    %vm2248 = vcmp.gt.f32.partialorder %v2220, 0.0
    %vm2249 = vcmp.gt.f32.partialorder %v2221, 0.0
    %vm2250 = vcmp.gt.f32.partialorder %v2222, 0.0
    %vm2251 = vcmp.gt.f32.partialorder %v2223, 0.0
    %vm2252 = vcmp.gt.f32.partialorder %v2224, 0.0
    %vm2253 = vcmp.gt.f32.partialorder %v2225, 0.0
    %vm2254 = vcmp.gt.f32.partialorder %v2226, 0.0
    %vm2255 = vcmp.gt.f32.partialorder %v2227, 0.0
    %vm2256 = vcmp.gt.f32.partialorder %v2228, 0.0
    %vm2257 = vcmp.gt.f32.partialorder %v2229, 0.0
    %vm2258 = vcmp.gt.f32.partialorder %v2230, 0.0
    %vm2259 = vcmp.gt.f32.partialorder %v2231, 0.0
    %vm2260 = vcmp.gt.f32.partialorder %v2232, 0.0
    %vm2261 = vcmp.gt.f32.partialorder %v2233, 0.0
    %vm2262 = vcmp.gt.f32.partialorder %v2234, 0.0
    %vm2263 = vcmp.gt.f32.partialorder %v2235, 0.0
    %vm2264 = vcmp.gt.f32.partialorder %v2236, 0.0
    %vm2265 = vcmp.gt.f32.partialorder %v2237, 0.0
    %vm2266 = vcmp.gt.f32.partialorder %v2238, 0.0
    %vm2267 = vcmp.gt.f32.partialorder %v2239, 0.0
    %v2268 = vmul.f32 %v2212, 0.01
    %v2269 = vmul.f32 %v2213, 0.01
    %v2270 = vmul.f32 %v2214, 0.01
    %v2271 = vmul.f32 %v2215, 0.01
    %v2272 = vmul.f32 %v2216, 0.01
    %v2273 = vmul.f32 %v2217, 0.01
    %v2274 = vmul.f32 %v2218, 0.01
    %v2275 = vmul.f32 %v2219, 0.01
    %v2276 = vmul.f32 %v2220, 0.01
    %v2277 = vmul.f32 %v2221, 0.01
    %v2278 = vmul.f32 %v2222, 0.01
    %v2279 = vmul.f32 %v2223, 0.01
    %v2280 = vmul.f32 %v2224, 0.01
    %v2281 = vmul.f32 %v2225, 0.01
    %v2282 = vmul.f32 %v2226, 0.01
    %v2283 = vmul.f32 %v2227, 0.01
    %v2284 = vmul.f32 %v2228, 0.01
    %v2285 = vmul.f32 %v2229, 0.01
    %v2286 = vmul.f32 %v2230, 0.01
    %v2287 = vmul.f32 %v2231, 0.01
    %v2288 = vmul.f32 %v2232, 0.01
    %v2289 = vmul.f32 %v2233, 0.01
    %v2290 = vmul.f32 %v2234, 0.01
    %v2291 = vmul.f32 %v2235, 0.01
    %v2292 = vmul.f32 %v2236, 0.01
    %v2293 = vmul.f32 %v2237, 0.01
    %v2294 = vmul.f32 %v2238, 0.01
    %v2295 = vmul.f32 %v2239, 0.01
    %v2296 = vsel %vm2240, %v2212, %v2268
    %v2297 = vsel %vm2241, %v2213, %v2269
    %v2298 = vsel %vm2242, %v2214, %v2270
    %v2299 = vsel %vm2243, %v2215, %v2271
    %v2300 = vsel %vm2244, %v2216, %v2272
    %v2301 = vsel %vm2245, %v2217, %v2273
    %v2302 = vsel %vm2246, %v2218, %v2274
    %v2303 = vsel %vm2247, %v2219, %v2275
    %v2304 = vsel %vm2248, %v2220, %v2276
    %v2305 = vsel %vm2249, %v2221, %v2277
    %v2306 = vsel %vm2250, %v2222, %v2278
    %v2307 = vsel %vm2251, %v2223, %v2279
    %v2308 = vsel %vm2252, %v2224, %v2280
    %v2309 = vsel %vm2253, %v2225, %v2281
    %v2310 = vsel %vm2254, %v2226, %v2282
    %v2311 = vsel %vm2255, %v2227, %v2283
    %v2312 = vsel %vm2256, %v2228, %v2284
    %v2313 = vsel %vm2257, %v2229, %v2285
    %v2314 = vsel %vm2258, %v2230, %v2286
    %v2315 = vsel %vm2259, %v2231, %v2287
    %v2316 = vsel %vm2260, %v2232, %v2288
    %v2317 = vsel %vm2261, %v2233, %v2289
    %v2318 = vsel %vm2262, %v2234, %v2290
    %v2319 = vsel %vm2263, %v2235, %v2291
    %v2320 = vsel %vm2264, %v2236, %v2292
    %v2321 = vsel %vm2265, %v2237, %v2293
    %v2322 = vsel %vm2266, %v2238, %v2294
    %v2323 = vsel %vm2267, %v2239, %v2295
    %s2324 = scalar_lea.vmem [#allocation10], 224
    %2325 = vst.msk [vmem:[%s2324] sm:$0xff] %vm626, %v2296
    %2326 = vst.msk [vmem:[%s2324 + $0x8] sm:$0xff] %vm626, %v2297
    %2327 = vst.msk [vmem:[%s2324 + $0x10] sm:$0xff] %vm626, %v2298
    %2328 = vst.msk [vmem:[%s2324 + $0x18] sm:$0xff] %vm626, %v2299
    %2329 = vst.msk [vmem:[%s2324 + $0x20] sm:$0xff] %vm626, %v2300
    %2330 = vst.msk [vmem:[%s2324 + $0x28] sm:$0xff] %vm626, %v2301
    %2331 = vst.msk [vmem:[%s2324 + $0x30] sm:$0xff] %vm626, %v2302
    %2332 = vst.msk [vmem:[%s2324 + $0x38] sm:$0xff] %vm626, %v2303
    %2333 = vst.msk [vmem:[%s2324 + $0x40] sm:$0xff] %vm626, %v2304
    %2334 = vst.msk [vmem:[%s2324 + $0x48] sm:$0xff] %vm626, %v2305
    %2335 = vst.msk [vmem:[%s2324 + $0x50] sm:$0xff] %vm626, %v2306
    %2336 = vst.msk [vmem:[%s2324 + $0x58] sm:$0xff] %vm626, %v2307
    %2337 = vst.msk [vmem:[%s2324 + $0x60] sm:$0xff] %vm626, %v2308
    %2338 = vst.msk [vmem:[%s2324 + $0x68] sm:$0xff] %vm626, %v2309
    %2339 = vst.msk [vmem:[%s2324 + $0x70] sm:$0xff] %vm626, %v2310
    %2340 = vst.msk [vmem:[%s2324 + $0x78] sm:$0xff] %vm626, %v2311
    %2341 = vst.msk [vmem:[%s2324 + $0x80] sm:$0xff] %vm626, %v2312
    %2342 = vst.msk [vmem:[%s2324 + $0x88] sm:$0xff] %vm626, %v2313
    %2343 = vst.msk [vmem:[%s2324 + $0x90] sm:$0xff] %vm626, %v2314
    %2344 = vst.msk [vmem:[%s2324 + $0x98] sm:$0xff] %vm626, %v2315
    %2345 = vst.msk [vmem:[%s2324 + $0xa0] sm:$0xff] %vm626, %v2316
    %2346 = vst.msk [vmem:[%s2324 + $0xa8] sm:$0xff] %vm626, %v2317
    %2347 = vst.msk [vmem:[%s2324 + $0xb0] sm:$0xff] %vm626, %v2318
    %2348 = vst.msk [vmem:[%s2324 + $0xb8] sm:$0xff] %vm626, %v2319
    %2349 = vst.msk [vmem:[%s2324 + $0xc0] sm:$0xff] %vm626, %v2320
    %2350 = vst.msk [vmem:[%s2324 + $0xc8] sm:$0xff] %vm626, %v2321
    %2351 = vst.msk [vmem:[%s2324 + $0xd0] sm:$0xff] %vm626, %v2322
    %2352 = vst.msk [vmem:[%s2324 + $0xd8] sm:$0xff] %vm626, %v2323
    // Predicated region
    $region34: #{downblock_forward.3} parent=1 // pred_check
      _
    $region35: #{downblock_forward.3} parent=1 // pred_check_branch
      %2354 = sbr.rel (0) target = $region37
    $region36: #{downblock_forward.3} parent=1 // pred_region
      %s2356 = ssub.s32 7168, 7168
      %2357 = vsyncadd [#allocation4], %s2356
      %s2358 = sshll.u32 [#allocation10], 4
      %s2359 = int_to_ptr.vmem [resolvable:$true] %s2358
      %2364 = dma.vmem_to_hbm [thread:$0]  %s2359, 7168, %s4, [#allocation4], 128, 128, 8
    $region37: #{downblock_forward.3} parent=1 // pred_fallthru
      _
    // Predicated region
    $region38: #{downblock_forward.3} parent=1 // pred_check
      _
    $region39: #{downblock_forward.3} parent=1 // pred_check_branch
      %2366 = sbr.rel (0) target = $region41
    $region40: #{downblock_forward.3} parent=1 // pred_region
      %2367 = dma.done [#allocation4], 7168
    $region41: #{downblock_forward.3} parent=1 // pred_fallthru
      _
    %2368 = vsyncpa [#allocation3], 1
    %2369 = vsyncpa [#allocation6], 1
    %2370 = vsyncpa [#allocation9], 1
    %2371 = vsyncpa [#allocation4], 1

</llo_original>
